<compile_context>
chip_gen: v7x
topology: tpu7x:2x2x1
jax: 0.10.0
libtpu: 0.0.40
codegen_flags: <defaults>
</compile_context>

<pallas_src>
import math
import functools

import jax
import jax.numpy as jnp
from jax.experimental import pallas as pl
from jax.experimental.pallas import tpu as pltpu


def _taylor_exp_kernel(x_ref, o_ref, *, inv_rrd: float, scale2: float):
    """One row tile: writes the fully fused feature row.

    x_ref: (TL, D) input block.
    o_ref: (TL, 1 + D + D*D) output block:
        col 0          -> 1
        cols 1 .. D    -> x / d**0.25
        cols 1+D ..    -> x_i * x_j / (sqrt(2) * sqrt(d)), flattened as i*D + j
    """
    tl, d = x_ref.shape
    odt = o_ref.dtype

    x = x_ref[...].astype(jnp.float32)          # compute in f32 (mem-bound: free)

    # zeroth-order term
    o_ref[:, 0:1] = jnp.ones((tl, 1), dtype=odt)
    # first-order term
    o_ref[:, 1:1 + d] = (x * inv_rrd).astype(odt)

    # second-order term: pre-scale once (D-wide), then emit in column groups of
    # up to 128 lanes so the live intermediate stays one vreg-row wide instead
    # of a full (TL, D, D) lane-sparse block.
    xs = x * scale2                              # (TL, D), scale folded here
    gi = max(1, 128 // d)                        # i-values per column group
    base = 1 + d
    for g0 in range(0, d, gi):
        g1 = min(d, g0 + gi)
        blk = x[:, g0:g1, None] * xs[:, None, :]         # (TL, g, D)
        blk = blk.reshape(tl, (g1 - g0) * d)              # (TL, <=128)
        o_ref[:, base + g0 * d: base + g1 * d] = blk.astype(odt)


def _vmem_capacity_bytes() -> int:
    """Per-core VMEM capacity; conservative (v7x, 64 MiB) if unknown."""
    try:
        cap = getattr(pltpu.get_tpu_info(), "vmem_capacity_bytes", None)
        if cap:
            return int(cap)
    except Exception:
        pass
    return 64 * 1024 * 1024


def _sublane_multiple(dtype) -> int:
    # 8 for f32, 16 for bf16, 32 for int8/fp8
    return max(8, 32 // jnp.dtype(dtype).itemsize)


def _choose_row_tile(rows: int, sub: int, budget_rows: int):
    """Pick a row tile that fits the VMEM budget, is a sublane multiple, gives
    >= 2 grid tiles when possible (v7x megacore) and divides `rows` when
    possible (no pad + post-slice pass). Returns (row_tile, pad)."""
    tl_max = max(sub, (budget_rows // sub) * sub)
    if rows >= 2 * sub:
        half = ((rows // 2) // sub) * sub
        if half >= sub:
            tl_max = min(tl_max, half)
    if rows >= sub:
        t = min(tl_max, (rows // sub) * sub)
        while t >= sub:
            if rows % t == 0:
                return t, 0
            t -= sub
    tl = max(sub, min(tl_max, ((rows + sub - 1) // sub) * sub))
    tl = (tl // sub) * sub
    pad = (-rows) % tl
    return tl, pad


def taylor_exp(x: jax.Array, *, row_tile: int | None = None) -> jax.Array:
    """Pallas implementation of TaylorExp.forward.

    x: (B, H, L, D) -> (B, H, L, 1 + D + D*D)
    """
    B, H, L, D = x.shape
    W = 1 + D + D * D

    rd = math.sqrt(float(D))
    inv_rrd = 1.0 / math.sqrt(rd)          # 1 / d**0.25
    scale2 = 1.0 / (math.sqrt(2.0) * rd)   # 1 / (sqrt(2) * sqrt(d))

    rows = B * H * L
    x_rows = x.reshape(rows, D)
    itemsize = jnp.dtype(x.dtype).itemsize
    sub = _sublane_multiple(x.dtype)

    # Lane-padded block widths (what VMEM actually holds).
    d_pad = ((D + 127) // 128) * 128
    w_pad = ((W + 127) // 128) * 128
    group_cols = ((max(D, 128) + 127) // 128) * 128
    inter_per_row = 4 * (2 * d_pad + 3 * group_cols)          # f32 intermediates

    vmem_cap = _vmem_capacity_bytes()
    if row_tile is None:
        # single-copy (in + out + intermediates) budget per grid step;
        # double-buffering of in/out must still fit per-core VMEM.
        budget = max(4 * 1024 * 1024, min(vmem_cap // 5, 24 * 1024 * 1024))
        per_row = (d_pad + w_pad) * itemsize + inter_per_row
        row_tile, pad = _choose_row_tile(rows, sub, max(sub, budget // per_row))
    else:
        row_tile = max(sub, (row_tile // sub) * sub)
        pad = (-rows) % row_tile

    if pad:
        # TODO(synk): pad + post-slice costs one extra pass over the output;
        # only taken when B*H*L has no suitable divisor.
        x_rows = jnp.pad(x_rows, ((0, pad), (0, 0)))
    padded_rows = rows + pad
    n_tiles = padded_rows // row_tile

    in_blk = row_tile * d_pad * itemsize
    out_blk = row_tile * w_pad * itemsize
    inter = row_tile * inter_per_row
    vmem_limit = int(min(vmem_cap,
                         max(32 * 1024 * 1024,
                             2 * (in_blk + out_blk) + inter + 8 * 1024 * 1024)))

    kernel = functools.partial(_taylor_exp_kernel, inv_rrd=inv_rrd, scale2=scale2)

    out = pl.pallas_call(
        kernel,
        out_shape=jax.ShapeDtypeStruct((padded_rows, W), x.dtype),
        grid_spec=pltpu.PrefetchScalarGridSpec(
            num_scalar_prefetch=0,
            grid=(n_tiles,),
            in_specs=[pl.BlockSpec((row_tile, D), lambda i: (i, 0))],
            out_specs=pl.BlockSpec((row_tile, W), lambda i: (i, 0)),
        ),
        compiler_params=pltpu.CompilerParams(
            dimension_semantics=("parallel",),
            vmem_limit_bytes=vmem_limit,
        ),
    )(x_rows)

    if pad:
        out = out[:rows]
    return out.reshape(B, H, L, W)


def taylor_exp_reference(x: jax.Array) -> jax.Array:
    """Pure-JAX reference mirroring the PyTorch forward exactly."""
    D = x.shape[-1]
    r2 = math.sqrt(2.0)
    rd = math.sqrt(float(D))
    rrd = math.sqrt(rd)
    x2 = (x[..., :, None] * x[..., None, :]).reshape(*x.shape[:-1], D * D) / r2
    return jnp.concatenate([x[..., :1] ** 0, x / rrd, x2 / rd], axis=-1)


if __name__ == "__main__":
    key = jax.random.PRNGKey(0)
    k1, k2, k3 = jax.random.split(key, 3)

    # Main case (Based uses head_dim = 16): (batch, n_heads, seq_len, head_dim)
    B, H, L, D = 2, 4, 16, 16
    x = jax.random.normal(k1, (B, H, L, D), dtype=jnp.float32)
    out = jax.block_until_ready(jax.jit(taylor_exp)(x))
    ref = taylor_exp_reference(x)
    assert out.shape == (B, H, L, 1 + D + D * D), out.shape
    assert jnp.allclose(out, ref, atol=1e-5, rtol=1e-5), "f32 D=16 mismatch"

    # Masked-store / non-divisible coverage: D*D not a multiple of 128 and
    # B*H*L not divisible by the row tile (exercises the pad fallback).
    x_odd = jax.random.normal(k2, (1, 2, 13, 24), dtype=jnp.float32)
    out_odd = jax.block_until_ready(jax.jit(taylor_exp)(x_odd))
    ref_odd = taylor_exp_reference(x_odd)
    assert out_odd.shape == (1, 2, 13, 1 + 24 + 24 * 24)
    assert jnp.allclose(out_odd, ref_odd, atol=1e-5, rtol=1e-5), "f32 D=24 mismatch"

    # bf16 input: kernel computes in f32 internally, stores bf16.
    x_bf = jax.random.normal(k3, (1, 2, 32, 16), dtype=jnp.bfloat16)
    out_bf = jax.block_until_ready(jax.jit(taylor_exp)(x_bf))
    ref_bf = taylor_exp_reference(x_bf.astype(jnp.float32)).astype(jnp.bfloat16)
    assert out_bf.dtype == jnp.bfloat16
    assert jnp.allclose(out_bf.astype(jnp.float32), ref_bf.astype(jnp.float32),
                        atol=2e-2, rtol=2e-2), "bf16 mismatch"

    print("KERNEL_OK")
</pallas_src>

<mosaic_0001>
module attributes {stable_mosaic.version = 11 : i64} {
  func.func @_taylor_exp_kernel(%arg0: i32, %arg1: memref<64x16xf32, #tpu.memory_space<vmem>>, %arg2: memref<64x273xf32, #tpu.memory_space<vmem>>) attributes {dimension_semantics = [#tpu.dimension_semantics<parallel>], iteration_bounds = array<i64: 2>, scalar_prefetch = 0 : i64, scratch_operands = 0 : i64, tpu.core_type = #tpu.core_type<tc>, window_params = [{transform_indices = @transform_0, window_bounds = array<i64: 64, 16>}, {transform_indices = @transform_1, window_bounds = array<i64: 64, 273>}]} {
    %c0 = arith.constant 0 : index
    %c0_0 = arith.constant 0 : index
    %0 = vector.load %arg1[%c0, %c0_0] : memref<64x16xf32, #tpu.memory_space<vmem>>, vector<64x16xf32>
    %cst = arith.constant 1.000000e+00 : f32
    %1 = vector.broadcast %cst : f32 to vector<64x1xf32>
    %c0_1 = arith.constant 0 : index
    %c0_2 = arith.constant 0 : index
    %2 = vector.load %arg2[%c0_1, %c0_2] : memref<64x273xf32, #tpu.memory_space<vmem>>, vector<64x1xf32>
    tpu.vector_store %arg2[%c0_1, %c0_2], %1 {strides = array<i32>} : memref<64x273xf32, #tpu.memory_space<vmem>>, vector<64x1xf32>,
    %cst_3 = arith.constant 5.000000e-01 : f32
    %3 = vector.broadcast %cst_3 : f32 to vector<64x16xf32>
    %4 = arith.mulf %0, %3 : vector<64x16xf32>
    %c0_4 = arith.constant 0 : index
    %c1 = arith.constant 1 : index
    %5 = vector.load %arg2[%c0_4, %c1] : memref<64x273xf32, #tpu.memory_space<vmem>>, vector<64x16xf32>
    tpu.vector_store %arg2[%c0_4, %c1], %4 {strides = array<i32>} : memref<64x273xf32, #tpu.memory_space<vmem>>, vector<64x16xf32>,
    %cst_5 = arith.constant 0.176776692 : f32
    %6 = vector.broadcast %cst_5 : f32 to vector<64x16xf32>
    %7 = arith.mulf %0, %6 : vector<64x16xf32>
    %8 = vector.extract_strided_slice %0 {offsets = [0, 0], sizes = [64, 8], strides = [1, 1]} : vector<64x16xf32> to vector<64x8xf32>
    %9 = vector.shape_cast %8 : vector<64x8xf32> to vector<64x8x1xf32>
    %10 = vector.shape_cast %7 : vector<64x16xf32> to vector<64x1x16xf32>
    %11 = vector.broadcast %9 : vector<64x8x1xf32> to vector<64x8x16xf32>
    %12 = vector.broadcast %10 : vector<64x1x16xf32> to vector<64x8x16xf32>
    %13 = arith.mulf %11, %12 : vector<64x8x16xf32>
    %14 = vector.shape_cast %13 : vector<64x8x16xf32> to vector<64x128xf32>
    %c0_6 = arith.constant 0 : index
    %c17 = arith.constant 17 : index
    %15 = vector.load %arg2[%c0_6, %c17] : memref<64x273xf32, #tpu.memory_space<vmem>>, vector<64x128xf32>
    tpu.vector_store %arg2[%c0_6, %c17], %14 {strides = array<i32>} : memref<64x273xf32, #tpu.memory_space<vmem>>, vector<64x128xf32>,
    %16 = vector.extract_strided_slice %0 {offsets = [0, 8], sizes = [64, 8], strides = [1, 1]} : vector<64x16xf32> to vector<64x8xf32>
    %17 = vector.shape_cast %16 : vector<64x8xf32> to vector<64x8x1xf32>
    %18 = vector.shape_cast %7 : vector<64x16xf32> to vector<64x1x16xf32>
    %19 = vector.broadcast %17 : vector<64x8x1xf32> to vector<64x8x16xf32>
    %20 = vector.broadcast %18 : vector<64x1x16xf32> to vector<64x8x16xf32>
    %21 = arith.mulf %19, %20 : vector<64x8x16xf32>
    %22 = vector.shape_cast %21 : vector<64x8x16xf32> to vector<64x128xf32>
    %c0_7 = arith.constant 0 : index
    %c145 = arith.constant 145 : index
    %23 = vector.load %arg2[%c0_7, %c145] : memref<64x273xf32, #tpu.memory_space<vmem>>, vector<64x128xf32>
    tpu.vector_store %arg2[%c0_7, %c145], %22 {strides = array<i32>} : memref<64x273xf32, #tpu.memory_space<vmem>>, vector<64x128xf32>,
    return
  }
  func.func @transform_0(%arg0: i32) -> (i32, i32) {
    %c0_i32 = arith.constant 0 : i32
    %c0_i32_0 = arith.constant 0 : i32
    return %arg0, %c0_i32 : i32, i32
  }
  func.func @transform_1(%arg0: i32) -> (i32, i32) {
    %c0_i32 = arith.constant 0 : i32
    %c0_i32_0 = arith.constant 0 : i32
    return %arg0, %c0_i32 : i32, i32
  }
}

</mosaic_0001>

<llo_original>
// kernel: taylor_exp.1
$region0: #{taylor_exp.1}
  #allocation0 [shape = 'u32[]', space=smem, size = 0x4, offset = 0x4, fixed_abs, tag = 'smem constant byte address 0x4 - core index']
  #allocation1 [shape = 'u32[144,128]{1,0:T(1,128)}', space=vmem, size = 0x12000, scoped, tag = 'internal scratch']
  %s0 = inlined_call_operand.hbm [shape: f32[128,16], index: 0, kind: input, shape index: {}]
  %s1 = inlined_call_operand.hbm [shape: f32[128,273], index: 1, kind: output, shape index: {}]
  %s2 = sld [smem:[#allocation0]]
  $region41: #{taylor_exp.1} parent=0
    _
  %s4 = ssub.s32 1, %s2
  %s5 = scalar_select 0, %s4, %s2
  $region1: #{taylor_exp.1} parent=0
    #allocation2 [shape = 'u8[65536]{0}', space=vmem, size = 0x10000, scoped, tag = 'input window, operand 0']
    #allocation3 [shape = 's32[2]{0}', space=sflag, size = 0x8, scoped, tag = 'scoped memory for taylor_exp.1']
    #allocation4 [shape = 's32[2]{0}', space=sflag, size = 0x8, scoped, tag = 'scoped memory for taylor_exp.1']
    #allocation5 [shape = 'u8[196608]{0}', space=vmem, size = 0x30000, scoped, tag = 'output window, operand 0']
    %6 = vsyncpa [#allocation3], 0
    %s7 = scalar_lea.sflag [#allocation3], 1
    %8 = vsyncpa %s7, 0
    %9 = vsyncpa [#allocation4], 0
    %s10 = scalar_lea.sflag [#allocation4], 1
    %11 = vsyncpa %s10, 0
    loop: start=0, step=1, limit=4
    $region2: #{taylor_exp.1} parent=1 // loop_pre_header
      _
    $region3: #{taylor_exp.1} parent=1 // loop_header
      %s13 = sphi 0, %s17
      %p14 = scmp.ge.s32.totalorder %s13, 4
      %s23 = sphi 0, %s25
      %s26 = sphi 0, %s23
      %s27 = sphi 0, %s26
      %s43 = sphi 0, %s27
      %s49 = sphi 0, %s51
      %s52 = sphi 0, %s49
      %s53 = sphi 0, %s52
      %s69 = sphi 0, %s53
    $region4: #{taylor_exp.1} parent=1 // loop_header_branch
      %16 = sbr.rel (%p14) target = $region8
    $region5: #{taylor_exp.1} parent=1 // loop_body
      %s18 = ssub.s32 %s13, 1
      %s19 = ssub.s32 %s13, 2
      %s20 = sadd.s32 %s13, 1
      %s21 = ssub.s32 %s13, %s20
      %p22 = scmp.eq.s32.totalorder %s21, 0
      %s24 = sadd.s32 %s23, 1
      %s25 = scalar_select %p22, %s23, %s24
      %p28 = pneg %p22
      %p29 = scmp.eq.s32.totalorder %s13, 1
      %p30 = por %p28, %p29
      %p31 = scmp.ne.s32.totalorder %s23, %s26
      %p32 = scmp.eq.s32.totalorder %s13, 0
      %p33 = por %p31, %p32
      %p34 = scmp.ne.s32.totalorder %s23, %s26
      %p35 = scmp.eq.s32.totalorder %s18, 1
      %p36 = por %p34, %p35
      %p37 = scmp.ne.s32.totalorder %s26, %s27
      %p38 = scmp.eq.s32.totalorder %s18, 0
      %p39 = por %p37, %p38
      %p40 = scmp.ne.s32.totalorder %s26, %s27
      %p41 = scmp.eq.s32.totalorder %s19, 1
      %p42 = por %p40, %p41
      %p44 = scmp.ne.s32.totalorder %s27, %s43
      %p45 = scmp.eq.s32.totalorder %s19, 0
      %p46 = por %p44, %p45
      %s47 = ssub.s32 %s13, %s20
      %p48 = scmp.eq.s32.totalorder %s47, 0
      %s50 = sadd.s32 %s49, 1
      %s51 = scalar_select %p48, %s49, %s50
      %p54 = pneg %p48
      %p55 = scmp.eq.s32.totalorder %s13, 1
      %p56 = por %p54, %p55
      %p57 = scmp.ne.s32.totalorder %s49, %s52
      %p58 = scmp.eq.s32.totalorder %s13, 0
      %p59 = por %p57, %p58
      %p60 = scmp.ne.s32.totalorder %s49, %s52
      %p61 = scmp.eq.s32.totalorder %s18, 1
      %p62 = por %p60, %p61
      %p63 = scmp.ne.s32.totalorder %s52, %s53
      %p64 = scmp.eq.s32.totalorder %s18, 0
      %p65 = por %p63, %p64
      %p66 = scmp.ne.s32.totalorder %s52, %s53
      %p67 = scmp.eq.s32.totalorder %s19, 1
      %p68 = por %p66, %p67
      %p70 = scmp.ne.s32.totalorder %s53, %s69
      %p71 = scmp.eq.s32.totalorder %s19, 0
      %p72 = por %p70, %p71
      %p73 = scmp.le.s32.totalorder 1, %s13
      %p74 = scmp.lt.s32.totalorder %s13, 3
      %p75 = pnand %p73, %p74
      %p76 = pneg %p75
      // Predicated region
      $region9: #{taylor_exp.1} parent=5 // pred_check
        _
      $region10: #{taylor_exp.1} parent=5 // pred_check_branch
        %78 = sbr.rel (%p75) target = $region12
      $region11: #{taylor_exp.1} parent=5 // pred_region
        %s79 = ssub.s32 %s13, 1
      $region12: #{taylor_exp.1} parent=5 // pred_fallthru
        _
      %p80 = scmp.lt.s32.totalorder %s13, 2
      // Predicated region
      $region13: #{taylor_exp.1} parent=5 // pred_check
        %p81 = pneg %p80
      $region14: #{taylor_exp.1} parent=5 // pred_check_branch
        %83 = sbr.rel (%p81) target = $region16
      $region15: #{taylor_exp.1} parent=5 // pred_region
        // Predicated region
        $region17: #{taylor_exp.1} parent=15 // pred_check
          %p84 = pneg %p33
        $region18: #{taylor_exp.1} parent=15 // pred_check_branch
          %86 = sbr.rel (%p84) target = $region20
        $region19: #{taylor_exp.1} parent=15 // pred_region
          %s87 = sand.u32 %s23, 1
          %s88 = scalar_lea.sflag [#allocation3], %s87
          %s89 = sand.u32 %s23, 1
          %s90 = smul.addr %s89, 64
          %s91 = scalar_lea.vmem [#allocation2], %s90
          %s92 = smul.u32 8, %s13
          %s94 = ssub.s32 1024, 1024
          %95 = vsyncadd %s88, %s94
          %s96 = smul.addr %s92, 128
          %s97 = scalar_lea.hbm %s0, %s96
          %s98 = sshll.u32 %s91, 4
          %s99 = int_to_ptr.vmem [resolvable:$true] %s98
          %104 = dma.hbm_to_vmem [thread:$0]  %s97, 1024, %s99, %s88, 128, 128, 8
        $region20: #{taylor_exp.1} parent=15 // pred_fallthru
          _
      $region16: #{taylor_exp.1} parent=5 // pred_fallthru
        _
      %p105 = scmp.le.s32.totalorder 1, %s13
      %p106 = scmp.lt.s32.totalorder %s13, 3
      %p107 = pnand %p105, %p106
      %p108 = pneg %p107
      // Predicated region
      $region21: #{taylor_exp.1} parent=5 // pred_check
        _
      $region22: #{taylor_exp.1} parent=5 // pred_check_branch
        %110 = sbr.rel (%p107) target = $region24
      $region23: #{taylor_exp.1} parent=5 // pred_region
        %s111 = ssub.s32 %s13, 1
        %s112 = sand.u32 %s26, 1
        %s113 = scalar_lea.sflag [#allocation3], %s112
        %s114 = sand.u32 %s26, 1
        %s115 = smul.addr %s114, 64
        %s116 = scalar_lea.vmem [#allocation2], %s115
        // Predicated region
        $region25: #{taylor_exp.1} parent=23 // pred_check
          %p117 = pneg %p39
        $region26: #{taylor_exp.1} parent=23 // pred_check_branch
          %119 = sbr.rel (%p117) target = $region28
        $region27: #{taylor_exp.1} parent=23 // pred_region
          %120 = dma.done %s113, 1024
        $region28: #{taylor_exp.1} parent=23 // pred_fallthru
          _
        %s121 = sand.u32 %s26, 1
        %s122 = scalar_lea.sflag [#allocation3], %s121
        %s123 = sand.u32 %s26, 1
        %s124 = smul.addr %s123, 64
        %s125 = scalar_lea.vmem [#allocation2], %s124
        %p126 = pneg %p39
        %p127 = pneg %p36
        %p128 = pneg %p65
        %p129 = pneg %p62
        %s130 = sand.u32 %s52, 1
        %s131 = scalar_lea.sflag [#allocation4], %s130
        %s132 = sand.u32 %s52, 1
        %s133 = smul.addr %s132, 192
        %s134 = scalar_lea.vmem [#allocation5], %s133
        %s135 = smul.u32 8, %s18
        %s136 = smul.u32 8, %s18
        %v137 = vld [vmem:[%s116] sm:$0xff]
        %v138 = vld [vmem:[%s116 + $0x8] sm:$0xff]
        %v139 = vld [vmem:[%s116 + $0x10] sm:$0xff]
        %v140 = vld [vmem:[%s116 + $0x18] sm:$0xff]
        %v141 = vld [vmem:[%s116 + $0x20] sm:$0xff]
        %v142 = vld [vmem:[%s116 + $0x28] sm:$0xff]
        %v143 = vld [vmem:[%s116 + $0x30] sm:$0xff]
        %v144 = vld [vmem:[%s116 + $0x38] sm:$0xff]
        %vm145 = vcmask 7168
        %146 = vst.msk [vmem:[%s134] sm:$0xff] %vm145, 1.0
        %147 = vst.msk [vmem:[%s134 + $0x18] sm:$0xff] %vm145, 1.0
        %148 = vst.msk [vmem:[%s134 + $0x30] sm:$0xff] %vm145, 1.0
        %149 = vst.msk [vmem:[%s134 + $0x48] sm:$0xff] %vm145, 1.0
        %150 = vst.msk [vmem:[%s134 + $0x60] sm:$0xff] %vm145, 1.0
        %151 = vst.msk [vmem:[%s134 + $0x78] sm:$0xff] %vm145, 1.0
        %152 = vst.msk [vmem:[%s134 + $0x90] sm:$0xff] %vm145, 1.0
        %153 = vst.msk [vmem:[%s134 + $0xa8] sm:$0xff] %vm145, 1.0
        %v154 = vmul.f32 %v137, 0.5
        %v155 = vmul.f32 %v138, 0.5
        %v156 = vmul.f32 %v139, 0.5
        %v157 = vmul.f32 %v140, 0.5
        %v158 = vmul.f32 %v141, 0.5
        %v159 = vmul.f32 %v142, 0.5
        %v160 = vmul.f32 %v143, 0.5
        %v161 = vmul.f32 %v144, 0.5
        %170 = vrot.lane.b32.xlu0 %v154, 1
        %v171 = vpop.permute.xlu0 %170
        %172 = vrot.lane.b32.xlu0 %v155, 1
        %v173 = vpop.permute.xlu0 %172
        %174 = vrot.lane.b32.xlu0 %v156, 1
        %v175 = vpop.permute.xlu0 %174
        %176 = vrot.lane.b32.xlu0 %v157, 1
        %v177 = vpop.permute.xlu0 %176
        %178 = vrot.lane.b32.xlu0 %v158, 1
        %v179 = vpop.permute.xlu0 %178
        %180 = vrot.lane.b32.xlu0 %v159, 1
        %v181 = vpop.permute.xlu0 %180
        %182 = vrot.lane.b32.xlu0 %v160, 1
        %v183 = vpop.permute.xlu0 %182
        %184 = vrot.lane.b32.xlu0 %v161, 1
        %v185 = vpop.permute.xlu0 %184
        %vm194 = vcmask 138248
        %195 = vst.msk [vmem:[%s134] sm:$0xff] %vm194, %v171
        %196 = vst.msk [vmem:[%s134 + $0x18] sm:$0xff] %vm194, %v173
        %197 = vst.msk [vmem:[%s134 + $0x30] sm:$0xff] %vm194, %v175
        %198 = vst.msk [vmem:[%s134 + $0x48] sm:$0xff] %vm194, %v177
        %199 = vst.msk [vmem:[%s134 + $0x60] sm:$0xff] %vm194, %v179
        %200 = vst.msk [vmem:[%s134 + $0x78] sm:$0xff] %vm194, %v181
        %201 = vst.msk [vmem:[%s134 + $0x90] sm:$0xff] %vm194, %v183
        %202 = vst.msk [vmem:[%s134 + $0xa8] sm:$0xff] %vm194, %v185
        %v203 = vmul.f32 %v137, 0.17677669
        %v204 = vmul.f32 %v138, 0.17677669
        %v205 = vmul.f32 %v139, 0.17677669
        %v206 = vmul.f32 %v140, 0.17677669
        %v207 = vmul.f32 %v141, 0.17677669
        %v208 = vmul.f32 %v142, 0.17677669
        %v209 = vmul.f32 %v143, 0.17677669
        %v210 = vmul.f32 %v144, 0.17677669
        %v211 = vlaneseq
        %v212 = vshrl.u32 %v211, 7
        %v213 = vsub.s32 0, %v212
        %v214 = vrot.slane %v137, %v213
        %216 = vbcast.lane.b32.xlu0 %v214, 256
        %v217 = vpop.permute.xlu0 %216
        %v218 = vlaneseq
        %v219 = vshrl.u32 %v218, 7
        %v220 = vsub.s32 1, %v219
        %v221 = vrot.slane %v137, %v220
        %223 = vbcast.lane.b32.xlu0 %v221, 256
        %v224 = vpop.permute.xlu0 %223
        %v225 = vlaneseq
        %v226 = vshrl.u32 %v225, 7
        %v227 = vsub.s32 2, %v226
        %v228 = vrot.slane %v137, %v227
        %230 = vbcast.lane.b32.xlu0 %v228, 256
        %v231 = vpop.permute.xlu0 %230
        %v232 = vlaneseq
        %v233 = vshrl.u32 %v232, 7
        %v234 = vsub.s32 3, %v233
        %v235 = vrot.slane %v137, %v234
        %237 = vbcast.lane.b32.xlu0 %v235, 256
        %v238 = vpop.permute.xlu0 %237
        %v239 = vlaneseq
        %v240 = vshrl.u32 %v239, 7
        %v241 = vsub.s32 4, %v240
        %v242 = vrot.slane %v137, %v241
        %244 = vbcast.lane.b32.xlu0 %v242, 256
        %v245 = vpop.permute.xlu0 %244
        %v246 = vlaneseq
        %v247 = vshrl.u32 %v246, 7
        %v248 = vsub.s32 5, %v247
        %v249 = vrot.slane %v137, %v248
        %251 = vbcast.lane.b32.xlu0 %v249, 256
        %v252 = vpop.permute.xlu0 %251
        %v253 = vlaneseq
        %v254 = vshrl.u32 %v253, 7
        %v255 = vsub.s32 6, %v254
        %v256 = vrot.slane %v137, %v255
        %258 = vbcast.lane.b32.xlu0 %v256, 256
        %v259 = vpop.permute.xlu0 %258
        %v260 = vlaneseq
        %v261 = vshrl.u32 %v260, 7
        %v262 = vsub.s32 7, %v261
        %v263 = vrot.slane %v137, %v262
        %265 = vbcast.lane.b32.xlu0 %v263, 256
        %v266 = vpop.permute.xlu0 %265
        %v267 = vlaneseq
        %v268 = vshrl.u32 %v267, 7
        %v269 = vsub.s32 0, %v268
        %v270 = vrot.slane %v138, %v269
        %272 = vbcast.lane.b32.xlu0 %v270, 256
        %v273 = vpop.permute.xlu0 %272
        %v274 = vlaneseq
        %v275 = vshrl.u32 %v274, 7
        %v276 = vsub.s32 1, %v275
        %v277 = vrot.slane %v138, %v276
        %279 = vbcast.lane.b32.xlu0 %v277, 256
        %v280 = vpop.permute.xlu0 %279
        %v281 = vlaneseq
        %v282 = vshrl.u32 %v281, 7
        %v283 = vsub.s32 2, %v282
        %v284 = vrot.slane %v138, %v283
        %286 = vbcast.lane.b32.xlu0 %v284, 256
        %v287 = vpop.permute.xlu0 %286
        %v288 = vlaneseq
        %v289 = vshrl.u32 %v288, 7
        %v290 = vsub.s32 3, %v289
        %v291 = vrot.slane %v138, %v290
        %293 = vbcast.lane.b32.xlu0 %v291, 256
        %v294 = vpop.permute.xlu0 %293
        %v295 = vlaneseq
        %v296 = vshrl.u32 %v295, 7
        %v297 = vsub.s32 4, %v296
        %v298 = vrot.slane %v138, %v297
        %300 = vbcast.lane.b32.xlu0 %v298, 256
        %v301 = vpop.permute.xlu0 %300
        %v302 = vlaneseq
        %v303 = vshrl.u32 %v302, 7
        %v304 = vsub.s32 5, %v303
        %v305 = vrot.slane %v138, %v304
        %307 = vbcast.lane.b32.xlu0 %v305, 256
        %v308 = vpop.permute.xlu0 %307
        %v309 = vlaneseq
        %v310 = vshrl.u32 %v309, 7
        %v311 = vsub.s32 6, %v310
        %v312 = vrot.slane %v138, %v311
        %314 = vbcast.lane.b32.xlu0 %v312, 256
        %v315 = vpop.permute.xlu0 %314
        %v316 = vlaneseq
        %v317 = vshrl.u32 %v316, 7
        %v318 = vsub.s32 7, %v317
        %v319 = vrot.slane %v138, %v318
        %321 = vbcast.lane.b32.xlu0 %v319, 256
        %v322 = vpop.permute.xlu0 %321
        %v323 = vlaneseq
        %v324 = vshrl.u32 %v323, 7
        %v325 = vsub.s32 0, %v324
        %v326 = vrot.slane %v139, %v325
        %328 = vbcast.lane.b32.xlu0 %v326, 256
        %v329 = vpop.permute.xlu0 %328
        %v330 = vlaneseq
        %v331 = vshrl.u32 %v330, 7
        %v332 = vsub.s32 1, %v331
        %v333 = vrot.slane %v139, %v332
        %335 = vbcast.lane.b32.xlu0 %v333, 256
        %v336 = vpop.permute.xlu0 %335
        %v337 = vlaneseq
        %v338 = vshrl.u32 %v337, 7
        %v339 = vsub.s32 2, %v338
        %v340 = vrot.slane %v139, %v339
        %342 = vbcast.lane.b32.xlu0 %v340, 256
        %v343 = vpop.permute.xlu0 %342
        %v344 = vlaneseq
        %v345 = vshrl.u32 %v344, 7
        %v346 = vsub.s32 3, %v345
        %v347 = vrot.slane %v139, %v346
        %349 = vbcast.lane.b32.xlu0 %v347, 256
        %v350 = vpop.permute.xlu0 %349
        %v351 = vlaneseq
        %v352 = vshrl.u32 %v351, 7
        %v353 = vsub.s32 4, %v352
        %v354 = vrot.slane %v139, %v353
        %356 = vbcast.lane.b32.xlu0 %v354, 256
        %v357 = vpop.permute.xlu0 %356
        %v358 = vlaneseq
        %v359 = vshrl.u32 %v358, 7
        %v360 = vsub.s32 5, %v359
        %v361 = vrot.slane %v139, %v360
        %363 = vbcast.lane.b32.xlu0 %v361, 256
        %v364 = vpop.permute.xlu0 %363
        %v365 = vlaneseq
        %v366 = vshrl.u32 %v365, 7
        %v367 = vsub.s32 6, %v366
        %v368 = vrot.slane %v139, %v367
        %370 = vbcast.lane.b32.xlu0 %v368, 256
        %v371 = vpop.permute.xlu0 %370
        %v372 = vlaneseq
        %v373 = vshrl.u32 %v372, 7
        %v374 = vsub.s32 7, %v373
        %v375 = vrot.slane %v139, %v374
        %377 = vbcast.lane.b32.xlu0 %v375, 256
        %v378 = vpop.permute.xlu0 %377
        %v379 = vlaneseq
        %v380 = vshrl.u32 %v379, 7
        %v381 = vsub.s32 0, %v380
        %v382 = vrot.slane %v140, %v381
        %384 = vbcast.lane.b32.xlu0 %v382, 256
        %v385 = vpop.permute.xlu0 %384
        %v386 = vlaneseq
        %v387 = vshrl.u32 %v386, 7
        %v388 = vsub.s32 1, %v387
        %v389 = vrot.slane %v140, %v388
        %391 = vbcast.lane.b32.xlu0 %v389, 256
        %v392 = vpop.permute.xlu0 %391
        %v393 = vlaneseq
        %v394 = vshrl.u32 %v393, 7
        %v395 = vsub.s32 2, %v394
        %v396 = vrot.slane %v140, %v395
        %398 = vbcast.lane.b32.xlu0 %v396, 256
        %v399 = vpop.permute.xlu0 %398
        %v400 = vlaneseq
        %v401 = vshrl.u32 %v400, 7
        %v402 = vsub.s32 3, %v401
        %v403 = vrot.slane %v140, %v402
        %405 = vbcast.lane.b32.xlu0 %v403, 256
        %v406 = vpop.permute.xlu0 %405
        %v407 = vlaneseq
        %v408 = vshrl.u32 %v407, 7
        %v409 = vsub.s32 4, %v408
        %v410 = vrot.slane %v140, %v409
        %412 = vbcast.lane.b32.xlu0 %v410, 256
        %v413 = vpop.permute.xlu0 %412
        %v414 = vlaneseq
        %v415 = vshrl.u32 %v414, 7
        %v416 = vsub.s32 5, %v415
        %v417 = vrot.slane %v140, %v416
        %419 = vbcast.lane.b32.xlu0 %v417, 256
        %v420 = vpop.permute.xlu0 %419
        %v421 = vlaneseq
        %v422 = vshrl.u32 %v421, 7
        %v423 = vsub.s32 6, %v422
        %v424 = vrot.slane %v140, %v423
        %426 = vbcast.lane.b32.xlu0 %v424, 256
        %v427 = vpop.permute.xlu0 %426
        %v428 = vlaneseq
        %v429 = vshrl.u32 %v428, 7
        %v430 = vsub.s32 7, %v429
        %v431 = vrot.slane %v140, %v430
        %433 = vbcast.lane.b32.xlu0 %v431, 256
        %v434 = vpop.permute.xlu0 %433
        %v435 = vlaneseq
        %v436 = vshrl.u32 %v435, 7
        %v437 = vsub.s32 0, %v436
        %v438 = vrot.slane %v141, %v437
        %440 = vbcast.lane.b32.xlu0 %v438, 256
        %v441 = vpop.permute.xlu0 %440
        %v442 = vlaneseq
        %v443 = vshrl.u32 %v442, 7
        %v444 = vsub.s32 1, %v443
        %v445 = vrot.slane %v141, %v444
        %447 = vbcast.lane.b32.xlu0 %v445, 256
        %v448 = vpop.permute.xlu0 %447
        %v449 = vlaneseq
        %v450 = vshrl.u32 %v449, 7
        %v451 = vsub.s32 2, %v450
        %v452 = vrot.slane %v141, %v451
        %454 = vbcast.lane.b32.xlu0 %v452, 256
        %v455 = vpop.permute.xlu0 %454
        %v456 = vlaneseq
        %v457 = vshrl.u32 %v456, 7
        %v458 = vsub.s32 3, %v457
        %v459 = vrot.slane %v141, %v458
        %461 = vbcast.lane.b32.xlu0 %v459, 256
        %v462 = vpop.permute.xlu0 %461
        %v463 = vlaneseq
        %v464 = vshrl.u32 %v463, 7
        %v465 = vsub.s32 4, %v464
        %v466 = vrot.slane %v141, %v465
        %468 = vbcast.lane.b32.xlu0 %v466, 256
        %v469 = vpop.permute.xlu0 %468
        %v470 = vlaneseq
        %v471 = vshrl.u32 %v470, 7
        %v472 = vsub.s32 5, %v471
        %v473 = vrot.slane %v141, %v472
        %475 = vbcast.lane.b32.xlu0 %v473, 256
        %v476 = vpop.permute.xlu0 %475
        %v477 = vlaneseq
        %v478 = vshrl.u32 %v477, 7
        %v479 = vsub.s32 6, %v478
        %v480 = vrot.slane %v141, %v479
        %482 = vbcast.lane.b32.xlu0 %v480, 256
        %v483 = vpop.permute.xlu0 %482
        %v484 = vlaneseq
        %v485 = vshrl.u32 %v484, 7
        %v486 = vsub.s32 7, %v485
        %v487 = vrot.slane %v141, %v486
        %489 = vbcast.lane.b32.xlu0 %v487, 256
        %v490 = vpop.permute.xlu0 %489
        %v491 = vlaneseq
        %v492 = vshrl.u32 %v491, 7
        %v493 = vsub.s32 0, %v492
        %v494 = vrot.slane %v142, %v493
        %496 = vbcast.lane.b32.xlu0 %v494, 256
        %v497 = vpop.permute.xlu0 %496
        %v498 = vlaneseq
        %v499 = vshrl.u32 %v498, 7
        %v500 = vsub.s32 1, %v499
        %v501 = vrot.slane %v142, %v500
        %503 = vbcast.lane.b32.xlu0 %v501, 256
        %v504 = vpop.permute.xlu0 %503
        %v505 = vlaneseq
        %v506 = vshrl.u32 %v505, 7
        %v507 = vsub.s32 2, %v506
        %v508 = vrot.slane %v142, %v507
        %510 = vbcast.lane.b32.xlu0 %v508, 256
        %v511 = vpop.permute.xlu0 %510
        %v512 = vlaneseq
        %v513 = vshrl.u32 %v512, 7
        %v514 = vsub.s32 3, %v513
        %v515 = vrot.slane %v142, %v514
        %517 = vbcast.lane.b32.xlu0 %v515, 256
        %v518 = vpop.permute.xlu0 %517
        %v519 = vlaneseq
        %v520 = vshrl.u32 %v519, 7
        %v521 = vsub.s32 4, %v520
        %v522 = vrot.slane %v142, %v521
        %524 = vbcast.lane.b32.xlu0 %v522, 256
        %v525 = vpop.permute.xlu0 %524
        %v526 = vlaneseq
        %v527 = vshrl.u32 %v526, 7
        %v528 = vsub.s32 5, %v527
        %v529 = vrot.slane %v142, %v528
        %531 = vbcast.lane.b32.xlu0 %v529, 256
        %v532 = vpop.permute.xlu0 %531
        %v533 = vlaneseq
        %v534 = vshrl.u32 %v533, 7
        %v535 = vsub.s32 6, %v534
        %v536 = vrot.slane %v142, %v535
        %538 = vbcast.lane.b32.xlu0 %v536, 256
        %v539 = vpop.permute.xlu0 %538
        %v540 = vlaneseq
        %v541 = vshrl.u32 %v540, 7
        %v542 = vsub.s32 7, %v541
        %v543 = vrot.slane %v142, %v542
        %545 = vbcast.lane.b32.xlu0 %v543, 256
        %v546 = vpop.permute.xlu0 %545
        %v547 = vlaneseq
        %v548 = vshrl.u32 %v547, 7
        %v549 = vsub.s32 0, %v548
        %v550 = vrot.slane %v143, %v549
        %552 = vbcast.lane.b32.xlu0 %v550, 256
        %v553 = vpop.permute.xlu0 %552
        %v554 = vlaneseq
        %v555 = vshrl.u32 %v554, 7
        %v556 = vsub.s32 1, %v555
        %v557 = vrot.slane %v143, %v556
        %559 = vbcast.lane.b32.xlu0 %v557, 256
        %v560 = vpop.permute.xlu0 %559
        %v561 = vlaneseq
        %v562 = vshrl.u32 %v561, 7
        %v563 = vsub.s32 2, %v562
        %v564 = vrot.slane %v143, %v563
        %566 = vbcast.lane.b32.xlu0 %v564, 256
        %v567 = vpop.permute.xlu0 %566
        %v568 = vlaneseq
        %v569 = vshrl.u32 %v568, 7
        %v570 = vsub.s32 3, %v569
        %v571 = vrot.slane %v143, %v570
        %573 = vbcast.lane.b32.xlu0 %v571, 256
        %v574 = vpop.permute.xlu0 %573
        %v575 = vlaneseq
        %v576 = vshrl.u32 %v575, 7
        %v577 = vsub.s32 4, %v576
        %v578 = vrot.slane %v143, %v577
        %580 = vbcast.lane.b32.xlu0 %v578, 256
        %v581 = vpop.permute.xlu0 %580
        %v582 = vlaneseq
        %v583 = vshrl.u32 %v582, 7
        %v584 = vsub.s32 5, %v583
        %v585 = vrot.slane %v143, %v584
        %587 = vbcast.lane.b32.xlu0 %v585, 256
        %v588 = vpop.permute.xlu0 %587
        %v589 = vlaneseq
        %v590 = vshrl.u32 %v589, 7
        %v591 = vsub.s32 6, %v590
        %v592 = vrot.slane %v143, %v591
        %594 = vbcast.lane.b32.xlu0 %v592, 256
        %v595 = vpop.permute.xlu0 %594
        %v596 = vlaneseq
        %v597 = vshrl.u32 %v596, 7
        %v598 = vsub.s32 7, %v597
        %v599 = vrot.slane %v143, %v598
        %601 = vbcast.lane.b32.xlu0 %v599, 256
        %v602 = vpop.permute.xlu0 %601
        %v603 = vlaneseq
        %v604 = vshrl.u32 %v603, 7
        %v605 = vsub.s32 0, %v604
        %v606 = vrot.slane %v144, %v605
        %608 = vbcast.lane.b32.xlu0 %v606, 256
        %v609 = vpop.permute.xlu0 %608
        %v610 = vlaneseq
        %v611 = vshrl.u32 %v610, 7
        %v612 = vsub.s32 1, %v611
        %v613 = vrot.slane %v144, %v612
        %615 = vbcast.lane.b32.xlu0 %v613, 256
        %v616 = vpop.permute.xlu0 %615
        %v617 = vlaneseq
        %v618 = vshrl.u32 %v617, 7
        %v619 = vsub.s32 2, %v618
        %v620 = vrot.slane %v144, %v619
        %622 = vbcast.lane.b32.xlu0 %v620, 256
        %v623 = vpop.permute.xlu0 %622
        %v624 = vlaneseq
        %v625 = vshrl.u32 %v624, 7
        %v626 = vsub.s32 3, %v625
        %v627 = vrot.slane %v144, %v626
        %629 = vbcast.lane.b32.xlu0 %v627, 256
        %v630 = vpop.permute.xlu0 %629
        %v631 = vlaneseq
        %v632 = vshrl.u32 %v631, 7
        %v633 = vsub.s32 4, %v632
        %v634 = vrot.slane %v144, %v633
        %636 = vbcast.lane.b32.xlu0 %v634, 256
        %v637 = vpop.permute.xlu0 %636
        %v638 = vlaneseq
        %v639 = vshrl.u32 %v638, 7
        %v640 = vsub.s32 5, %v639
        %v641 = vrot.slane %v144, %v640
        %643 = vbcast.lane.b32.xlu0 %v641, 256
        %v644 = vpop.permute.xlu0 %643
        %v645 = vlaneseq
        %v646 = vshrl.u32 %v645, 7
        %v647 = vsub.s32 6, %v646
        %v648 = vrot.slane %v144, %v647
        %650 = vbcast.lane.b32.xlu0 %v648, 256
        %v651 = vpop.permute.xlu0 %650
        %v652 = vlaneseq
        %v653 = vshrl.u32 %v652, 7
        %v654 = vsub.s32 7, %v653
        %v655 = vrot.slane %v144, %v654
        %657 = vbcast.lane.b32.xlu0 %v655, 256
        %v658 = vpop.permute.xlu0 %657
        %v667 = vcombine.high %v203, %v203
        %v669 = vunpack.c.l.s4 1966171168
        %v670 = vunpack.c.0.s8 %v669
        %v671 = vlaneseq
        %v672 = vshrl.u32 %v671, 7
        %v673 = vsub.s32 %v670, %v672
        %v674 = vrot.slane %v203, %v673
        %v676 = vunpack.c.l.s4 1966171168
        %v677 = vunpack.c.0.s8 %v676
        %v678 = vlaneseq
        %v679 = vshrl.u32 %v678, 7
        %v680 = vsub.s32 %v677, %v679
        %v681 = vrot.slane %v667, %v680
        %v682 = vcombine.high %v674, %v674
        %v683 = vcombine.high %v681, %v681
        %v685 = vunpack.c.l.s4 1966171168
        %v686 = vunpack.c.0.s8 %v685
        %v687 = vlaneseq
        %v688 = vshrl.u32 %v687, 7
        %v689 = vsub.s32 %v686, %v688
        %v690 = vrot.slane %v674, %v689
        %v692 = vunpack.c.l.s4 1966171168
        %v693 = vunpack.c.0.s8 %v692
        %v694 = vlaneseq
        %v695 = vshrl.u32 %v694, 7
        %v696 = vsub.s32 %v693, %v695
        %v697 = vrot.slane %v681, %v696
        %v699 = vunpack.c.l.s4 1966171168
        %v700 = vunpack.c.0.s8 %v699
        %v701 = vlaneseq
        %v702 = vshrl.u32 %v701, 7
        %v703 = vsub.s32 %v700, %v702
        %v704 = vrot.slane %v682, %v703
        %v706 = vunpack.c.l.s4 1966171168
        %v707 = vunpack.c.0.s8 %v706
        %v708 = vlaneseq
        %v709 = vshrl.u32 %v708, 7
        %v710 = vsub.s32 %v707, %v709
        %v711 = vrot.slane %v683, %v710
        %v712 = vcombine.high %v690, %v690
        %v713 = vcombine.high %v697, %v697
        %v714 = vcombine.high %v704, %v704
        %v715 = vcombine.high %v711, %v711
        %v716 = vcombine.high %v204, %v204
        %v718 = vunpack.c.l.s4 1966171168
        %v719 = vunpack.c.0.s8 %v718
        %v720 = vlaneseq
        %v721 = vshrl.u32 %v720, 7
        %v722 = vsub.s32 %v719, %v721
        %v723 = vrot.slane %v204, %v722
        %v725 = vunpack.c.l.s4 1966171168
        %v726 = vunpack.c.0.s8 %v725
        %v727 = vlaneseq
        %v728 = vshrl.u32 %v727, 7
        %v729 = vsub.s32 %v726, %v728
        %v730 = vrot.slane %v716, %v729
        %v731 = vcombine.high %v723, %v723
        %v732 = vcombine.high %v730, %v730
        %v734 = vunpack.c.l.s4 1966171168
        %v735 = vunpack.c.0.s8 %v734
        %v736 = vlaneseq
        %v737 = vshrl.u32 %v736, 7
        %v738 = vsub.s32 %v735, %v737
        %v739 = vrot.slane %v723, %v738
        %v741 = vunpack.c.l.s4 1966171168
        %v742 = vunpack.c.0.s8 %v741
        %v743 = vlaneseq
        %v744 = vshrl.u32 %v743, 7
        %v745 = vsub.s32 %v742, %v744
        %v746 = vrot.slane %v730, %v745
        %v748 = vunpack.c.l.s4 1966171168
        %v749 = vunpack.c.0.s8 %v748
        %v750 = vlaneseq
        %v751 = vshrl.u32 %v750, 7
        %v752 = vsub.s32 %v749, %v751
        %v753 = vrot.slane %v731, %v752
        %v755 = vunpack.c.l.s4 1966171168
        %v756 = vunpack.c.0.s8 %v755
        %v757 = vlaneseq
        %v758 = vshrl.u32 %v757, 7
        %v759 = vsub.s32 %v756, %v758
        %v760 = vrot.slane %v732, %v759
        %v761 = vcombine.high %v739, %v739
        %v762 = vcombine.high %v746, %v746
        %v763 = vcombine.high %v753, %v753
        %v764 = vcombine.high %v760, %v760
        %v765 = vcombine.high %v205, %v205
        %v767 = vunpack.c.l.s4 1966171168
        %v768 = vunpack.c.0.s8 %v767
        %v769 = vlaneseq
        %v770 = vshrl.u32 %v769, 7
        %v771 = vsub.s32 %v768, %v770
        %v772 = vrot.slane %v205, %v771
        %v774 = vunpack.c.l.s4 1966171168
        %v775 = vunpack.c.0.s8 %v774
        %v776 = vlaneseq
        %v777 = vshrl.u32 %v776, 7
        %v778 = vsub.s32 %v775, %v777
        %v779 = vrot.slane %v765, %v778
        %v780 = vcombine.high %v772, %v772
        %v781 = vcombine.high %v779, %v779
        %v783 = vunpack.c.l.s4 1966171168
        %v784 = vunpack.c.0.s8 %v783
        %v785 = vlaneseq
        %v786 = vshrl.u32 %v785, 7
        %v787 = vsub.s32 %v784, %v786
        %v788 = vrot.slane %v772, %v787
        %v790 = vunpack.c.l.s4 1966171168
        %v791 = vunpack.c.0.s8 %v790
        %v792 = vlaneseq
        %v793 = vshrl.u32 %v792, 7
        %v794 = vsub.s32 %v791, %v793
        %v795 = vrot.slane %v779, %v794
        %v797 = vunpack.c.l.s4 1966171168
        %v798 = vunpack.c.0.s8 %v797
        %v799 = vlaneseq
        %v800 = vshrl.u32 %v799, 7
        %v801 = vsub.s32 %v798, %v800
        %v802 = vrot.slane %v780, %v801
        %v804 = vunpack.c.l.s4 1966171168
        %v805 = vunpack.c.0.s8 %v804
        %v806 = vlaneseq
        %v807 = vshrl.u32 %v806, 7
        %v808 = vsub.s32 %v805, %v807
        %v809 = vrot.slane %v781, %v808
        %v810 = vcombine.high %v788, %v788
        %v811 = vcombine.high %v795, %v795
        %v812 = vcombine.high %v802, %v802
        %v813 = vcombine.high %v809, %v809
        %v814 = vcombine.high %v206, %v206
        %v816 = vunpack.c.l.s4 1966171168
        %v817 = vunpack.c.0.s8 %v816
        %v818 = vlaneseq
        %v819 = vshrl.u32 %v818, 7
        %v820 = vsub.s32 %v817, %v819
        %v821 = vrot.slane %v206, %v820
        %v823 = vunpack.c.l.s4 1966171168
        %v824 = vunpack.c.0.s8 %v823
        %v825 = vlaneseq
        %v826 = vshrl.u32 %v825, 7
        %v827 = vsub.s32 %v824, %v826
        %v828 = vrot.slane %v814, %v827
        %v829 = vcombine.high %v821, %v821
        %v830 = vcombine.high %v828, %v828
        %v832 = vunpack.c.l.s4 1966171168
        %v833 = vunpack.c.0.s8 %v832
        %v834 = vlaneseq
        %v835 = vshrl.u32 %v834, 7
        %v836 = vsub.s32 %v833, %v835
        %v837 = vrot.slane %v821, %v836
        %v839 = vunpack.c.l.s4 1966171168
        %v840 = vunpack.c.0.s8 %v839
        %v841 = vlaneseq
        %v842 = vshrl.u32 %v841, 7
        %v843 = vsub.s32 %v840, %v842
        %v844 = vrot.slane %v828, %v843
        %v846 = vunpack.c.l.s4 1966171168
        %v847 = vunpack.c.0.s8 %v846
        %v848 = vlaneseq
        %v849 = vshrl.u32 %v848, 7
        %v850 = vsub.s32 %v847, %v849
        %v851 = vrot.slane %v829, %v850
        %v853 = vunpack.c.l.s4 1966171168
        %v854 = vunpack.c.0.s8 %v853
        %v855 = vlaneseq
        %v856 = vshrl.u32 %v855, 7
        %v857 = vsub.s32 %v854, %v856
        %v858 = vrot.slane %v830, %v857
        %v859 = vcombine.high %v837, %v837
        %v860 = vcombine.high %v844, %v844
        %v861 = vcombine.high %v851, %v851
        %v862 = vcombine.high %v858, %v858
        %v863 = vcombine.high %v207, %v207
        %v865 = vunpack.c.l.s4 1966171168
        %v866 = vunpack.c.0.s8 %v865
        %v867 = vlaneseq
        %v868 = vshrl.u32 %v867, 7
        %v869 = vsub.s32 %v866, %v868
        %v870 = vrot.slane %v207, %v869
        %v872 = vunpack.c.l.s4 1966171168
        %v873 = vunpack.c.0.s8 %v872
        %v874 = vlaneseq
        %v875 = vshrl.u32 %v874, 7
        %v876 = vsub.s32 %v873, %v875
        %v877 = vrot.slane %v863, %v876
        %v878 = vcombine.high %v870, %v870
        %v879 = vcombine.high %v877, %v877
        %v881 = vunpack.c.l.s4 1966171168
        %v882 = vunpack.c.0.s8 %v881
        %v883 = vlaneseq
        %v884 = vshrl.u32 %v883, 7
        %v885 = vsub.s32 %v882, %v884
        %v886 = vrot.slane %v870, %v885
        %v888 = vunpack.c.l.s4 1966171168
        %v889 = vunpack.c.0.s8 %v888
        %v890 = vlaneseq
        %v891 = vshrl.u32 %v890, 7
        %v892 = vsub.s32 %v889, %v891
        %v893 = vrot.slane %v877, %v892
        %v895 = vunpack.c.l.s4 1966171168
        %v896 = vunpack.c.0.s8 %v895
        %v897 = vlaneseq
        %v898 = vshrl.u32 %v897, 7
        %v899 = vsub.s32 %v896, %v898
        %v900 = vrot.slane %v878, %v899
        %v902 = vunpack.c.l.s4 1966171168
        %v903 = vunpack.c.0.s8 %v902
        %v904 = vlaneseq
        %v905 = vshrl.u32 %v904, 7
        %v906 = vsub.s32 %v903, %v905
        %v907 = vrot.slane %v879, %v906
        %v908 = vcombine.high %v886, %v886
        %v909 = vcombine.high %v893, %v893
        %v910 = vcombine.high %v900, %v900
        %v911 = vcombine.high %v907, %v907
        %v912 = vcombine.high %v208, %v208
        %v914 = vunpack.c.l.s4 1966171168
        %v915 = vunpack.c.0.s8 %v914
        %v916 = vlaneseq
        %v917 = vshrl.u32 %v916, 7
        %v918 = vsub.s32 %v915, %v917
        %v919 = vrot.slane %v208, %v918
        %v921 = vunpack.c.l.s4 1966171168
        %v922 = vunpack.c.0.s8 %v921
        %v923 = vlaneseq
        %v924 = vshrl.u32 %v923, 7
        %v925 = vsub.s32 %v922, %v924
        %v926 = vrot.slane %v912, %v925
        %v927 = vcombine.high %v919, %v919
        %v928 = vcombine.high %v926, %v926
        %v930 = vunpack.c.l.s4 1966171168
        %v931 = vunpack.c.0.s8 %v930
        %v932 = vlaneseq
        %v933 = vshrl.u32 %v932, 7
        %v934 = vsub.s32 %v931, %v933
        %v935 = vrot.slane %v919, %v934
        %v937 = vunpack.c.l.s4 1966171168
        %v938 = vunpack.c.0.s8 %v937
        %v939 = vlaneseq
        %v940 = vshrl.u32 %v939, 7
        %v941 = vsub.s32 %v938, %v940
        %v942 = vrot.slane %v926, %v941
        %v944 = vunpack.c.l.s4 1966171168
        %v945 = vunpack.c.0.s8 %v944
        %v946 = vlaneseq
        %v947 = vshrl.u32 %v946, 7
        %v948 = vsub.s32 %v945, %v947
        %v949 = vrot.slane %v927, %v948
        %v951 = vunpack.c.l.s4 1966171168
        %v952 = vunpack.c.0.s8 %v951
        %v953 = vlaneseq
        %v954 = vshrl.u32 %v953, 7
        %v955 = vsub.s32 %v952, %v954
        %v956 = vrot.slane %v928, %v955
        %v957 = vcombine.high %v935, %v935
        %v958 = vcombine.high %v942, %v942
        %v959 = vcombine.high %v949, %v949
        %v960 = vcombine.high %v956, %v956
        %v961 = vcombine.high %v209, %v209
        %v963 = vunpack.c.l.s4 1966171168
        %v964 = vunpack.c.0.s8 %v963
        %v965 = vlaneseq
        %v966 = vshrl.u32 %v965, 7
        %v967 = vsub.s32 %v964, %v966
        %v968 = vrot.slane %v209, %v967
        %v970 = vunpack.c.l.s4 1966171168
        %v971 = vunpack.c.0.s8 %v970
        %v972 = vlaneseq
        %v973 = vshrl.u32 %v972, 7
        %v974 = vsub.s32 %v971, %v973
        %v975 = vrot.slane %v961, %v974
        %v976 = vcombine.high %v968, %v968
        %v977 = vcombine.high %v975, %v975
        %v979 = vunpack.c.l.s4 1966171168
        %v980 = vunpack.c.0.s8 %v979
        %v981 = vlaneseq
        %v982 = vshrl.u32 %v981, 7
        %v983 = vsub.s32 %v980, %v982
        %v984 = vrot.slane %v968, %v983
        %v986 = vunpack.c.l.s4 1966171168
        %v987 = vunpack.c.0.s8 %v986
        %v988 = vlaneseq
        %v989 = vshrl.u32 %v988, 7
        %v990 = vsub.s32 %v987, %v989
        %v991 = vrot.slane %v975, %v990
        %v993 = vunpack.c.l.s4 1966171168
        %v994 = vunpack.c.0.s8 %v993
        %v995 = vlaneseq
        %v996 = vshrl.u32 %v995, 7
        %v997 = vsub.s32 %v994, %v996
        %v998 = vrot.slane %v976, %v997
        %v1000 = vunpack.c.l.s4 1966171168
        %v1001 = vunpack.c.0.s8 %v1000
        %v1002 = vlaneseq
        %v1003 = vshrl.u32 %v1002, 7
        %v1004 = vsub.s32 %v1001, %v1003
        %v1005 = vrot.slane %v977, %v1004
        %v1006 = vcombine.high %v984, %v984
        %v1007 = vcombine.high %v991, %v991
        %v1008 = vcombine.high %v998, %v998
        %v1009 = vcombine.high %v1005, %v1005
        %v1010 = vcombine.high %v210, %v210
        %v1012 = vunpack.c.l.s4 1966171168
        %v1013 = vunpack.c.0.s8 %v1012
        %v1014 = vlaneseq
        %v1015 = vshrl.u32 %v1014, 7
        %v1016 = vsub.s32 %v1013, %v1015
        %v1017 = vrot.slane %v210, %v1016
        %v1019 = vunpack.c.l.s4 1966171168
        %v1020 = vunpack.c.0.s8 %v1019
        %v1021 = vlaneseq
        %v1022 = vshrl.u32 %v1021, 7
        %v1023 = vsub.s32 %v1020, %v1022
        %v1024 = vrot.slane %v1010, %v1023
        %v1025 = vcombine.high %v1017, %v1017
        %v1026 = vcombine.high %v1024, %v1024
        %v1028 = vunpack.c.l.s4 1966171168
        %v1029 = vunpack.c.0.s8 %v1028
        %v1030 = vlaneseq
        %v1031 = vshrl.u32 %v1030, 7
        %v1032 = vsub.s32 %v1029, %v1031
        %v1033 = vrot.slane %v1017, %v1032
        %v1035 = vunpack.c.l.s4 1966171168
        %v1036 = vunpack.c.0.s8 %v1035
        %v1037 = vlaneseq
        %v1038 = vshrl.u32 %v1037, 7
        %v1039 = vsub.s32 %v1036, %v1038
        %v1040 = vrot.slane %v1024, %v1039
        %v1042 = vunpack.c.l.s4 1966171168
        %v1043 = vunpack.c.0.s8 %v1042
        %v1044 = vlaneseq
        %v1045 = vshrl.u32 %v1044, 7
        %v1046 = vsub.s32 %v1043, %v1045
        %v1047 = vrot.slane %v1025, %v1046
        %v1049 = vunpack.c.l.s4 1966171168
        %v1050 = vunpack.c.0.s8 %v1049
        %v1051 = vlaneseq
        %v1052 = vshrl.u32 %v1051, 7
        %v1053 = vsub.s32 %v1050, %v1052
        %v1054 = vrot.slane %v1026, %v1053
        %v1055 = vcombine.high %v1033, %v1033
        %v1056 = vcombine.high %v1040, %v1040
        %v1057 = vcombine.high %v1047, %v1047
        %v1058 = vcombine.high %v1054, %v1054
        %v1059 = vlaneseq
        %v1060 = vshrl.u32 %v1059, 7
        %v1061 = vsub.s32 0, %v1060
        %v1062 = vrot.slane %v690, %v1061
        %v1063 = vlaneseq
        %v1064 = vshrl.u32 %v1063, 7
        %v1065 = vsub.s32 0, %v1064
        %v1066 = vrot.slane %v704, %v1065
        %v1067 = vlaneseq
        %v1068 = vshrl.u32 %v1067, 7
        %v1069 = vsub.s32 0, %v1068
        %v1070 = vrot.slane %v712, %v1069
        %v1071 = vlaneseq
        %v1072 = vshrl.u32 %v1071, 7
        %v1073 = vsub.s32 0, %v1072
        %v1074 = vrot.slane %v714, %v1073
        %v1075 = vlaneseq
        %v1076 = vshrl.u32 %v1075, 7
        %v1077 = vsub.s32 0, %v1076
        %v1078 = vrot.slane %v697, %v1077
        %v1079 = vlaneseq
        %v1080 = vshrl.u32 %v1079, 7
        %v1081 = vsub.s32 0, %v1080
        %v1082 = vrot.slane %v711, %v1081
        %v1083 = vlaneseq
        %v1084 = vshrl.u32 %v1083, 7
        %v1085 = vsub.s32 0, %v1084
        %v1086 = vrot.slane %v713, %v1085
        %v1087 = vlaneseq
        %v1088 = vshrl.u32 %v1087, 7
        %v1089 = vsub.s32 0, %v1088
        %v1090 = vrot.slane %v715, %v1089
        %v1091 = vlaneseq
        %v1092 = vshrl.u32 %v1091, 7
        %v1093 = vsub.s32 0, %v1092
        %v1094 = vrot.slane %v739, %v1093
        %v1095 = vlaneseq
        %v1096 = vshrl.u32 %v1095, 7
        %v1097 = vsub.s32 0, %v1096
        %v1098 = vrot.slane %v753, %v1097
        %v1099 = vlaneseq
        %v1100 = vshrl.u32 %v1099, 7
        %v1101 = vsub.s32 0, %v1100
        %v1102 = vrot.slane %v761, %v1101
        %v1103 = vlaneseq
        %v1104 = vshrl.u32 %v1103, 7
        %v1105 = vsub.s32 0, %v1104
        %v1106 = vrot.slane %v763, %v1105
        %v1107 = vlaneseq
        %v1108 = vshrl.u32 %v1107, 7
        %v1109 = vsub.s32 0, %v1108
        %v1110 = vrot.slane %v746, %v1109
        %v1111 = vlaneseq
        %v1112 = vshrl.u32 %v1111, 7
        %v1113 = vsub.s32 0, %v1112
        %v1114 = vrot.slane %v760, %v1113
        %v1115 = vlaneseq
        %v1116 = vshrl.u32 %v1115, 7
        %v1117 = vsub.s32 0, %v1116
        %v1118 = vrot.slane %v762, %v1117
        %v1119 = vlaneseq
        %v1120 = vshrl.u32 %v1119, 7
        %v1121 = vsub.s32 0, %v1120
        %v1122 = vrot.slane %v764, %v1121
        %v1123 = vlaneseq
        %v1124 = vshrl.u32 %v1123, 7
        %v1125 = vsub.s32 0, %v1124
        %v1126 = vrot.slane %v788, %v1125
        %v1127 = vlaneseq
        %v1128 = vshrl.u32 %v1127, 7
        %v1129 = vsub.s32 0, %v1128
        %v1130 = vrot.slane %v802, %v1129
        %v1131 = vlaneseq
        %v1132 = vshrl.u32 %v1131, 7
        %v1133 = vsub.s32 0, %v1132
        %v1134 = vrot.slane %v810, %v1133
        %v1135 = vlaneseq
        %v1136 = vshrl.u32 %v1135, 7
        %v1137 = vsub.s32 0, %v1136
        %v1138 = vrot.slane %v812, %v1137
        %v1139 = vlaneseq
        %v1140 = vshrl.u32 %v1139, 7
        %v1141 = vsub.s32 0, %v1140
        %v1142 = vrot.slane %v795, %v1141
        %v1143 = vlaneseq
        %v1144 = vshrl.u32 %v1143, 7
        %v1145 = vsub.s32 0, %v1144
        %v1146 = vrot.slane %v809, %v1145
        %v1147 = vlaneseq
        %v1148 = vshrl.u32 %v1147, 7
        %v1149 = vsub.s32 0, %v1148
        %v1150 = vrot.slane %v811, %v1149
        %v1151 = vlaneseq
        %v1152 = vshrl.u32 %v1151, 7
        %v1153 = vsub.s32 0, %v1152
        %v1154 = vrot.slane %v813, %v1153
        %v1155 = vlaneseq
        %v1156 = vshrl.u32 %v1155, 7
        %v1157 = vsub.s32 0, %v1156
        %v1158 = vrot.slane %v837, %v1157
        %v1159 = vlaneseq
        %v1160 = vshrl.u32 %v1159, 7
        %v1161 = vsub.s32 0, %v1160
        %v1162 = vrot.slane %v851, %v1161
        %v1163 = vlaneseq
        %v1164 = vshrl.u32 %v1163, 7
        %v1165 = vsub.s32 0, %v1164
        %v1166 = vrot.slane %v859, %v1165
        %v1167 = vlaneseq
        %v1168 = vshrl.u32 %v1167, 7
        %v1169 = vsub.s32 0, %v1168
        %v1170 = vrot.slane %v861, %v1169
        %v1171 = vlaneseq
        %v1172 = vshrl.u32 %v1171, 7
        %v1173 = vsub.s32 0, %v1172
        %v1174 = vrot.slane %v844, %v1173
        %v1175 = vlaneseq
        %v1176 = vshrl.u32 %v1175, 7
        %v1177 = vsub.s32 0, %v1176
        %v1178 = vrot.slane %v858, %v1177
        %v1179 = vlaneseq
        %v1180 = vshrl.u32 %v1179, 7
        %v1181 = vsub.s32 0, %v1180
        %v1182 = vrot.slane %v860, %v1181
        %v1183 = vlaneseq
        %v1184 = vshrl.u32 %v1183, 7
        %v1185 = vsub.s32 0, %v1184
        %v1186 = vrot.slane %v862, %v1185
        %v1187 = vlaneseq
        %v1188 = vshrl.u32 %v1187, 7
        %v1189 = vsub.s32 0, %v1188
        %v1190 = vrot.slane %v886, %v1189
        %v1191 = vlaneseq
        %v1192 = vshrl.u32 %v1191, 7
        %v1193 = vsub.s32 0, %v1192
        %v1194 = vrot.slane %v900, %v1193
        %v1195 = vlaneseq
        %v1196 = vshrl.u32 %v1195, 7
        %v1197 = vsub.s32 0, %v1196
        %v1198 = vrot.slane %v908, %v1197
        %v1199 = vlaneseq
        %v1200 = vshrl.u32 %v1199, 7
        %v1201 = vsub.s32 0, %v1200
        %v1202 = vrot.slane %v910, %v1201
        %v1203 = vlaneseq
        %v1204 = vshrl.u32 %v1203, 7
        %v1205 = vsub.s32 0, %v1204
        %v1206 = vrot.slane %v893, %v1205
        %v1207 = vlaneseq
        %v1208 = vshrl.u32 %v1207, 7
        %v1209 = vsub.s32 0, %v1208
        %v1210 = vrot.slane %v907, %v1209
        %v1211 = vlaneseq
        %v1212 = vshrl.u32 %v1211, 7
        %v1213 = vsub.s32 0, %v1212
        %v1214 = vrot.slane %v909, %v1213
        %v1215 = vlaneseq
        %v1216 = vshrl.u32 %v1215, 7
        %v1217 = vsub.s32 0, %v1216
        %v1218 = vrot.slane %v911, %v1217
        %v1219 = vlaneseq
        %v1220 = vshrl.u32 %v1219, 7
        %v1221 = vsub.s32 0, %v1220
        %v1222 = vrot.slane %v935, %v1221
        %v1223 = vlaneseq
        %v1224 = vshrl.u32 %v1223, 7
        %v1225 = vsub.s32 0, %v1224
        %v1226 = vrot.slane %v949, %v1225
        %v1227 = vlaneseq
        %v1228 = vshrl.u32 %v1227, 7
        %v1229 = vsub.s32 0, %v1228
        %v1230 = vrot.slane %v957, %v1229
        %v1231 = vlaneseq
        %v1232 = vshrl.u32 %v1231, 7
        %v1233 = vsub.s32 0, %v1232
        %v1234 = vrot.slane %v959, %v1233
        %v1235 = vlaneseq
        %v1236 = vshrl.u32 %v1235, 7
        %v1237 = vsub.s32 0, %v1236
        %v1238 = vrot.slane %v942, %v1237
        %v1239 = vlaneseq
        %v1240 = vshrl.u32 %v1239, 7
        %v1241 = vsub.s32 0, %v1240
        %v1242 = vrot.slane %v956, %v1241
        %v1243 = vlaneseq
        %v1244 = vshrl.u32 %v1243, 7
        %v1245 = vsub.s32 0, %v1244
        %v1246 = vrot.slane %v958, %v1245
        %v1247 = vlaneseq
        %v1248 = vshrl.u32 %v1247, 7
        %v1249 = vsub.s32 0, %v1248
        %v1250 = vrot.slane %v960, %v1249
        %v1251 = vlaneseq
        %v1252 = vshrl.u32 %v1251, 7
        %v1253 = vsub.s32 0, %v1252
        %v1254 = vrot.slane %v984, %v1253
        %v1255 = vlaneseq
        %v1256 = vshrl.u32 %v1255, 7
        %v1257 = vsub.s32 0, %v1256
        %v1258 = vrot.slane %v998, %v1257
        %v1259 = vlaneseq
        %v1260 = vshrl.u32 %v1259, 7
        %v1261 = vsub.s32 0, %v1260
        %v1262 = vrot.slane %v1006, %v1261
        %v1263 = vlaneseq
        %v1264 = vshrl.u32 %v1263, 7
        %v1265 = vsub.s32 0, %v1264
        %v1266 = vrot.slane %v1008, %v1265
        %v1267 = vlaneseq
        %v1268 = vshrl.u32 %v1267, 7
        %v1269 = vsub.s32 0, %v1268
        %v1270 = vrot.slane %v991, %v1269
        %v1271 = vlaneseq
        %v1272 = vshrl.u32 %v1271, 7
        %v1273 = vsub.s32 0, %v1272
        %v1274 = vrot.slane %v1005, %v1273
        %v1275 = vlaneseq
        %v1276 = vshrl.u32 %v1275, 7
        %v1277 = vsub.s32 0, %v1276
        %v1278 = vrot.slane %v1007, %v1277
        %v1279 = vlaneseq
        %v1280 = vshrl.u32 %v1279, 7
        %v1281 = vsub.s32 0, %v1280
        %v1282 = vrot.slane %v1009, %v1281
        %v1283 = vlaneseq
        %v1284 = vshrl.u32 %v1283, 7
        %v1285 = vsub.s32 0, %v1284
        %v1286 = vrot.slane %v1033, %v1285
        %v1287 = vlaneseq
        %v1288 = vshrl.u32 %v1287, 7
        %v1289 = vsub.s32 0, %v1288
        %v1290 = vrot.slane %v1047, %v1289
        %v1291 = vlaneseq
        %v1292 = vshrl.u32 %v1291, 7
        %v1293 = vsub.s32 0, %v1292
        %v1294 = vrot.slane %v1055, %v1293
        %v1295 = vlaneseq
        %v1296 = vshrl.u32 %v1295, 7
        %v1297 = vsub.s32 0, %v1296
        %v1298 = vrot.slane %v1057, %v1297
        %v1299 = vlaneseq
        %v1300 = vshrl.u32 %v1299, 7
        %v1301 = vsub.s32 0, %v1300
        %v1302 = vrot.slane %v1040, %v1301
        %v1303 = vlaneseq
        %v1304 = vshrl.u32 %v1303, 7
        %v1305 = vsub.s32 0, %v1304
        %v1306 = vrot.slane %v1054, %v1305
        %v1307 = vlaneseq
        %v1308 = vshrl.u32 %v1307, 7
        %v1309 = vsub.s32 0, %v1308
        %v1310 = vrot.slane %v1056, %v1309
        %v1311 = vlaneseq
        %v1312 = vshrl.u32 %v1311, 7
        %v1313 = vsub.s32 0, %v1312
        %v1314 = vrot.slane %v1058, %v1313
        %v1379 = vmul.f32 %v217, %v1062
        %v1380 = vmul.f32 %v224, %v1066
        %v1381 = vmul.f32 %v231, %v1070
        %v1382 = vmul.f32 %v238, %v1074
        %v1383 = vmul.f32 %v245, %v1078
        %v1384 = vmul.f32 %v252, %v1082
        %v1385 = vmul.f32 %v259, %v1086
        %v1386 = vmul.f32 %v266, %v1090
        %v1387 = vmul.f32 %v273, %v1094
        %v1388 = vmul.f32 %v280, %v1098
        %v1389 = vmul.f32 %v287, %v1102
        %v1390 = vmul.f32 %v294, %v1106
        %v1391 = vmul.f32 %v301, %v1110
        %v1392 = vmul.f32 %v308, %v1114
        %v1393 = vmul.f32 %v315, %v1118
        %v1394 = vmul.f32 %v322, %v1122
        %v1395 = vmul.f32 %v329, %v1126
        %v1396 = vmul.f32 %v336, %v1130
        %v1397 = vmul.f32 %v343, %v1134
        %v1398 = vmul.f32 %v350, %v1138
        %v1399 = vmul.f32 %v357, %v1142
        %v1400 = vmul.f32 %v364, %v1146
        %v1401 = vmul.f32 %v371, %v1150
        %v1402 = vmul.f32 %v378, %v1154
        %v1403 = vmul.f32 %v385, %v1158
        %v1404 = vmul.f32 %v392, %v1162
        %v1405 = vmul.f32 %v399, %v1166
        %v1406 = vmul.f32 %v406, %v1170
        %v1407 = vmul.f32 %v413, %v1174
        %v1408 = vmul.f32 %v420, %v1178
        %v1409 = vmul.f32 %v427, %v1182
        %v1410 = vmul.f32 %v434, %v1186
        %v1411 = vmul.f32 %v441, %v1190
        %v1412 = vmul.f32 %v448, %v1194
        %v1413 = vmul.f32 %v455, %v1198
        %v1414 = vmul.f32 %v462, %v1202
        %v1415 = vmul.f32 %v469, %v1206
        %v1416 = vmul.f32 %v476, %v1210
        %v1417 = vmul.f32 %v483, %v1214
        %v1418 = vmul.f32 %v490, %v1218
        %v1419 = vmul.f32 %v497, %v1222
        %v1420 = vmul.f32 %v504, %v1226
        %v1421 = vmul.f32 %v511, %v1230
        %v1422 = vmul.f32 %v518, %v1234
        %v1423 = vmul.f32 %v525, %v1238
        %v1424 = vmul.f32 %v532, %v1242
        %v1425 = vmul.f32 %v539, %v1246
        %v1426 = vmul.f32 %v546, %v1250
        %v1427 = vmul.f32 %v553, %v1254
        %v1428 = vmul.f32 %v560, %v1258
        %v1429 = vmul.f32 %v567, %v1262
        %v1430 = vmul.f32 %v574, %v1266
        %v1431 = vmul.f32 %v581, %v1270
        %v1432 = vmul.f32 %v588, %v1274
        %v1433 = vmul.f32 %v595, %v1278
        %v1434 = vmul.f32 %v602, %v1282
        %v1435 = vmul.f32 %v609, %v1286
        %v1436 = vmul.f32 %v616, %v1290
        %v1437 = vmul.f32 %v623, %v1294
        %v1438 = vmul.f32 %v630, %v1298
        %v1439 = vmul.f32 %v637, %v1302
        %v1440 = vmul.f32 %v644, %v1306
        %v1441 = vmul.f32 %v651, %v1310
        %v1442 = vmul.f32 %v658, %v1314
        %v1443 = vcombine.low %v1379, %v1381
        %v1444 = vcombine.high %v1379, %v1381
        %v1446 = vunpack.c.l.s4 1983009808
        %v1447 = vunpack.c.0.s8 %v1446
        %v1448 = vlaneseq
        %v1449 = vshrl.u32 %v1448, 7
        %v1450 = vsub.s32 %v1447, %v1449
        %v1451 = vrot.slane %v1443, %v1450
        %v1453 = vunpack.c.l.s4 1983009808
        %v1454 = vunpack.c.0.s8 %v1453
        %v1455 = vlaneseq
        %v1456 = vshrl.u32 %v1455, 7
        %v1457 = vsub.s32 %v1454, %v1456
        %v1458 = vrot.slane %v1444, %v1457
        %v1459 = vcombine.low %v1380, %v1382
        %v1460 = vcombine.high %v1380, %v1382
        %v1462 = vunpack.c.l.s4 1983009808
        %v1463 = vunpack.c.0.s8 %v1462
        %v1464 = vlaneseq
        %v1465 = vshrl.u32 %v1464, 7
        %v1466 = vsub.s32 %v1463, %v1465
        %v1467 = vrot.slane %v1459, %v1466
        %v1469 = vunpack.c.l.s4 1983009808
        %v1470 = vunpack.c.0.s8 %v1469
        %v1471 = vlaneseq
        %v1472 = vshrl.u32 %v1471, 7
        %v1473 = vsub.s32 %v1470, %v1472
        %v1474 = vrot.slane %v1460, %v1473
        %v1475 = vcombine.low %v1383, %v1385
        %v1476 = vcombine.high %v1383, %v1385
        %v1478 = vunpack.c.l.s4 1983009808
        %v1479 = vunpack.c.0.s8 %v1478
        %v1480 = vlaneseq
        %v1481 = vshrl.u32 %v1480, 7
        %v1482 = vsub.s32 %v1479, %v1481
        %v1483 = vrot.slane %v1475, %v1482
        %v1485 = vunpack.c.l.s4 1983009808
        %v1486 = vunpack.c.0.s8 %v1485
        %v1487 = vlaneseq
        %v1488 = vshrl.u32 %v1487, 7
        %v1489 = vsub.s32 %v1486, %v1488
        %v1490 = vrot.slane %v1476, %v1489
        %v1491 = vcombine.low %v1384, %v1386
        %v1492 = vcombine.high %v1384, %v1386
        %v1494 = vunpack.c.l.s4 1983009808
        %v1495 = vunpack.c.0.s8 %v1494
        %v1496 = vlaneseq
        %v1497 = vshrl.u32 %v1496, 7
        %v1498 = vsub.s32 %v1495, %v1497
        %v1499 = vrot.slane %v1491, %v1498
        %v1501 = vunpack.c.l.s4 1983009808
        %v1502 = vunpack.c.0.s8 %v1501
        %v1503 = vlaneseq
        %v1504 = vshrl.u32 %v1503, 7
        %v1505 = vsub.s32 %v1502, %v1504
        %v1506 = vrot.slane %v1492, %v1505
        %v1507 = vcombine.low %v1451, %v1467
        %v1508 = vcombine.high %v1451, %v1467
        %v1510 = vunpack.c.l.s4 1934713408
        %v1511 = vunpack.c.0.s8 %v1510
        %v1512 = vlaneseq
        %v1513 = vshrl.u32 %v1512, 7
        %v1514 = vsub.s32 %v1511, %v1513
        %v1515 = vrot.slane %v1507, %v1514
        %v1517 = vunpack.c.l.s4 1934713408
        %v1518 = vunpack.c.0.s8 %v1517
        %v1519 = vlaneseq
        %v1520 = vshrl.u32 %v1519, 7
        %v1521 = vsub.s32 %v1518, %v1520
        %v1522 = vrot.slane %v1508, %v1521
        %v1523 = vcombine.low %v1458, %v1474
        %v1524 = vcombine.high %v1458, %v1474
        %v1526 = vunpack.c.l.s4 1934713408
        %v1527 = vunpack.c.0.s8 %v1526
        %v1528 = vlaneseq
        %v1529 = vshrl.u32 %v1528, 7
        %v1530 = vsub.s32 %v1527, %v1529
        %v1531 = vrot.slane %v1523, %v1530
        %v1533 = vunpack.c.l.s4 1934713408
        %v1534 = vunpack.c.0.s8 %v1533
        %v1535 = vlaneseq
        %v1536 = vshrl.u32 %v1535, 7
        %v1537 = vsub.s32 %v1534, %v1536
        %v1538 = vrot.slane %v1524, %v1537
        %v1539 = vcombine.low %v1483, %v1499
        %v1540 = vcombine.high %v1483, %v1499
        %v1542 = vunpack.c.l.s4 1934713408
        %v1543 = vunpack.c.0.s8 %v1542
        %v1544 = vlaneseq
        %v1545 = vshrl.u32 %v1544, 7
        %v1546 = vsub.s32 %v1543, %v1545
        %v1547 = vrot.slane %v1539, %v1546
        %v1549 = vunpack.c.l.s4 1934713408
        %v1550 = vunpack.c.0.s8 %v1549
        %v1551 = vlaneseq
        %v1552 = vshrl.u32 %v1551, 7
        %v1553 = vsub.s32 %v1550, %v1552
        %v1554 = vrot.slane %v1540, %v1553
        %v1555 = vcombine.low %v1490, %v1506
        %v1556 = vcombine.high %v1490, %v1506
        %v1558 = vunpack.c.l.s4 1934713408
        %v1559 = vunpack.c.0.s8 %v1558
        %v1560 = vlaneseq
        %v1561 = vshrl.u32 %v1560, 7
        %v1562 = vsub.s32 %v1559, %v1561
        %v1563 = vrot.slane %v1555, %v1562
        %v1565 = vunpack.c.l.s4 1934713408
        %v1566 = vunpack.c.0.s8 %v1565
        %v1567 = vlaneseq
        %v1568 = vshrl.u32 %v1567, 7
        %v1569 = vsub.s32 %v1566, %v1568
        %v1570 = vrot.slane %v1556, %v1569
        %v1571 = vcombine.low %v1515, %v1547
        %v1572 = vcombine.high %v1515, %v1547
        %v1573 = vcombine.low %v1522, %v1554
        %v1574 = vcombine.high %v1522, %v1554
        %v1575 = vcombine.low %v1531, %v1563
        %v1576 = vcombine.high %v1531, %v1563
        %v1577 = vcombine.low %v1538, %v1570
        %v1578 = vcombine.high %v1538, %v1570
        %v1579 = vcombine.low %v1387, %v1389
        %v1580 = vcombine.high %v1387, %v1389
        %v1582 = vunpack.c.l.s4 1983009808
        %v1583 = vunpack.c.0.s8 %v1582
        %v1584 = vlaneseq
        %v1585 = vshrl.u32 %v1584, 7
        %v1586 = vsub.s32 %v1583, %v1585
        %v1587 = vrot.slane %v1579, %v1586
        %v1589 = vunpack.c.l.s4 1983009808
        %v1590 = vunpack.c.0.s8 %v1589
        %v1591 = vlaneseq
        %v1592 = vshrl.u32 %v1591, 7
        %v1593 = vsub.s32 %v1590, %v1592
        %v1594 = vrot.slane %v1580, %v1593
        %v1595 = vcombine.low %v1388, %v1390
        %v1596 = vcombine.high %v1388, %v1390
        %v1598 = vunpack.c.l.s4 1983009808
        %v1599 = vunpack.c.0.s8 %v1598
        %v1600 = vlaneseq
        %v1601 = vshrl.u32 %v1600, 7
        %v1602 = vsub.s32 %v1599, %v1601
        %v1603 = vrot.slane %v1595, %v1602
        %v1605 = vunpack.c.l.s4 1983009808
        %v1606 = vunpack.c.0.s8 %v1605
        %v1607 = vlaneseq
        %v1608 = vshrl.u32 %v1607, 7
        %v1609 = vsub.s32 %v1606, %v1608
        %v1610 = vrot.slane %v1596, %v1609
        %v1611 = vcombine.low %v1391, %v1393
        %v1612 = vcombine.high %v1391, %v1393
        %v1614 = vunpack.c.l.s4 1983009808
        %v1615 = vunpack.c.0.s8 %v1614
        %v1616 = vlaneseq
        %v1617 = vshrl.u32 %v1616, 7
        %v1618 = vsub.s32 %v1615, %v1617
        %v1619 = vrot.slane %v1611, %v1618
        %v1621 = vunpack.c.l.s4 1983009808
        %v1622 = vunpack.c.0.s8 %v1621
        %v1623 = vlaneseq
        %v1624 = vshrl.u32 %v1623, 7
        %v1625 = vsub.s32 %v1622, %v1624
        %v1626 = vrot.slane %v1612, %v1625
        %v1627 = vcombine.low %v1392, %v1394
        %v1628 = vcombine.high %v1392, %v1394
        %v1630 = vunpack.c.l.s4 1983009808
        %v1631 = vunpack.c.0.s8 %v1630
        %v1632 = vlaneseq
        %v1633 = vshrl.u32 %v1632, 7
        %v1634 = vsub.s32 %v1631, %v1633
        %v1635 = vrot.slane %v1627, %v1634
        %v1637 = vunpack.c.l.s4 1983009808
        %v1638 = vunpack.c.0.s8 %v1637
        %v1639 = vlaneseq
        %v1640 = vshrl.u32 %v1639, 7
        %v1641 = vsub.s32 %v1638, %v1640
        %v1642 = vrot.slane %v1628, %v1641
        %v1643 = vcombine.low %v1587, %v1603
        %v1644 = vcombine.high %v1587, %v1603
        %v1646 = vunpack.c.l.s4 1934713408
        %v1647 = vunpack.c.0.s8 %v1646
        %v1648 = vlaneseq
        %v1649 = vshrl.u32 %v1648, 7
        %v1650 = vsub.s32 %v1647, %v1649
        %v1651 = vrot.slane %v1643, %v1650
        %v1653 = vunpack.c.l.s4 1934713408
        %v1654 = vunpack.c.0.s8 %v1653
        %v1655 = vlaneseq
        %v1656 = vshrl.u32 %v1655, 7
        %v1657 = vsub.s32 %v1654, %v1656
        %v1658 = vrot.slane %v1644, %v1657
        %v1659 = vcombine.low %v1594, %v1610
        %v1660 = vcombine.high %v1594, %v1610
        %v1662 = vunpack.c.l.s4 1934713408
        %v1663 = vunpack.c.0.s8 %v1662
        %v1664 = vlaneseq
        %v1665 = vshrl.u32 %v1664, 7
        %v1666 = vsub.s32 %v1663, %v1665
        %v1667 = vrot.slane %v1659, %v1666
        %v1669 = vunpack.c.l.s4 1934713408
        %v1670 = vunpack.c.0.s8 %v1669
        %v1671 = vlaneseq
        %v1672 = vshrl.u32 %v1671, 7
        %v1673 = vsub.s32 %v1670, %v1672
        %v1674 = vrot.slane %v1660, %v1673
        %v1675 = vcombine.low %v1619, %v1635
        %v1676 = vcombine.high %v1619, %v1635
        %v1678 = vunpack.c.l.s4 1934713408
        %v1679 = vunpack.c.0.s8 %v1678
        %v1680 = vlaneseq
        %v1681 = vshrl.u32 %v1680, 7
        %v1682 = vsub.s32 %v1679, %v1681
        %v1683 = vrot.slane %v1675, %v1682
        %v1685 = vunpack.c.l.s4 1934713408
        %v1686 = vunpack.c.0.s8 %v1685
        %v1687 = vlaneseq
        %v1688 = vshrl.u32 %v1687, 7
        %v1689 = vsub.s32 %v1686, %v1688
        %v1690 = vrot.slane %v1676, %v1689
        %v1691 = vcombine.low %v1626, %v1642
        %v1692 = vcombine.high %v1626, %v1642
        %v1694 = vunpack.c.l.s4 1934713408
        %v1695 = vunpack.c.0.s8 %v1694
        %v1696 = vlaneseq
        %v1697 = vshrl.u32 %v1696, 7
        %v1698 = vsub.s32 %v1695, %v1697
        %v1699 = vrot.slane %v1691, %v1698
        %v1701 = vunpack.c.l.s4 1934713408
        %v1702 = vunpack.c.0.s8 %v1701
        %v1703 = vlaneseq
        %v1704 = vshrl.u32 %v1703, 7
        %v1705 = vsub.s32 %v1702, %v1704
        %v1706 = vrot.slane %v1692, %v1705
        %v1707 = vcombine.low %v1651, %v1683
        %v1708 = vcombine.high %v1651, %v1683
        %v1709 = vcombine.low %v1658, %v1690
        %v1710 = vcombine.high %v1658, %v1690
        %v1711 = vcombine.low %v1667, %v1699
        %v1712 = vcombine.high %v1667, %v1699
        %v1713 = vcombine.low %v1674, %v1706
        %v1714 = vcombine.high %v1674, %v1706
        %v1715 = vcombine.low %v1395, %v1397
        %v1716 = vcombine.high %v1395, %v1397
        %v1718 = vunpack.c.l.s4 1983009808
        %v1719 = vunpack.c.0.s8 %v1718
        %v1720 = vlaneseq
        %v1721 = vshrl.u32 %v1720, 7
        %v1722 = vsub.s32 %v1719, %v1721
        %v1723 = vrot.slane %v1715, %v1722
        %v1725 = vunpack.c.l.s4 1983009808
        %v1726 = vunpack.c.0.s8 %v1725
        %v1727 = vlaneseq
        %v1728 = vshrl.u32 %v1727, 7
        %v1729 = vsub.s32 %v1726, %v1728
        %v1730 = vrot.slane %v1716, %v1729
        %v1731 = vcombine.low %v1396, %v1398
        %v1732 = vcombine.high %v1396, %v1398
        %v1734 = vunpack.c.l.s4 1983009808
        %v1735 = vunpack.c.0.s8 %v1734
        %v1736 = vlaneseq
        %v1737 = vshrl.u32 %v1736, 7
        %v1738 = vsub.s32 %v1735, %v1737
        %v1739 = vrot.slane %v1731, %v1738
        %v1741 = vunpack.c.l.s4 1983009808
        %v1742 = vunpack.c.0.s8 %v1741
        %v1743 = vlaneseq
        %v1744 = vshrl.u32 %v1743, 7
        %v1745 = vsub.s32 %v1742, %v1744
        %v1746 = vrot.slane %v1732, %v1745
        %v1747 = vcombine.low %v1399, %v1401
        %v1748 = vcombine.high %v1399, %v1401
        %v1750 = vunpack.c.l.s4 1983009808
        %v1751 = vunpack.c.0.s8 %v1750
        %v1752 = vlaneseq
        %v1753 = vshrl.u32 %v1752, 7
        %v1754 = vsub.s32 %v1751, %v1753
        %v1755 = vrot.slane %v1747, %v1754
        %v1757 = vunpack.c.l.s4 1983009808
        %v1758 = vunpack.c.0.s8 %v1757
        %v1759 = vlaneseq
        %v1760 = vshrl.u32 %v1759, 7
        %v1761 = vsub.s32 %v1758, %v1760
        %v1762 = vrot.slane %v1748, %v1761
        %v1763 = vcombine.low %v1400, %v1402
        %v1764 = vcombine.high %v1400, %v1402
        %v1766 = vunpack.c.l.s4 1983009808
        %v1767 = vunpack.c.0.s8 %v1766
        %v1768 = vlaneseq
        %v1769 = vshrl.u32 %v1768, 7
        %v1770 = vsub.s32 %v1767, %v1769
        %v1771 = vrot.slane %v1763, %v1770
        %v1773 = vunpack.c.l.s4 1983009808
        %v1774 = vunpack.c.0.s8 %v1773
        %v1775 = vlaneseq
        %v1776 = vshrl.u32 %v1775, 7
        %v1777 = vsub.s32 %v1774, %v1776
        %v1778 = vrot.slane %v1764, %v1777
        %v1779 = vcombine.low %v1723, %v1739
        %v1780 = vcombine.high %v1723, %v1739
        %v1782 = vunpack.c.l.s4 1934713408
        %v1783 = vunpack.c.0.s8 %v1782
        %v1784 = vlaneseq
        %v1785 = vshrl.u32 %v1784, 7
        %v1786 = vsub.s32 %v1783, %v1785
        %v1787 = vrot.slane %v1779, %v1786
        %v1789 = vunpack.c.l.s4 1934713408
        %v1790 = vunpack.c.0.s8 %v1789
        %v1791 = vlaneseq
        %v1792 = vshrl.u32 %v1791, 7
        %v1793 = vsub.s32 %v1790, %v1792
        %v1794 = vrot.slane %v1780, %v1793
        %v1795 = vcombine.low %v1730, %v1746
        %v1796 = vcombine.high %v1730, %v1746
        %v1798 = vunpack.c.l.s4 1934713408
        %v1799 = vunpack.c.0.s8 %v1798
        %v1800 = vlaneseq
        %v1801 = vshrl.u32 %v1800, 7
        %v1802 = vsub.s32 %v1799, %v1801
        %v1803 = vrot.slane %v1795, %v1802
        %v1805 = vunpack.c.l.s4 1934713408
        %v1806 = vunpack.c.0.s8 %v1805
        %v1807 = vlaneseq
        %v1808 = vshrl.u32 %v1807, 7
        %v1809 = vsub.s32 %v1806, %v1808
        %v1810 = vrot.slane %v1796, %v1809
        %v1811 = vcombine.low %v1755, %v1771
        %v1812 = vcombine.high %v1755, %v1771
        %v1814 = vunpack.c.l.s4 1934713408
        %v1815 = vunpack.c.0.s8 %v1814
        %v1816 = vlaneseq
        %v1817 = vshrl.u32 %v1816, 7
        %v1818 = vsub.s32 %v1815, %v1817
        %v1819 = vrot.slane %v1811, %v1818
        %v1821 = vunpack.c.l.s4 1934713408
        %v1822 = vunpack.c.0.s8 %v1821
        %v1823 = vlaneseq
        %v1824 = vshrl.u32 %v1823, 7
        %v1825 = vsub.s32 %v1822, %v1824
        %v1826 = vrot.slane %v1812, %v1825
        %v1827 = vcombine.low %v1762, %v1778
        %v1828 = vcombine.high %v1762, %v1778
        %v1830 = vunpack.c.l.s4 1934713408
        %v1831 = vunpack.c.0.s8 %v1830
        %v1832 = vlaneseq
        %v1833 = vshrl.u32 %v1832, 7
        %v1834 = vsub.s32 %v1831, %v1833
        %v1835 = vrot.slane %v1827, %v1834
        %v1837 = vunpack.c.l.s4 1934713408
        %v1838 = vunpack.c.0.s8 %v1837
        %v1839 = vlaneseq
        %v1840 = vshrl.u32 %v1839, 7
        %v1841 = vsub.s32 %v1838, %v1840
        %v1842 = vrot.slane %v1828, %v1841
        %v1843 = vcombine.low %v1787, %v1819
        %v1844 = vcombine.high %v1787, %v1819
        %v1845 = vcombine.low %v1794, %v1826
        %v1846 = vcombine.high %v1794, %v1826
        %v1847 = vcombine.low %v1803, %v1835
        %v1848 = vcombine.high %v1803, %v1835
        %v1849 = vcombine.low %v1810, %v1842
        %v1850 = vcombine.high %v1810, %v1842
        %v1851 = vcombine.low %v1403, %v1405
        %v1852 = vcombine.high %v1403, %v1405
        %v1854 = vunpack.c.l.s4 1983009808
        %v1855 = vunpack.c.0.s8 %v1854
        %v1856 = vlaneseq
        %v1857 = vshrl.u32 %v1856, 7
        %v1858 = vsub.s32 %v1855, %v1857
        %v1859 = vrot.slane %v1851, %v1858
        %v1861 = vunpack.c.l.s4 1983009808
        %v1862 = vunpack.c.0.s8 %v1861
        %v1863 = vlaneseq
        %v1864 = vshrl.u32 %v1863, 7
        %v1865 = vsub.s32 %v1862, %v1864
        %v1866 = vrot.slane %v1852, %v1865
        %v1867 = vcombine.low %v1404, %v1406
        %v1868 = vcombine.high %v1404, %v1406
        %v1870 = vunpack.c.l.s4 1983009808
        %v1871 = vunpack.c.0.s8 %v1870
        %v1872 = vlaneseq
        %v1873 = vshrl.u32 %v1872, 7
        %v1874 = vsub.s32 %v1871, %v1873
        %v1875 = vrot.slane %v1867, %v1874
        %v1877 = vunpack.c.l.s4 1983009808
        %v1878 = vunpack.c.0.s8 %v1877
        %v1879 = vlaneseq
        %v1880 = vshrl.u32 %v1879, 7
        %v1881 = vsub.s32 %v1878, %v1880
        %v1882 = vrot.slane %v1868, %v1881
        %v1883 = vcombine.low %v1407, %v1409
        %v1884 = vcombine.high %v1407, %v1409
        %v1886 = vunpack.c.l.s4 1983009808
        %v1887 = vunpack.c.0.s8 %v1886
        %v1888 = vlaneseq
        %v1889 = vshrl.u32 %v1888, 7
        %v1890 = vsub.s32 %v1887, %v1889
        %v1891 = vrot.slane %v1883, %v1890
        %v1893 = vunpack.c.l.s4 1983009808
        %v1894 = vunpack.c.0.s8 %v1893
        %v1895 = vlaneseq
        %v1896 = vshrl.u32 %v1895, 7
        %v1897 = vsub.s32 %v1894, %v1896
        %v1898 = vrot.slane %v1884, %v1897
        %v1899 = vcombine.low %v1408, %v1410
        %v1900 = vcombine.high %v1408, %v1410
        %v1902 = vunpack.c.l.s4 1983009808
        %v1903 = vunpack.c.0.s8 %v1902
        %v1904 = vlaneseq
        %v1905 = vshrl.u32 %v1904, 7
        %v1906 = vsub.s32 %v1903, %v1905
        %v1907 = vrot.slane %v1899, %v1906
        %v1909 = vunpack.c.l.s4 1983009808
        %v1910 = vunpack.c.0.s8 %v1909
        %v1911 = vlaneseq
        %v1912 = vshrl.u32 %v1911, 7
        %v1913 = vsub.s32 %v1910, %v1912
        %v1914 = vrot.slane %v1900, %v1913
        %v1915 = vcombine.low %v1859, %v1875
        %v1916 = vcombine.high %v1859, %v1875
        %v1918 = vunpack.c.l.s4 1934713408
        %v1919 = vunpack.c.0.s8 %v1918
        %v1920 = vlaneseq
        %v1921 = vshrl.u32 %v1920, 7
        %v1922 = vsub.s32 %v1919, %v1921
        %v1923 = vrot.slane %v1915, %v1922
        %v1925 = vunpack.c.l.s4 1934713408
        %v1926 = vunpack.c.0.s8 %v1925
        %v1927 = vlaneseq
        %v1928 = vshrl.u32 %v1927, 7
        %v1929 = vsub.s32 %v1926, %v1928
        %v1930 = vrot.slane %v1916, %v1929
        %v1931 = vcombine.low %v1866, %v1882
        %v1932 = vcombine.high %v1866, %v1882
        %v1934 = vunpack.c.l.s4 1934713408
        %v1935 = vunpack.c.0.s8 %v1934
        %v1936 = vlaneseq
        %v1937 = vshrl.u32 %v1936, 7
        %v1938 = vsub.s32 %v1935, %v1937
        %v1939 = vrot.slane %v1931, %v1938
        %v1941 = vunpack.c.l.s4 1934713408
        %v1942 = vunpack.c.0.s8 %v1941
        %v1943 = vlaneseq
        %v1944 = vshrl.u32 %v1943, 7
        %v1945 = vsub.s32 %v1942, %v1944
        %v1946 = vrot.slane %v1932, %v1945
        %v1947 = vcombine.low %v1891, %v1907
        %v1948 = vcombine.high %v1891, %v1907
        %v1950 = vunpack.c.l.s4 1934713408
        %v1951 = vunpack.c.0.s8 %v1950
        %v1952 = vlaneseq
        %v1953 = vshrl.u32 %v1952, 7
        %v1954 = vsub.s32 %v1951, %v1953
        %v1955 = vrot.slane %v1947, %v1954
        %v1957 = vunpack.c.l.s4 1934713408
        %v1958 = vunpack.c.0.s8 %v1957
        %v1959 = vlaneseq
        %v1960 = vshrl.u32 %v1959, 7
        %v1961 = vsub.s32 %v1958, %v1960
        %v1962 = vrot.slane %v1948, %v1961
        %v1963 = vcombine.low %v1898, %v1914
        %v1964 = vcombine.high %v1898, %v1914
        %v1966 = vunpack.c.l.s4 1934713408
        %v1967 = vunpack.c.0.s8 %v1966
        %v1968 = vlaneseq
        %v1969 = vshrl.u32 %v1968, 7
        %v1970 = vsub.s32 %v1967, %v1969
        %v1971 = vrot.slane %v1963, %v1970
        %v1973 = vunpack.c.l.s4 1934713408
        %v1974 = vunpack.c.0.s8 %v1973
        %v1975 = vlaneseq
        %v1976 = vshrl.u32 %v1975, 7
        %v1977 = vsub.s32 %v1974, %v1976
        %v1978 = vrot.slane %v1964, %v1977
        %v1979 = vcombine.low %v1923, %v1955
        %v1980 = vcombine.high %v1923, %v1955
        %v1981 = vcombine.low %v1930, %v1962
        %v1982 = vcombine.high %v1930, %v1962
        %v1983 = vcombine.low %v1939, %v1971
        %v1984 = vcombine.high %v1939, %v1971
        %v1985 = vcombine.low %v1946, %v1978
        %v1986 = vcombine.high %v1946, %v1978
        %v1987 = vcombine.low %v1411, %v1413
        %v1988 = vcombine.high %v1411, %v1413
        %v1990 = vunpack.c.l.s4 1983009808
        %v1991 = vunpack.c.0.s8 %v1990
        %v1992 = vlaneseq
        %v1993 = vshrl.u32 %v1992, 7
        %v1994 = vsub.s32 %v1991, %v1993
        %v1995 = vrot.slane %v1987, %v1994
        %v1997 = vunpack.c.l.s4 1983009808
        %v1998 = vunpack.c.0.s8 %v1997
        %v1999 = vlaneseq
        %v2000 = vshrl.u32 %v1999, 7
        %v2001 = vsub.s32 %v1998, %v2000
        %v2002 = vrot.slane %v1988, %v2001
        %v2003 = vcombine.low %v1412, %v1414
        %v2004 = vcombine.high %v1412, %v1414
        %v2006 = vunpack.c.l.s4 1983009808
        %v2007 = vunpack.c.0.s8 %v2006
        %v2008 = vlaneseq
        %v2009 = vshrl.u32 %v2008, 7
        %v2010 = vsub.s32 %v2007, %v2009
        %v2011 = vrot.slane %v2003, %v2010
        %v2013 = vunpack.c.l.s4 1983009808
        %v2014 = vunpack.c.0.s8 %v2013
        %v2015 = vlaneseq
        %v2016 = vshrl.u32 %v2015, 7
        %v2017 = vsub.s32 %v2014, %v2016
        %v2018 = vrot.slane %v2004, %v2017
        %v2019 = vcombine.low %v1415, %v1417
        %v2020 = vcombine.high %v1415, %v1417
        %v2022 = vunpack.c.l.s4 1983009808
        %v2023 = vunpack.c.0.s8 %v2022
        %v2024 = vlaneseq
        %v2025 = vshrl.u32 %v2024, 7
        %v2026 = vsub.s32 %v2023, %v2025
        %v2027 = vrot.slane %v2019, %v2026
        %v2029 = vunpack.c.l.s4 1983009808
        %v2030 = vunpack.c.0.s8 %v2029
        %v2031 = vlaneseq
        %v2032 = vshrl.u32 %v2031, 7
        %v2033 = vsub.s32 %v2030, %v2032
        %v2034 = vrot.slane %v2020, %v2033
        %v2035 = vcombine.low %v1416, %v1418
        %v2036 = vcombine.high %v1416, %v1418
        %v2038 = vunpack.c.l.s4 1983009808
        %v2039 = vunpack.c.0.s8 %v2038
        %v2040 = vlaneseq
        %v2041 = vshrl.u32 %v2040, 7
        %v2042 = vsub.s32 %v2039, %v2041
        %v2043 = vrot.slane %v2035, %v2042
        %v2045 = vunpack.c.l.s4 1983009808
        %v2046 = vunpack.c.0.s8 %v2045
        %v2047 = vlaneseq
        %v2048 = vshrl.u32 %v2047, 7
        %v2049 = vsub.s32 %v2046, %v2048
        %v2050 = vrot.slane %v2036, %v2049
        %v2051 = vcombine.low %v1995, %v2011
        %v2052 = vcombine.high %v1995, %v2011
        %v2054 = vunpack.c.l.s4 1934713408
        %v2055 = vunpack.c.0.s8 %v2054
        %v2056 = vlaneseq
        %v2057 = vshrl.u32 %v2056, 7
        %v2058 = vsub.s32 %v2055, %v2057
        %v2059 = vrot.slane %v2051, %v2058
        %v2061 = vunpack.c.l.s4 1934713408
        %v2062 = vunpack.c.0.s8 %v2061
        %v2063 = vlaneseq
        %v2064 = vshrl.u32 %v2063, 7
        %v2065 = vsub.s32 %v2062, %v2064
        %v2066 = vrot.slane %v2052, %v2065
        %v2067 = vcombine.low %v2002, %v2018
        %v2068 = vcombine.high %v2002, %v2018
        %v2070 = vunpack.c.l.s4 1934713408
        %v2071 = vunpack.c.0.s8 %v2070
        %v2072 = vlaneseq
        %v2073 = vshrl.u32 %v2072, 7
        %v2074 = vsub.s32 %v2071, %v2073
        %v2075 = vrot.slane %v2067, %v2074
        %v2077 = vunpack.c.l.s4 1934713408
        %v2078 = vunpack.c.0.s8 %v2077
        %v2079 = vlaneseq
        %v2080 = vshrl.u32 %v2079, 7
        %v2081 = vsub.s32 %v2078, %v2080
        %v2082 = vrot.slane %v2068, %v2081
        %v2083 = vcombine.low %v2027, %v2043
        %v2084 = vcombine.high %v2027, %v2043
        %v2086 = vunpack.c.l.s4 1934713408
        %v2087 = vunpack.c.0.s8 %v2086
        %v2088 = vlaneseq
        %v2089 = vshrl.u32 %v2088, 7
        %v2090 = vsub.s32 %v2087, %v2089
        %v2091 = vrot.slane %v2083, %v2090
        %v2093 = vunpack.c.l.s4 1934713408
        %v2094 = vunpack.c.0.s8 %v2093
        %v2095 = vlaneseq
        %v2096 = vshrl.u32 %v2095, 7
        %v2097 = vsub.s32 %v2094, %v2096
        %v2098 = vrot.slane %v2084, %v2097
        %v2099 = vcombine.low %v2034, %v2050
        %v2100 = vcombine.high %v2034, %v2050
        %v2102 = vunpack.c.l.s4 1934713408
        %v2103 = vunpack.c.0.s8 %v2102
        %v2104 = vlaneseq
        %v2105 = vshrl.u32 %v2104, 7
        %v2106 = vsub.s32 %v2103, %v2105
        %v2107 = vrot.slane %v2099, %v2106
        %v2109 = vunpack.c.l.s4 1934713408
        %v2110 = vunpack.c.0.s8 %v2109
        %v2111 = vlaneseq
        %v2112 = vshrl.u32 %v2111, 7
        %v2113 = vsub.s32 %v2110, %v2112
        %v2114 = vrot.slane %v2100, %v2113
        %v2115 = vcombine.low %v2059, %v2091
        %v2116 = vcombine.high %v2059, %v2091
        %v2117 = vcombine.low %v2066, %v2098
        %v2118 = vcombine.high %v2066, %v2098
        %v2119 = vcombine.low %v2075, %v2107
        %v2120 = vcombine.high %v2075, %v2107
        %v2121 = vcombine.low %v2082, %v2114
        %v2122 = vcombine.high %v2082, %v2114
        %v2123 = vcombine.low %v1419, %v1421
        %v2124 = vcombine.high %v1419, %v1421
        %v2126 = vunpack.c.l.s4 1983009808
        %v2127 = vunpack.c.0.s8 %v2126
        %v2128 = vlaneseq
        %v2129 = vshrl.u32 %v2128, 7
        %v2130 = vsub.s32 %v2127, %v2129
        %v2131 = vrot.slane %v2123, %v2130
        %v2133 = vunpack.c.l.s4 1983009808
        %v2134 = vunpack.c.0.s8 %v2133
        %v2135 = vlaneseq
        %v2136 = vshrl.u32 %v2135, 7
        %v2137 = vsub.s32 %v2134, %v2136
        %v2138 = vrot.slane %v2124, %v2137
        %v2139 = vcombine.low %v1420, %v1422
        %v2140 = vcombine.high %v1420, %v1422
        %v2142 = vunpack.c.l.s4 1983009808
        %v2143 = vunpack.c.0.s8 %v2142
        %v2144 = vlaneseq
        %v2145 = vshrl.u32 %v2144, 7
        %v2146 = vsub.s32 %v2143, %v2145
        %v2147 = vrot.slane %v2139, %v2146
        %v2149 = vunpack.c.l.s4 1983009808
        %v2150 = vunpack.c.0.s8 %v2149
        %v2151 = vlaneseq
        %v2152 = vshrl.u32 %v2151, 7
        %v2153 = vsub.s32 %v2150, %v2152
        %v2154 = vrot.slane %v2140, %v2153
        %v2155 = vcombine.low %v1423, %v1425
        %v2156 = vcombine.high %v1423, %v1425
        %v2158 = vunpack.c.l.s4 1983009808
        %v2159 = vunpack.c.0.s8 %v2158
        %v2160 = vlaneseq
        %v2161 = vshrl.u32 %v2160, 7
        %v2162 = vsub.s32 %v2159, %v2161
        %v2163 = vrot.slane %v2155, %v2162
        %v2165 = vunpack.c.l.s4 1983009808
        %v2166 = vunpack.c.0.s8 %v2165
        %v2167 = vlaneseq
        %v2168 = vshrl.u32 %v2167, 7
        %v2169 = vsub.s32 %v2166, %v2168
        %v2170 = vrot.slane %v2156, %v2169
        %v2171 = vcombine.low %v1424, %v1426
        %v2172 = vcombine.high %v1424, %v1426
        %v2174 = vunpack.c.l.s4 1983009808
        %v2175 = vunpack.c.0.s8 %v2174
        %v2176 = vlaneseq
        %v2177 = vshrl.u32 %v2176, 7
        %v2178 = vsub.s32 %v2175, %v2177
        %v2179 = vrot.slane %v2171, %v2178
        %v2181 = vunpack.c.l.s4 1983009808
        %v2182 = vunpack.c.0.s8 %v2181
        %v2183 = vlaneseq
        %v2184 = vshrl.u32 %v2183, 7
        %v2185 = vsub.s32 %v2182, %v2184
        %v2186 = vrot.slane %v2172, %v2185
        %v2187 = vcombine.low %v2131, %v2147
        %v2188 = vcombine.high %v2131, %v2147
        %v2190 = vunpack.c.l.s4 1934713408
        %v2191 = vunpack.c.0.s8 %v2190
        %v2192 = vlaneseq
        %v2193 = vshrl.u32 %v2192, 7
        %v2194 = vsub.s32 %v2191, %v2193
        %v2195 = vrot.slane %v2187, %v2194
        %v2197 = vunpack.c.l.s4 1934713408
        %v2198 = vunpack.c.0.s8 %v2197
        %v2199 = vlaneseq
        %v2200 = vshrl.u32 %v2199, 7
        %v2201 = vsub.s32 %v2198, %v2200
        %v2202 = vrot.slane %v2188, %v2201
        %v2203 = vcombine.low %v2138, %v2154
        %v2204 = vcombine.high %v2138, %v2154
        %v2206 = vunpack.c.l.s4 1934713408
        %v2207 = vunpack.c.0.s8 %v2206
        %v2208 = vlaneseq
        %v2209 = vshrl.u32 %v2208, 7
        %v2210 = vsub.s32 %v2207, %v2209
        %v2211 = vrot.slane %v2203, %v2210
        %v2213 = vunpack.c.l.s4 1934713408
        %v2214 = vunpack.c.0.s8 %v2213
        %v2215 = vlaneseq
        %v2216 = vshrl.u32 %v2215, 7
        %v2217 = vsub.s32 %v2214, %v2216
        %v2218 = vrot.slane %v2204, %v2217
        %v2219 = vcombine.low %v2163, %v2179
        %v2220 = vcombine.high %v2163, %v2179
        %v2222 = vunpack.c.l.s4 1934713408
        %v2223 = vunpack.c.0.s8 %v2222
        %v2224 = vlaneseq
        %v2225 = vshrl.u32 %v2224, 7
        %v2226 = vsub.s32 %v2223, %v2225
        %v2227 = vrot.slane %v2219, %v2226
        %v2229 = vunpack.c.l.s4 1934713408
        %v2230 = vunpack.c.0.s8 %v2229
        %v2231 = vlaneseq
        %v2232 = vshrl.u32 %v2231, 7
        %v2233 = vsub.s32 %v2230, %v2232
        %v2234 = vrot.slane %v2220, %v2233
        %v2235 = vcombine.low %v2170, %v2186
        %v2236 = vcombine.high %v2170, %v2186
        %v2238 = vunpack.c.l.s4 1934713408
        %v2239 = vunpack.c.0.s8 %v2238
        %v2240 = vlaneseq
        %v2241 = vshrl.u32 %v2240, 7
        %v2242 = vsub.s32 %v2239, %v2241
        %v2243 = vrot.slane %v2235, %v2242
        %v2245 = vunpack.c.l.s4 1934713408
        %v2246 = vunpack.c.0.s8 %v2245
        %v2247 = vlaneseq
        %v2248 = vshrl.u32 %v2247, 7
        %v2249 = vsub.s32 %v2246, %v2248
        %v2250 = vrot.slane %v2236, %v2249
        %v2251 = vcombine.low %v2195, %v2227
        %v2252 = vcombine.high %v2195, %v2227
        %v2253 = vcombine.low %v2202, %v2234
        %v2254 = vcombine.high %v2202, %v2234
        %v2255 = vcombine.low %v2211, %v2243
        %v2256 = vcombine.high %v2211, %v2243
        %v2257 = vcombine.low %v2218, %v2250
        %v2258 = vcombine.high %v2218, %v2250
        %v2259 = vcombine.low %v1427, %v1429
        %v2260 = vcombine.high %v1427, %v1429
        %v2262 = vunpack.c.l.s4 1983009808
        %v2263 = vunpack.c.0.s8 %v2262
        %v2264 = vlaneseq
        %v2265 = vshrl.u32 %v2264, 7
        %v2266 = vsub.s32 %v2263, %v2265
        %v2267 = vrot.slane %v2259, %v2266
        %v2269 = vunpack.c.l.s4 1983009808
        %v2270 = vunpack.c.0.s8 %v2269
        %v2271 = vlaneseq
        %v2272 = vshrl.u32 %v2271, 7
        %v2273 = vsub.s32 %v2270, %v2272
        %v2274 = vrot.slane %v2260, %v2273
        %v2275 = vcombine.low %v1428, %v1430
        %v2276 = vcombine.high %v1428, %v1430
        %v2278 = vunpack.c.l.s4 1983009808
        %v2279 = vunpack.c.0.s8 %v2278
        %v2280 = vlaneseq
        %v2281 = vshrl.u32 %v2280, 7
        %v2282 = vsub.s32 %v2279, %v2281
        %v2283 = vrot.slane %v2275, %v2282
        %v2285 = vunpack.c.l.s4 1983009808
        %v2286 = vunpack.c.0.s8 %v2285
        %v2287 = vlaneseq
        %v2288 = vshrl.u32 %v2287, 7
        %v2289 = vsub.s32 %v2286, %v2288
        %v2290 = vrot.slane %v2276, %v2289
        %v2291 = vcombine.low %v1431, %v1433
        %v2292 = vcombine.high %v1431, %v1433
        %v2294 = vunpack.c.l.s4 1983009808
        %v2295 = vunpack.c.0.s8 %v2294
        %v2296 = vlaneseq
        %v2297 = vshrl.u32 %v2296, 7
        %v2298 = vsub.s32 %v2295, %v2297
        %v2299 = vrot.slane %v2291, %v2298
        %v2301 = vunpack.c.l.s4 1983009808
        %v2302 = vunpack.c.0.s8 %v2301
        %v2303 = vlaneseq
        %v2304 = vshrl.u32 %v2303, 7
        %v2305 = vsub.s32 %v2302, %v2304
        %v2306 = vrot.slane %v2292, %v2305
        %v2307 = vcombine.low %v1432, %v1434
        %v2308 = vcombine.high %v1432, %v1434
        %v2310 = vunpack.c.l.s4 1983009808
        %v2311 = vunpack.c.0.s8 %v2310
        %v2312 = vlaneseq
        %v2313 = vshrl.u32 %v2312, 7
        %v2314 = vsub.s32 %v2311, %v2313
        %v2315 = vrot.slane %v2307, %v2314
        %v2317 = vunpack.c.l.s4 1983009808
        %v2318 = vunpack.c.0.s8 %v2317
        %v2319 = vlaneseq
        %v2320 = vshrl.u32 %v2319, 7
        %v2321 = vsub.s32 %v2318, %v2320
        %v2322 = vrot.slane %v2308, %v2321
        %v2323 = vcombine.low %v2267, %v2283
        %v2324 = vcombine.high %v2267, %v2283
        %v2326 = vunpack.c.l.s4 1934713408
        %v2327 = vunpack.c.0.s8 %v2326
        %v2328 = vlaneseq
        %v2329 = vshrl.u32 %v2328, 7
        %v2330 = vsub.s32 %v2327, %v2329
        %v2331 = vrot.slane %v2323, %v2330
        %v2333 = vunpack.c.l.s4 1934713408
        %v2334 = vunpack.c.0.s8 %v2333
        %v2335 = vlaneseq
        %v2336 = vshrl.u32 %v2335, 7
        %v2337 = vsub.s32 %v2334, %v2336
        %v2338 = vrot.slane %v2324, %v2337
        %v2339 = vcombine.low %v2274, %v2290
        %v2340 = vcombine.high %v2274, %v2290
        %v2342 = vunpack.c.l.s4 1934713408
        %v2343 = vunpack.c.0.s8 %v2342
        %v2344 = vlaneseq
        %v2345 = vshrl.u32 %v2344, 7
        %v2346 = vsub.s32 %v2343, %v2345
        %v2347 = vrot.slane %v2339, %v2346
        %v2349 = vunpack.c.l.s4 1934713408
        %v2350 = vunpack.c.0.s8 %v2349
        %v2351 = vlaneseq
        %v2352 = vshrl.u32 %v2351, 7
        %v2353 = vsub.s32 %v2350, %v2352
        %v2354 = vrot.slane %v2340, %v2353
        %v2355 = vcombine.low %v2299, %v2315
        %v2356 = vcombine.high %v2299, %v2315
        %v2358 = vunpack.c.l.s4 1934713408
        %v2359 = vunpack.c.0.s8 %v2358
        %v2360 = vlaneseq
        %v2361 = vshrl.u32 %v2360, 7
        %v2362 = vsub.s32 %v2359, %v2361
        %v2363 = vrot.slane %v2355, %v2362
        %v2365 = vunpack.c.l.s4 1934713408
        %v2366 = vunpack.c.0.s8 %v2365
        %v2367 = vlaneseq
        %v2368 = vshrl.u32 %v2367, 7
        %v2369 = vsub.s32 %v2366, %v2368
        %v2370 = vrot.slane %v2356, %v2369
        %v2371 = vcombine.low %v2306, %v2322
        %v2372 = vcombine.high %v2306, %v2322
        %v2374 = vunpack.c.l.s4 1934713408
        %v2375 = vunpack.c.0.s8 %v2374
        %v2376 = vlaneseq
        %v2377 = vshrl.u32 %v2376, 7
        %v2378 = vsub.s32 %v2375, %v2377
        %v2379 = vrot.slane %v2371, %v2378
        %v2381 = vunpack.c.l.s4 1934713408
        %v2382 = vunpack.c.0.s8 %v2381
        %v2383 = vlaneseq
        %v2384 = vshrl.u32 %v2383, 7
        %v2385 = vsub.s32 %v2382, %v2384
        %v2386 = vrot.slane %v2372, %v2385
        %v2387 = vcombine.low %v2331, %v2363
        %v2388 = vcombine.high %v2331, %v2363
        %v2389 = vcombine.low %v2338, %v2370
        %v2390 = vcombine.high %v2338, %v2370
        %v2391 = vcombine.low %v2347, %v2379
        %v2392 = vcombine.high %v2347, %v2379
        %v2393 = vcombine.low %v2354, %v2386
        %v2394 = vcombine.high %v2354, %v2386
        %v2395 = vcombine.low %v1435, %v1437
        %v2396 = vcombine.high %v1435, %v1437
        %v2398 = vunpack.c.l.s4 1983009808
        %v2399 = vunpack.c.0.s8 %v2398
        %v2400 = vlaneseq
        %v2401 = vshrl.u32 %v2400, 7
        %v2402 = vsub.s32 %v2399, %v2401
        %v2403 = vrot.slane %v2395, %v2402
        %v2405 = vunpack.c.l.s4 1983009808
        %v2406 = vunpack.c.0.s8 %v2405
        %v2407 = vlaneseq
        %v2408 = vshrl.u32 %v2407, 7
        %v2409 = vsub.s32 %v2406, %v2408
        %v2410 = vrot.slane %v2396, %v2409
        %v2411 = vcombine.low %v1436, %v1438
        %v2412 = vcombine.high %v1436, %v1438
        %v2414 = vunpack.c.l.s4 1983009808
        %v2415 = vunpack.c.0.s8 %v2414
        %v2416 = vlaneseq
        %v2417 = vshrl.u32 %v2416, 7
        %v2418 = vsub.s32 %v2415, %v2417
        %v2419 = vrot.slane %v2411, %v2418
        %v2421 = vunpack.c.l.s4 1983009808
        %v2422 = vunpack.c.0.s8 %v2421
        %v2423 = vlaneseq
        %v2424 = vshrl.u32 %v2423, 7
        %v2425 = vsub.s32 %v2422, %v2424
        %v2426 = vrot.slane %v2412, %v2425
        %v2427 = vcombine.low %v1439, %v1441
        %v2428 = vcombine.high %v1439, %v1441
        %v2430 = vunpack.c.l.s4 1983009808
        %v2431 = vunpack.c.0.s8 %v2430
        %v2432 = vlaneseq
        %v2433 = vshrl.u32 %v2432, 7
        %v2434 = vsub.s32 %v2431, %v2433
        %v2435 = vrot.slane %v2427, %v2434
        %v2437 = vunpack.c.l.s4 1983009808
        %v2438 = vunpack.c.0.s8 %v2437
        %v2439 = vlaneseq
        %v2440 = vshrl.u32 %v2439, 7
        %v2441 = vsub.s32 %v2438, %v2440
        %v2442 = vrot.slane %v2428, %v2441
        %v2443 = vcombine.low %v1440, %v1442
        %v2444 = vcombine.high %v1440, %v1442
        %v2446 = vunpack.c.l.s4 1983009808
        %v2447 = vunpack.c.0.s8 %v2446
        %v2448 = vlaneseq
        %v2449 = vshrl.u32 %v2448, 7
        %v2450 = vsub.s32 %v2447, %v2449
        %v2451 = vrot.slane %v2443, %v2450
        %v2453 = vunpack.c.l.s4 1983009808
        %v2454 = vunpack.c.0.s8 %v2453
        %v2455 = vlaneseq
        %v2456 = vshrl.u32 %v2455, 7
        %v2457 = vsub.s32 %v2454, %v2456
        %v2458 = vrot.slane %v2444, %v2457
        %v2459 = vcombine.low %v2403, %v2419
        %v2460 = vcombine.high %v2403, %v2419
        %v2462 = vunpack.c.l.s4 1934713408
        %v2463 = vunpack.c.0.s8 %v2462
        %v2464 = vlaneseq
        %v2465 = vshrl.u32 %v2464, 7
        %v2466 = vsub.s32 %v2463, %v2465
        %v2467 = vrot.slane %v2459, %v2466
        %v2469 = vunpack.c.l.s4 1934713408
        %v2470 = vunpack.c.0.s8 %v2469
        %v2471 = vlaneseq
        %v2472 = vshrl.u32 %v2471, 7
        %v2473 = vsub.s32 %v2470, %v2472
        %v2474 = vrot.slane %v2460, %v2473
        %v2475 = vcombine.low %v2410, %v2426
        %v2476 = vcombine.high %v2410, %v2426
        %v2478 = vunpack.c.l.s4 1934713408
        %v2479 = vunpack.c.0.s8 %v2478
        %v2480 = vlaneseq
        %v2481 = vshrl.u32 %v2480, 7
        %v2482 = vsub.s32 %v2479, %v2481
        %v2483 = vrot.slane %v2475, %v2482
        %v2485 = vunpack.c.l.s4 1934713408
        %v2486 = vunpack.c.0.s8 %v2485
        %v2487 = vlaneseq
        %v2488 = vshrl.u32 %v2487, 7
        %v2489 = vsub.s32 %v2486, %v2488
        %v2490 = vrot.slane %v2476, %v2489
        %v2491 = vcombine.low %v2435, %v2451
        %v2492 = vcombine.high %v2435, %v2451
        %v2494 = vunpack.c.l.s4 1934713408
        %v2495 = vunpack.c.0.s8 %v2494
        %v2496 = vlaneseq
        %v2497 = vshrl.u32 %v2496, 7
        %v2498 = vsub.s32 %v2495, %v2497
        %v2499 = vrot.slane %v2491, %v2498
        %v2501 = vunpack.c.l.s4 1934713408
        %v2502 = vunpack.c.0.s8 %v2501
        %v2503 = vlaneseq
        %v2504 = vshrl.u32 %v2503, 7
        %v2505 = vsub.s32 %v2502, %v2504
        %v2506 = vrot.slane %v2492, %v2505
        %v2507 = vcombine.low %v2442, %v2458
        %v2508 = vcombine.high %v2442, %v2458
        %v2510 = vunpack.c.l.s4 1934713408
        %v2511 = vunpack.c.0.s8 %v2510
        %v2512 = vlaneseq
        %v2513 = vshrl.u32 %v2512, 7
        %v2514 = vsub.s32 %v2511, %v2513
        %v2515 = vrot.slane %v2507, %v2514
        %v2517 = vunpack.c.l.s4 1934713408
        %v2518 = vunpack.c.0.s8 %v2517
        %v2519 = vlaneseq
        %v2520 = vshrl.u32 %v2519, 7
        %v2521 = vsub.s32 %v2518, %v2520
        %v2522 = vrot.slane %v2508, %v2521
        %v2523 = vcombine.low %v2467, %v2499
        %v2524 = vcombine.high %v2467, %v2499
        %v2525 = vcombine.low %v2474, %v2506
        %v2526 = vcombine.high %v2474, %v2506
        %v2527 = vcombine.low %v2483, %v2515
        %v2528 = vcombine.high %v2483, %v2515
        %v2529 = vcombine.low %v2490, %v2522
        %v2530 = vcombine.high %v2490, %v2522
        %2539 = vrot.lane.b32.xlu0 %v1572, 16
        %v2540 = vpop.permute.xlu0 %2539
        %2541 = vrot.lane.b32.xlu0 %v1708, 16
        %v2542 = vpop.permute.xlu0 %2541
        %2543 = vrot.lane.b32.xlu0 %v1844, 16
        %v2544 = vpop.permute.xlu0 %2543
        %2545 = vrot.lane.b32.xlu0 %v1980, 16
        %v2546 = vpop.permute.xlu0 %2545
        %2547 = vrot.lane.b32.xlu0 %v2116, 16
        %v2548 = vpop.permute.xlu0 %2547
        %2549 = vrot.lane.b32.xlu0 %v2252, 16
        %v2550 = vpop.permute.xlu0 %2549
        %2551 = vrot.lane.b32.xlu0 %v2388, 16
        %v2552 = vpop.permute.xlu0 %2551
        %2553 = vrot.lane.b32.xlu0 %v2524, 16
        %v2554 = vpop.permute.xlu0 %2553
        %2571 = vrot.lane.b32.xlu0 %v1573, 32
        %v2572 = vpop.permute.xlu0 %2571
        %2573 = vrot.lane.b32.xlu0 %v1709, 32
        %v2574 = vpop.permute.xlu0 %2573
        %2575 = vrot.lane.b32.xlu0 %v1845, 32
        %v2576 = vpop.permute.xlu0 %2575
        %2577 = vrot.lane.b32.xlu0 %v1981, 32
        %v2578 = vpop.permute.xlu0 %2577
        %2579 = vrot.lane.b32.xlu0 %v2117, 32
        %v2580 = vpop.permute.xlu0 %2579
        %2581 = vrot.lane.b32.xlu0 %v2253, 32
        %v2582 = vpop.permute.xlu0 %2581
        %2583 = vrot.lane.b32.xlu0 %v2389, 32
        %v2584 = vpop.permute.xlu0 %2583
        %2585 = vrot.lane.b32.xlu0 %v2525, 32
        %v2586 = vpop.permute.xlu0 %2585
        %2603 = vrot.lane.b32.xlu0 %v1574, 48
        %v2604 = vpop.permute.xlu0 %2603
        %2605 = vrot.lane.b32.xlu0 %v1710, 48
        %v2606 = vpop.permute.xlu0 %2605
        %2607 = vrot.lane.b32.xlu0 %v1846, 48
        %v2608 = vpop.permute.xlu0 %2607
        %2609 = vrot.lane.b32.xlu0 %v1982, 48
        %v2610 = vpop.permute.xlu0 %2609
        %2611 = vrot.lane.b32.xlu0 %v2118, 48
        %v2612 = vpop.permute.xlu0 %2611
        %2613 = vrot.lane.b32.xlu0 %v2254, 48
        %v2614 = vpop.permute.xlu0 %2613
        %2615 = vrot.lane.b32.xlu0 %v2390, 48
        %v2616 = vpop.permute.xlu0 %2615
        %2617 = vrot.lane.b32.xlu0 %v2526, 48
        %v2618 = vpop.permute.xlu0 %2617
        %2635 = vrot.lane.b32.xlu0 %v1575, 64
        %v2636 = vpop.permute.xlu0 %2635
        %2637 = vrot.lane.b32.xlu0 %v1711, 64
        %v2638 = vpop.permute.xlu0 %2637
        %2639 = vrot.lane.b32.xlu0 %v1847, 64
        %v2640 = vpop.permute.xlu0 %2639
        %2641 = vrot.lane.b32.xlu0 %v1983, 64
        %v2642 = vpop.permute.xlu0 %2641
        %2643 = vrot.lane.b32.xlu0 %v2119, 64
        %v2644 = vpop.permute.xlu0 %2643
        %2645 = vrot.lane.b32.xlu0 %v2255, 64
        %v2646 = vpop.permute.xlu0 %2645
        %2647 = vrot.lane.b32.xlu0 %v2391, 64
        %v2648 = vpop.permute.xlu0 %2647
        %2649 = vrot.lane.b32.xlu0 %v2527, 64
        %v2650 = vpop.permute.xlu0 %2649
        %2667 = vrot.lane.b32.xlu0 %v1576, 80
        %v2668 = vpop.permute.xlu0 %2667
        %2669 = vrot.lane.b32.xlu0 %v1712, 80
        %v2670 = vpop.permute.xlu0 %2669
        %2671 = vrot.lane.b32.xlu0 %v1848, 80
        %v2672 = vpop.permute.xlu0 %2671
        %2673 = vrot.lane.b32.xlu0 %v1984, 80
        %v2674 = vpop.permute.xlu0 %2673
        %2675 = vrot.lane.b32.xlu0 %v2120, 80
        %v2676 = vpop.permute.xlu0 %2675
        %2677 = vrot.lane.b32.xlu0 %v2256, 80
        %v2678 = vpop.permute.xlu0 %2677
        %2679 = vrot.lane.b32.xlu0 %v2392, 80
        %v2680 = vpop.permute.xlu0 %2679
        %2681 = vrot.lane.b32.xlu0 %v2528, 80
        %v2682 = vpop.permute.xlu0 %2681
        %2699 = vrot.lane.b32.xlu0 %v1577, 96
        %v2700 = vpop.permute.xlu0 %2699
        %2701 = vrot.lane.b32.xlu0 %v1713, 96
        %v2702 = vpop.permute.xlu0 %2701
        %2703 = vrot.lane.b32.xlu0 %v1849, 96
        %v2704 = vpop.permute.xlu0 %2703
        %2705 = vrot.lane.b32.xlu0 %v1985, 96
        %v2706 = vpop.permute.xlu0 %2705
        %2707 = vrot.lane.b32.xlu0 %v2121, 96
        %v2708 = vpop.permute.xlu0 %2707
        %2709 = vrot.lane.b32.xlu0 %v2257, 96
        %v2710 = vpop.permute.xlu0 %2709
        %2711 = vrot.lane.b32.xlu0 %v2393, 96
        %v2712 = vpop.permute.xlu0 %2711
        %2713 = vrot.lane.b32.xlu0 %v2529, 96
        %v2714 = vpop.permute.xlu0 %2713
        %2731 = vrot.lane.b32.xlu0 %v1578, 112
        %v2732 = vpop.permute.xlu0 %2731
        %2733 = vrot.lane.b32.xlu0 %v1714, 112
        %v2734 = vpop.permute.xlu0 %2733
        %2735 = vrot.lane.b32.xlu0 %v1850, 112
        %v2736 = vpop.permute.xlu0 %2735
        %2737 = vrot.lane.b32.xlu0 %v1986, 112
        %v2738 = vpop.permute.xlu0 %2737
        %2739 = vrot.lane.b32.xlu0 %v2122, 112
        %v2740 = vpop.permute.xlu0 %2739
        %2741 = vrot.lane.b32.xlu0 %v2258, 112
        %v2742 = vpop.permute.xlu0 %2741
        %2743 = vrot.lane.b32.xlu0 %v2394, 112
        %v2744 = vpop.permute.xlu0 %2743
        %2745 = vrot.lane.b32.xlu0 %v2530, 112
        %v2746 = vpop.permute.xlu0 %2745
        %vm2755 = vcmask 130048
        %v2756 = vsel %vm2755, %v1571, %v2540
        %v2757 = vsel %vm2755, %v1707, %v2542
        %v2758 = vsel %vm2755, %v1843, %v2544
        %v2759 = vsel %vm2755, %v1979, %v2546
        %v2760 = vsel %vm2755, %v2115, %v2548
        %v2761 = vsel %vm2755, %v2251, %v2550
        %v2762 = vsel %vm2755, %v2387, %v2552
        %v2763 = vsel %vm2755, %v2523, %v2554
        %vm2764 = vcmask 261120
        %v2765 = vsel %vm2764, %v2756, %v2572
        %v2766 = vsel %vm2764, %v2757, %v2574
        %v2767 = vsel %vm2764, %v2758, %v2576
        %v2768 = vsel %vm2764, %v2759, %v2578
        %v2769 = vsel %vm2764, %v2760, %v2580
        %v2770 = vsel %vm2764, %v2761, %v2582
        %v2771 = vsel %vm2764, %v2762, %v2584
        %v2772 = vsel %vm2764, %v2763, %v2586
        %vm2773 = vcmask 392192
        %v2774 = vsel %vm2773, %v2765, %v2604
        %v2775 = vsel %vm2773, %v2766, %v2606
        %v2776 = vsel %vm2773, %v2767, %v2608
        %v2777 = vsel %vm2773, %v2768, %v2610
        %v2778 = vsel %vm2773, %v2769, %v2612
        %v2779 = vsel %vm2773, %v2770, %v2614
        %v2780 = vsel %vm2773, %v2771, %v2616
        %v2781 = vsel %vm2773, %v2772, %v2618
        %vm2782 = vcmask 523264
        %v2783 = vsel %vm2782, %v2774, %v2636
        %v2784 = vsel %vm2782, %v2775, %v2638
        %v2785 = vsel %vm2782, %v2776, %v2640
        %v2786 = vsel %vm2782, %v2777, %v2642
        %v2787 = vsel %vm2782, %v2778, %v2644
        %v2788 = vsel %vm2782, %v2779, %v2646
        %v2789 = vsel %vm2782, %v2780, %v2648
        %v2790 = vsel %vm2782, %v2781, %v2650
        %vm2791 = vcmask 654336
        %v2792 = vsel %vm2791, %v2783, %v2668
        %v2793 = vsel %vm2791, %v2784, %v2670
        %v2794 = vsel %vm2791, %v2785, %v2672
        %v2795 = vsel %vm2791, %v2786, %v2674
        %v2796 = vsel %vm2791, %v2787, %v2676
        %v2797 = vsel %vm2791, %v2788, %v2678
        %v2798 = vsel %vm2791, %v2789, %v2680
        %v2799 = vsel %vm2791, %v2790, %v2682
        %vm2800 = vcmask 785408
        %v2801 = vsel %vm2800, %v2792, %v2700
        %v2802 = vsel %vm2800, %v2793, %v2702
        %v2803 = vsel %vm2800, %v2794, %v2704
        %v2804 = vsel %vm2800, %v2795, %v2706
        %v2805 = vsel %vm2800, %v2796, %v2708
        %v2806 = vsel %vm2800, %v2797, %v2710
        %v2807 = vsel %vm2800, %v2798, %v2712
        %v2808 = vsel %vm2800, %v2799, %v2714
        %vm2809 = vcmask 916480
        %v2810 = vsel %vm2809, %v2801, %v2732
        %v2811 = vsel %vm2809, %v2802, %v2734
        %v2812 = vsel %vm2809, %v2803, %v2736
        %v2813 = vsel %vm2809, %v2804, %v2738
        %v2814 = vsel %vm2809, %v2805, %v2740
        %v2815 = vsel %vm2809, %v2806, %v2742
        %v2816 = vsel %vm2809, %v2807, %v2744
        %v2817 = vsel %vm2809, %v2808, %v2746
        %2826 = vrot.lane.b32.xlu0 %v2810, 17
        %v2827 = vpop.permute.xlu0 %2826
        %2828 = vrot.lane.b32.xlu0 %v2811, 17
        %v2829 = vpop.permute.xlu0 %2828
        %2830 = vrot.lane.b32.xlu0 %v2812, 17
        %v2831 = vpop.permute.xlu0 %2830
        %2832 = vrot.lane.b32.xlu0 %v2813, 17
        %v2833 = vpop.permute.xlu0 %2832
        %2834 = vrot.lane.b32.xlu0 %v2814, 17
        %v2835 = vpop.permute.xlu0 %2834
        %2836 = vrot.lane.b32.xlu0 %v2815, 17
        %v2837 = vpop.permute.xlu0 %2836
        %2838 = vrot.lane.b32.xlu0 %v2816, 17
        %v2839 = vpop.permute.xlu0 %2838
        %2840 = vrot.lane.b32.xlu0 %v2817, 17
        %v2841 = vpop.permute.xlu0 %2840
        %vm2850 = vcmask 1047688
        %2851 = vst.msk [vmem:[%s134] sm:$0xff] %vm2850, %v2827
        %vm2852 = vcmask 138240
        %2853 = vst.msk [vmem:[%s134 + $0x8] sm:$0xff] %vm2852, %v2827
        %2854 = vst.msk [vmem:[%s134 + $0x18] sm:$0xff] %vm2850, %v2829
        %2855 = vst.msk [vmem:[%s134 + $0x20] sm:$0xff] %vm2852, %v2829
        %2856 = vst.msk [vmem:[%s134 + $0x30] sm:$0xff] %vm2850, %v2831
        %2857 = vst.msk [vmem:[%s134 + $0x38] sm:$0xff] %vm2852, %v2831
        %2858 = vst.msk [vmem:[%s134 + $0x48] sm:$0xff] %vm2850, %v2833
        %2859 = vst.msk [vmem:[%s134 + $0x50] sm:$0xff] %vm2852, %v2833
        %2860 = vst.msk [vmem:[%s134 + $0x60] sm:$0xff] %vm2850, %v2835
        %2861 = vst.msk [vmem:[%s134 + $0x68] sm:$0xff] %vm2852, %v2835
        %2862 = vst.msk [vmem:[%s134 + $0x78] sm:$0xff] %vm2850, %v2837
        %2863 = vst.msk [vmem:[%s134 + $0x80] sm:$0xff] %vm2852, %v2837
        %2864 = vst.msk [vmem:[%s134 + $0x90] sm:$0xff] %vm2850, %v2839
        %2865 = vst.msk [vmem:[%s134 + $0x98] sm:$0xff] %vm2852, %v2839
        %2866 = vst.msk [vmem:[%s134 + $0xa8] sm:$0xff] %vm2850, %v2841
        %2867 = vst.msk [vmem:[%s134 + $0xb0] sm:$0xff] %vm2852, %v2841
        %s2869 = sor.u32 256, 8
        %2870 = vbcast.lane.b32.xlu0 %v214, %s2869
        %v2871 = vpop.permute.xlu0 %2870
        %s2873 = sor.u32 256, 8
        %2874 = vbcast.lane.b32.xlu0 %v221, %s2873
        %v2875 = vpop.permute.xlu0 %2874
        %s2877 = sor.u32 256, 8
        %2878 = vbcast.lane.b32.xlu0 %v228, %s2877
        %v2879 = vpop.permute.xlu0 %2878
        %s2881 = sor.u32 256, 8
        %2882 = vbcast.lane.b32.xlu0 %v235, %s2881
        %v2883 = vpop.permute.xlu0 %2882
        %s2885 = sor.u32 256, 8
        %2886 = vbcast.lane.b32.xlu0 %v242, %s2885
        %v2887 = vpop.permute.xlu0 %2886
        %s2889 = sor.u32 256, 8
        %2890 = vbcast.lane.b32.xlu0 %v249, %s2889
        %v2891 = vpop.permute.xlu0 %2890
        %s2893 = sor.u32 256, 8
        %2894 = vbcast.lane.b32.xlu0 %v256, %s2893
        %v2895 = vpop.permute.xlu0 %2894
        %s2897 = sor.u32 256, 8
        %2898 = vbcast.lane.b32.xlu0 %v263, %s2897
        %v2899 = vpop.permute.xlu0 %2898
        %s2901 = sor.u32 256, 8
        %2902 = vbcast.lane.b32.xlu0 %v270, %s2901
        %v2903 = vpop.permute.xlu0 %2902
        %s2905 = sor.u32 256, 8
        %2906 = vbcast.lane.b32.xlu0 %v277, %s2905
        %v2907 = vpop.permute.xlu0 %2906
        %s2909 = sor.u32 256, 8
        %2910 = vbcast.lane.b32.xlu0 %v284, %s2909
        %v2911 = vpop.permute.xlu0 %2910
        %s2913 = sor.u32 256, 8
        %2914 = vbcast.lane.b32.xlu0 %v291, %s2913
        %v2915 = vpop.permute.xlu0 %2914
        %s2917 = sor.u32 256, 8
        %2918 = vbcast.lane.b32.xlu0 %v298, %s2917
        %v2919 = vpop.permute.xlu0 %2918
        %s2921 = sor.u32 256, 8
        %2922 = vbcast.lane.b32.xlu0 %v305, %s2921
        %v2923 = vpop.permute.xlu0 %2922
        %s2925 = sor.u32 256, 8
        %2926 = vbcast.lane.b32.xlu0 %v312, %s2925
        %v2927 = vpop.permute.xlu0 %2926
        %s2929 = sor.u32 256, 8
        %2930 = vbcast.lane.b32.xlu0 %v319, %s2929
        %v2931 = vpop.permute.xlu0 %2930
        %s2933 = sor.u32 256, 8
        %2934 = vbcast.lane.b32.xlu0 %v326, %s2933
        %v2935 = vpop.permute.xlu0 %2934
        %s2937 = sor.u32 256, 8
        %2938 = vbcast.lane.b32.xlu0 %v333, %s2937
        %v2939 = vpop.permute.xlu0 %2938
        %s2941 = sor.u32 256, 8
        %2942 = vbcast.lane.b32.xlu0 %v340, %s2941
        %v2943 = vpop.permute.xlu0 %2942
        %s2945 = sor.u32 256, 8
        %2946 = vbcast.lane.b32.xlu0 %v347, %s2945
        %v2947 = vpop.permute.xlu0 %2946
        %s2949 = sor.u32 256, 8
        %2950 = vbcast.lane.b32.xlu0 %v354, %s2949
        %v2951 = vpop.permute.xlu0 %2950
        %s2953 = sor.u32 256, 8
        %2954 = vbcast.lane.b32.xlu0 %v361, %s2953
        %v2955 = vpop.permute.xlu0 %2954
        %s2957 = sor.u32 256, 8
        %2958 = vbcast.lane.b32.xlu0 %v368, %s2957
        %v2959 = vpop.permute.xlu0 %2958
        %s2961 = sor.u32 256, 8
        %2962 = vbcast.lane.b32.xlu0 %v375, %s2961
        %v2963 = vpop.permute.xlu0 %2962
        %s2965 = sor.u32 256, 8
        %2966 = vbcast.lane.b32.xlu0 %v382, %s2965
        %v2967 = vpop.permute.xlu0 %2966
        %s2969 = sor.u32 256, 8
        %2970 = vbcast.lane.b32.xlu0 %v389, %s2969
        %v2971 = vpop.permute.xlu0 %2970
        %s2973 = sor.u32 256, 8
        %2974 = vbcast.lane.b32.xlu0 %v396, %s2973
        %v2975 = vpop.permute.xlu0 %2974
        %s2977 = sor.u32 256, 8
        %2978 = vbcast.lane.b32.xlu0 %v403, %s2977
        %v2979 = vpop.permute.xlu0 %2978
        %s2981 = sor.u32 256, 8
        %2982 = vbcast.lane.b32.xlu0 %v410, %s2981
        %v2983 = vpop.permute.xlu0 %2982
        %s2985 = sor.u32 256, 8
        %2986 = vbcast.lane.b32.xlu0 %v417, %s2985
        %v2987 = vpop.permute.xlu0 %2986
        %s2989 = sor.u32 256, 8
        %2990 = vbcast.lane.b32.xlu0 %v424, %s2989
        %v2991 = vpop.permute.xlu0 %2990
        %s2993 = sor.u32 256, 8
        %2994 = vbcast.lane.b32.xlu0 %v431, %s2993
        %v2995 = vpop.permute.xlu0 %2994
        %s2997 = sor.u32 256, 8
        %2998 = vbcast.lane.b32.xlu0 %v438, %s2997
        %v2999 = vpop.permute.xlu0 %2998
        %s3001 = sor.u32 256, 8
        %3002 = vbcast.lane.b32.xlu0 %v445, %s3001
        %v3003 = vpop.permute.xlu0 %3002
        %s3005 = sor.u32 256, 8
        %3006 = vbcast.lane.b32.xlu0 %v452, %s3005
        %v3007 = vpop.permute.xlu0 %3006
        %s3009 = sor.u32 256, 8
        %3010 = vbcast.lane.b32.xlu0 %v459, %s3009
        %v3011 = vpop.permute.xlu0 %3010
        %s3013 = sor.u32 256, 8
        %3014 = vbcast.lane.b32.xlu0 %v466, %s3013
        %v3015 = vpop.permute.xlu0 %3014
        %s3017 = sor.u32 256, 8
        %3018 = vbcast.lane.b32.xlu0 %v473, %s3017
        %v3019 = vpop.permute.xlu0 %3018
        %s3021 = sor.u32 256, 8
        %3022 = vbcast.lane.b32.xlu0 %v480, %s3021
        %v3023 = vpop.permute.xlu0 %3022
        %s3025 = sor.u32 256, 8
        %3026 = vbcast.lane.b32.xlu0 %v487, %s3025
        %v3027 = vpop.permute.xlu0 %3026
        %s3029 = sor.u32 256, 8
        %3030 = vbcast.lane.b32.xlu0 %v494, %s3029
        %v3031 = vpop.permute.xlu0 %3030
        %s3033 = sor.u32 256, 8
        %3034 = vbcast.lane.b32.xlu0 %v501, %s3033
        %v3035 = vpop.permute.xlu0 %3034
        %s3037 = sor.u32 256, 8
        %3038 = vbcast.lane.b32.xlu0 %v508, %s3037
        %v3039 = vpop.permute.xlu0 %3038
        %s3041 = sor.u32 256, 8
        %3042 = vbcast.lane.b32.xlu0 %v515, %s3041
        %v3043 = vpop.permute.xlu0 %3042
        %s3045 = sor.u32 256, 8
        %3046 = vbcast.lane.b32.xlu0 %v522, %s3045
        %v3047 = vpop.permute.xlu0 %3046
        %s3049 = sor.u32 256, 8
        %3050 = vbcast.lane.b32.xlu0 %v529, %s3049
        %v3051 = vpop.permute.xlu0 %3050
        %s3053 = sor.u32 256, 8
        %3054 = vbcast.lane.b32.xlu0 %v536, %s3053
        %v3055 = vpop.permute.xlu0 %3054
        %s3057 = sor.u32 256, 8
        %3058 = vbcast.lane.b32.xlu0 %v543, %s3057
        %v3059 = vpop.permute.xlu0 %3058
        %s3061 = sor.u32 256, 8
        %3062 = vbcast.lane.b32.xlu0 %v550, %s3061
        %v3063 = vpop.permute.xlu0 %3062
        %s3065 = sor.u32 256, 8
        %3066 = vbcast.lane.b32.xlu0 %v557, %s3065
        %v3067 = vpop.permute.xlu0 %3066
        %s3069 = sor.u32 256, 8
        %3070 = vbcast.lane.b32.xlu0 %v564, %s3069
        %v3071 = vpop.permute.xlu0 %3070
        %s3073 = sor.u32 256, 8
        %3074 = vbcast.lane.b32.xlu0 %v571, %s3073
        %v3075 = vpop.permute.xlu0 %3074
        %s3077 = sor.u32 256, 8
        %3078 = vbcast.lane.b32.xlu0 %v578, %s3077
        %v3079 = vpop.permute.xlu0 %3078
        %s3081 = sor.u32 256, 8
        %3082 = vbcast.lane.b32.xlu0 %v585, %s3081
        %v3083 = vpop.permute.xlu0 %3082
        %s3085 = sor.u32 256, 8
        %3086 = vbcast.lane.b32.xlu0 %v592, %s3085
        %v3087 = vpop.permute.xlu0 %3086
        %s3089 = sor.u32 256, 8
        %3090 = vbcast.lane.b32.xlu0 %v599, %s3089
        %v3091 = vpop.permute.xlu0 %3090
        %s3093 = sor.u32 256, 8
        %3094 = vbcast.lane.b32.xlu0 %v606, %s3093
        %v3095 = vpop.permute.xlu0 %3094
        %s3097 = sor.u32 256, 8
        %3098 = vbcast.lane.b32.xlu0 %v613, %s3097
        %v3099 = vpop.permute.xlu0 %3098
        %s3101 = sor.u32 256, 8
        %3102 = vbcast.lane.b32.xlu0 %v620, %s3101
        %v3103 = vpop.permute.xlu0 %3102
        %s3105 = sor.u32 256, 8
        %3106 = vbcast.lane.b32.xlu0 %v627, %s3105
        %v3107 = vpop.permute.xlu0 %3106
        %s3109 = sor.u32 256, 8
        %3110 = vbcast.lane.b32.xlu0 %v634, %s3109
        %v3111 = vpop.permute.xlu0 %3110
        %s3113 = sor.u32 256, 8
        %3114 = vbcast.lane.b32.xlu0 %v641, %s3113
        %v3115 = vpop.permute.xlu0 %3114
        %s3117 = sor.u32 256, 8
        %3118 = vbcast.lane.b32.xlu0 %v648, %s3117
        %v3119 = vpop.permute.xlu0 %3118
        %s3121 = sor.u32 256, 8
        %3122 = vbcast.lane.b32.xlu0 %v655, %s3121
        %v3123 = vpop.permute.xlu0 %3122
        %v3124 = vmul.f32 %v2871, %v1062
        %v3125 = vmul.f32 %v2875, %v1066
        %v3126 = vmul.f32 %v2879, %v1070
        %v3127 = vmul.f32 %v2883, %v1074
        %v3128 = vmul.f32 %v2887, %v1078
        %v3129 = vmul.f32 %v2891, %v1082
        %v3130 = vmul.f32 %v2895, %v1086
        %v3131 = vmul.f32 %v2899, %v1090
        %v3132 = vmul.f32 %v2903, %v1094
        %v3133 = vmul.f32 %v2907, %v1098
        %v3134 = vmul.f32 %v2911, %v1102
        %v3135 = vmul.f32 %v2915, %v1106
        %v3136 = vmul.f32 %v2919, %v1110
        %v3137 = vmul.f32 %v2923, %v1114
        %v3138 = vmul.f32 %v2927, %v1118
        %v3139 = vmul.f32 %v2931, %v1122
        %v3140 = vmul.f32 %v2935, %v1126
        %v3141 = vmul.f32 %v2939, %v1130
        %v3142 = vmul.f32 %v2943, %v1134
        %v3143 = vmul.f32 %v2947, %v1138
        %v3144 = vmul.f32 %v2951, %v1142
        %v3145 = vmul.f32 %v2955, %v1146
        %v3146 = vmul.f32 %v2959, %v1150
        %v3147 = vmul.f32 %v2963, %v1154
        %v3148 = vmul.f32 %v2967, %v1158
        %v3149 = vmul.f32 %v2971, %v1162
        %v3150 = vmul.f32 %v2975, %v1166
        %v3151 = vmul.f32 %v2979, %v1170
        %v3152 = vmul.f32 %v2983, %v1174
        %v3153 = vmul.f32 %v2987, %v1178
        %v3154 = vmul.f32 %v2991, %v1182
        %v3155 = vmul.f32 %v2995, %v1186
        %v3156 = vmul.f32 %v2999, %v1190
        %v3157 = vmul.f32 %v3003, %v1194
        %v3158 = vmul.f32 %v3007, %v1198
        %v3159 = vmul.f32 %v3011, %v1202
        %v3160 = vmul.f32 %v3015, %v1206
        %v3161 = vmul.f32 %v3019, %v1210
        %v3162 = vmul.f32 %v3023, %v1214
        %v3163 = vmul.f32 %v3027, %v1218
        %v3164 = vmul.f32 %v3031, %v1222
        %v3165 = vmul.f32 %v3035, %v1226
        %v3166 = vmul.f32 %v3039, %v1230
        %v3167 = vmul.f32 %v3043, %v1234
        %v3168 = vmul.f32 %v3047, %v1238
        %v3169 = vmul.f32 %v3051, %v1242
        %v3170 = vmul.f32 %v3055, %v1246
        %v3171 = vmul.f32 %v3059, %v1250
        %v3172 = vmul.f32 %v3063, %v1254
        %v3173 = vmul.f32 %v3067, %v1258
        %v3174 = vmul.f32 %v3071, %v1262
        %v3175 = vmul.f32 %v3075, %v1266
        %v3176 = vmul.f32 %v3079, %v1270
        %v3177 = vmul.f32 %v3083, %v1274
        %v3178 = vmul.f32 %v3087, %v1278
        %v3179 = vmul.f32 %v3091, %v1282
        %v3180 = vmul.f32 %v3095, %v1286
        %v3181 = vmul.f32 %v3099, %v1290
        %v3182 = vmul.f32 %v3103, %v1294
        %v3183 = vmul.f32 %v3107, %v1298
        %v3184 = vmul.f32 %v3111, %v1302
        %v3185 = vmul.f32 %v3115, %v1306
        %v3186 = vmul.f32 %v3119, %v1310
        %v3187 = vmul.f32 %v3123, %v1314
        %v3188 = vcombine.low %v3124, %v3126
        %v3189 = vcombine.high %v3124, %v3126
        %v3191 = vunpack.c.l.s4 1983009808
        %v3192 = vunpack.c.0.s8 %v3191
        %v3193 = vlaneseq
        %v3194 = vshrl.u32 %v3193, 7
        %v3195 = vsub.s32 %v3192, %v3194
        %v3196 = vrot.slane %v3188, %v3195
        %v3198 = vunpack.c.l.s4 1983009808
        %v3199 = vunpack.c.0.s8 %v3198
        %v3200 = vlaneseq
        %v3201 = vshrl.u32 %v3200, 7
        %v3202 = vsub.s32 %v3199, %v3201
        %v3203 = vrot.slane %v3189, %v3202
        %v3204 = vcombine.low %v3125, %v3127
        %v3205 = vcombine.high %v3125, %v3127
        %v3207 = vunpack.c.l.s4 1983009808
        %v3208 = vunpack.c.0.s8 %v3207
        %v3209 = vlaneseq
        %v3210 = vshrl.u32 %v3209, 7
        %v3211 = vsub.s32 %v3208, %v3210
        %v3212 = vrot.slane %v3204, %v3211
        %v3214 = vunpack.c.l.s4 1983009808
        %v3215 = vunpack.c.0.s8 %v3214
        %v3216 = vlaneseq
        %v3217 = vshrl.u32 %v3216, 7
        %v3218 = vsub.s32 %v3215, %v3217
        %v3219 = vrot.slane %v3205, %v3218
        %v3220 = vcombine.low %v3128, %v3130
        %v3221 = vcombine.high %v3128, %v3130
        %v3223 = vunpack.c.l.s4 1983009808
        %v3224 = vunpack.c.0.s8 %v3223
        %v3225 = vlaneseq
        %v3226 = vshrl.u32 %v3225, 7
        %v3227 = vsub.s32 %v3224, %v3226
        %v3228 = vrot.slane %v3220, %v3227
        %v3230 = vunpack.c.l.s4 1983009808
        %v3231 = vunpack.c.0.s8 %v3230
        %v3232 = vlaneseq
        %v3233 = vshrl.u32 %v3232, 7
        %v3234 = vsub.s32 %v3231, %v3233
        %v3235 = vrot.slane %v3221, %v3234
        %v3236 = vcombine.low %v3129, %v3131
        %v3237 = vcombine.high %v3129, %v3131
        %v3239 = vunpack.c.l.s4 1983009808
        %v3240 = vunpack.c.0.s8 %v3239
        %v3241 = vlaneseq
        %v3242 = vshrl.u32 %v3241, 7
        %v3243 = vsub.s32 %v3240, %v3242
        %v3244 = vrot.slane %v3236, %v3243
        %v3246 = vunpack.c.l.s4 1983009808
        %v3247 = vunpack.c.0.s8 %v3246
        %v3248 = vlaneseq
        %v3249 = vshrl.u32 %v3248, 7
        %v3250 = vsub.s32 %v3247, %v3249
        %v3251 = vrot.slane %v3237, %v3250
        %v3252 = vcombine.low %v3196, %v3212
        %v3253 = vcombine.high %v3196, %v3212
        %v3255 = vunpack.c.l.s4 1934713408
        %v3256 = vunpack.c.0.s8 %v3255
        %v3257 = vlaneseq
        %v3258 = vshrl.u32 %v3257, 7
        %v3259 = vsub.s32 %v3256, %v3258
        %v3260 = vrot.slane %v3252, %v3259
        %v3262 = vunpack.c.l.s4 1934713408
        %v3263 = vunpack.c.0.s8 %v3262
        %v3264 = vlaneseq
        %v3265 = vshrl.u32 %v3264, 7
        %v3266 = vsub.s32 %v3263, %v3265
        %v3267 = vrot.slane %v3253, %v3266
        %v3268 = vcombine.low %v3203, %v3219
        %v3269 = vcombine.high %v3203, %v3219
        %v3271 = vunpack.c.l.s4 1934713408
        %v3272 = vunpack.c.0.s8 %v3271
        %v3273 = vlaneseq
        %v3274 = vshrl.u32 %v3273, 7
        %v3275 = vsub.s32 %v3272, %v3274
        %v3276 = vrot.slane %v3268, %v3275
        %v3278 = vunpack.c.l.s4 1934713408
        %v3279 = vunpack.c.0.s8 %v3278
        %v3280 = vlaneseq
        %v3281 = vshrl.u32 %v3280, 7
        %v3282 = vsub.s32 %v3279, %v3281
        %v3283 = vrot.slane %v3269, %v3282
        %v3284 = vcombine.low %v3228, %v3244
        %v3285 = vcombine.high %v3228, %v3244
        %v3287 = vunpack.c.l.s4 1934713408
        %v3288 = vunpack.c.0.s8 %v3287
        %v3289 = vlaneseq
        %v3290 = vshrl.u32 %v3289, 7
        %v3291 = vsub.s32 %v3288, %v3290
        %v3292 = vrot.slane %v3284, %v3291
        %v3294 = vunpack.c.l.s4 1934713408
        %v3295 = vunpack.c.0.s8 %v3294
        %v3296 = vlaneseq
        %v3297 = vshrl.u32 %v3296, 7
        %v3298 = vsub.s32 %v3295, %v3297
        %v3299 = vrot.slane %v3285, %v3298
        %v3300 = vcombine.low %v3235, %v3251
        %v3301 = vcombine.high %v3235, %v3251
        %v3303 = vunpack.c.l.s4 1934713408
        %v3304 = vunpack.c.0.s8 %v3303
        %v3305 = vlaneseq
        %v3306 = vshrl.u32 %v3305, 7
        %v3307 = vsub.s32 %v3304, %v3306
        %v3308 = vrot.slane %v3300, %v3307
        %v3310 = vunpack.c.l.s4 1934713408
        %v3311 = vunpack.c.0.s8 %v3310
        %v3312 = vlaneseq
        %v3313 = vshrl.u32 %v3312, 7
        %v3314 = vsub.s32 %v3311, %v3313
        %v3315 = vrot.slane %v3301, %v3314
        %v3316 = vcombine.low %v3260, %v3292
        %v3317 = vcombine.high %v3260, %v3292
        %v3318 = vcombine.low %v3267, %v3299
        %v3319 = vcombine.high %v3267, %v3299
        %v3320 = vcombine.low %v3276, %v3308
        %v3321 = vcombine.high %v3276, %v3308
        %v3322 = vcombine.low %v3283, %v3315
        %v3323 = vcombine.high %v3283, %v3315
        %v3324 = vcombine.low %v3132, %v3134
        %v3325 = vcombine.high %v3132, %v3134
        %v3327 = vunpack.c.l.s4 1983009808
        %v3328 = vunpack.c.0.s8 %v3327
        %v3329 = vlaneseq
        %v3330 = vshrl.u32 %v3329, 7
        %v3331 = vsub.s32 %v3328, %v3330
        %v3332 = vrot.slane %v3324, %v3331
        %v3334 = vunpack.c.l.s4 1983009808
        %v3335 = vunpack.c.0.s8 %v3334
        %v3336 = vlaneseq
        %v3337 = vshrl.u32 %v3336, 7
        %v3338 = vsub.s32 %v3335, %v3337
        %v3339 = vrot.slane %v3325, %v3338
        %v3340 = vcombine.low %v3133, %v3135
        %v3341 = vcombine.high %v3133, %v3135
        %v3343 = vunpack.c.l.s4 1983009808
        %v3344 = vunpack.c.0.s8 %v3343
        %v3345 = vlaneseq
        %v3346 = vshrl.u32 %v3345, 7
        %v3347 = vsub.s32 %v3344, %v3346
        %v3348 = vrot.slane %v3340, %v3347
        %v3350 = vunpack.c.l.s4 1983009808
        %v3351 = vunpack.c.0.s8 %v3350
        %v3352 = vlaneseq
        %v3353 = vshrl.u32 %v3352, 7
        %v3354 = vsub.s32 %v3351, %v3353
        %v3355 = vrot.slane %v3341, %v3354
        %v3356 = vcombine.low %v3136, %v3138
        %v3357 = vcombine.high %v3136, %v3138
        %v3359 = vunpack.c.l.s4 1983009808
        %v3360 = vunpack.c.0.s8 %v3359
        %v3361 = vlaneseq
        %v3362 = vshrl.u32 %v3361, 7
        %v3363 = vsub.s32 %v3360, %v3362
        %v3364 = vrot.slane %v3356, %v3363
        %v3366 = vunpack.c.l.s4 1983009808
        %v3367 = vunpack.c.0.s8 %v3366
        %v3368 = vlaneseq
        %v3369 = vshrl.u32 %v3368, 7
        %v3370 = vsub.s32 %v3367, %v3369
        %v3371 = vrot.slane %v3357, %v3370
        %v3372 = vcombine.low %v3137, %v3139
        %v3373 = vcombine.high %v3137, %v3139
        %v3375 = vunpack.c.l.s4 1983009808
        %v3376 = vunpack.c.0.s8 %v3375
        %v3377 = vlaneseq
        %v3378 = vshrl.u32 %v3377, 7
        %v3379 = vsub.s32 %v3376, %v3378
        %v3380 = vrot.slane %v3372, %v3379
        %v3382 = vunpack.c.l.s4 1983009808
        %v3383 = vunpack.c.0.s8 %v3382
        %v3384 = vlaneseq
        %v3385 = vshrl.u32 %v3384, 7
        %v3386 = vsub.s32 %v3383, %v3385
        %v3387 = vrot.slane %v3373, %v3386
        %v3388 = vcombine.low %v3332, %v3348
        %v3389 = vcombine.high %v3332, %v3348
        %v3391 = vunpack.c.l.s4 1934713408
        %v3392 = vunpack.c.0.s8 %v3391
        %v3393 = vlaneseq
        %v3394 = vshrl.u32 %v3393, 7
        %v3395 = vsub.s32 %v3392, %v3394
        %v3396 = vrot.slane %v3388, %v3395
        %v3398 = vunpack.c.l.s4 1934713408
        %v3399 = vunpack.c.0.s8 %v3398
        %v3400 = vlaneseq
        %v3401 = vshrl.u32 %v3400, 7
        %v3402 = vsub.s32 %v3399, %v3401
        %v3403 = vrot.slane %v3389, %v3402
        %v3404 = vcombine.low %v3339, %v3355
        %v3405 = vcombine.high %v3339, %v3355
        %v3407 = vunpack.c.l.s4 1934713408
        %v3408 = vunpack.c.0.s8 %v3407
        %v3409 = vlaneseq
        %v3410 = vshrl.u32 %v3409, 7
        %v3411 = vsub.s32 %v3408, %v3410
        %v3412 = vrot.slane %v3404, %v3411
        %v3414 = vunpack.c.l.s4 1934713408
        %v3415 = vunpack.c.0.s8 %v3414
        %v3416 = vlaneseq
        %v3417 = vshrl.u32 %v3416, 7
        %v3418 = vsub.s32 %v3415, %v3417
        %v3419 = vrot.slane %v3405, %v3418
        %v3420 = vcombine.low %v3364, %v3380
        %v3421 = vcombine.high %v3364, %v3380
        %v3423 = vunpack.c.l.s4 1934713408
        %v3424 = vunpack.c.0.s8 %v3423
        %v3425 = vlaneseq
        %v3426 = vshrl.u32 %v3425, 7
        %v3427 = vsub.s32 %v3424, %v3426
        %v3428 = vrot.slane %v3420, %v3427
        %v3430 = vunpack.c.l.s4 1934713408
        %v3431 = vunpack.c.0.s8 %v3430
        %v3432 = vlaneseq
        %v3433 = vshrl.u32 %v3432, 7
        %v3434 = vsub.s32 %v3431, %v3433
        %v3435 = vrot.slane %v3421, %v3434
        %v3436 = vcombine.low %v3371, %v3387
        %v3437 = vcombine.high %v3371, %v3387
        %v3439 = vunpack.c.l.s4 1934713408
        %v3440 = vunpack.c.0.s8 %v3439
        %v3441 = vlaneseq
        %v3442 = vshrl.u32 %v3441, 7
        %v3443 = vsub.s32 %v3440, %v3442
        %v3444 = vrot.slane %v3436, %v3443
        %v3446 = vunpack.c.l.s4 1934713408
        %v3447 = vunpack.c.0.s8 %v3446
        %v3448 = vlaneseq
        %v3449 = vshrl.u32 %v3448, 7
        %v3450 = vsub.s32 %v3447, %v3449
        %v3451 = vrot.slane %v3437, %v3450
        %v3452 = vcombine.low %v3396, %v3428
        %v3453 = vcombine.high %v3396, %v3428
        %v3454 = vcombine.low %v3403, %v3435
        %v3455 = vcombine.high %v3403, %v3435
        %v3456 = vcombine.low %v3412, %v3444
        %v3457 = vcombine.high %v3412, %v3444
        %v3458 = vcombine.low %v3419, %v3451
        %v3459 = vcombine.high %v3419, %v3451
        %v3460 = vcombine.low %v3140, %v3142
        %v3461 = vcombine.high %v3140, %v3142
        %v3463 = vunpack.c.l.s4 1983009808
        %v3464 = vunpack.c.0.s8 %v3463
        %v3465 = vlaneseq
        %v3466 = vshrl.u32 %v3465, 7
        %v3467 = vsub.s32 %v3464, %v3466
        %v3468 = vrot.slane %v3460, %v3467
        %v3470 = vunpack.c.l.s4 1983009808
        %v3471 = vunpack.c.0.s8 %v3470
        %v3472 = vlaneseq
        %v3473 = vshrl.u32 %v3472, 7
        %v3474 = vsub.s32 %v3471, %v3473
        %v3475 = vrot.slane %v3461, %v3474
        %v3476 = vcombine.low %v3141, %v3143
        %v3477 = vcombine.high %v3141, %v3143
        %v3479 = vunpack.c.l.s4 1983009808
        %v3480 = vunpack.c.0.s8 %v3479
        %v3481 = vlaneseq
        %v3482 = vshrl.u32 %v3481, 7
        %v3483 = vsub.s32 %v3480, %v3482
        %v3484 = vrot.slane %v3476, %v3483
        %v3486 = vunpack.c.l.s4 1983009808
        %v3487 = vunpack.c.0.s8 %v3486
        %v3488 = vlaneseq
        %v3489 = vshrl.u32 %v3488, 7
        %v3490 = vsub.s32 %v3487, %v3489
        %v3491 = vrot.slane %v3477, %v3490
        %v3492 = vcombine.low %v3144, %v3146
        %v3493 = vcombine.high %v3144, %v3146
        %v3495 = vunpack.c.l.s4 1983009808
        %v3496 = vunpack.c.0.s8 %v3495
        %v3497 = vlaneseq
        %v3498 = vshrl.u32 %v3497, 7
        %v3499 = vsub.s32 %v3496, %v3498
        %v3500 = vrot.slane %v3492, %v3499
        %v3502 = vunpack.c.l.s4 1983009808
        %v3503 = vunpack.c.0.s8 %v3502
        %v3504 = vlaneseq
        %v3505 = vshrl.u32 %v3504, 7
        %v3506 = vsub.s32 %v3503, %v3505
        %v3507 = vrot.slane %v3493, %v3506
        %v3508 = vcombine.low %v3145, %v3147
        %v3509 = vcombine.high %v3145, %v3147
        %v3511 = vunpack.c.l.s4 1983009808
        %v3512 = vunpack.c.0.s8 %v3511
        %v3513 = vlaneseq
        %v3514 = vshrl.u32 %v3513, 7
        %v3515 = vsub.s32 %v3512, %v3514
        %v3516 = vrot.slane %v3508, %v3515
        %v3518 = vunpack.c.l.s4 1983009808
        %v3519 = vunpack.c.0.s8 %v3518
        %v3520 = vlaneseq
        %v3521 = vshrl.u32 %v3520, 7
        %v3522 = vsub.s32 %v3519, %v3521
        %v3523 = vrot.slane %v3509, %v3522
        %v3524 = vcombine.low %v3468, %v3484
        %v3525 = vcombine.high %v3468, %v3484
        %v3527 = vunpack.c.l.s4 1934713408
        %v3528 = vunpack.c.0.s8 %v3527
        %v3529 = vlaneseq
        %v3530 = vshrl.u32 %v3529, 7
        %v3531 = vsub.s32 %v3528, %v3530
        %v3532 = vrot.slane %v3524, %v3531
        %v3534 = vunpack.c.l.s4 1934713408
        %v3535 = vunpack.c.0.s8 %v3534
        %v3536 = vlaneseq
        %v3537 = vshrl.u32 %v3536, 7
        %v3538 = vsub.s32 %v3535, %v3537
        %v3539 = vrot.slane %v3525, %v3538
        %v3540 = vcombine.low %v3475, %v3491
        %v3541 = vcombine.high %v3475, %v3491
        %v3543 = vunpack.c.l.s4 1934713408
        %v3544 = vunpack.c.0.s8 %v3543
        %v3545 = vlaneseq
        %v3546 = vshrl.u32 %v3545, 7
        %v3547 = vsub.s32 %v3544, %v3546
        %v3548 = vrot.slane %v3540, %v3547
        %v3550 = vunpack.c.l.s4 1934713408
        %v3551 = vunpack.c.0.s8 %v3550
        %v3552 = vlaneseq
        %v3553 = vshrl.u32 %v3552, 7
        %v3554 = vsub.s32 %v3551, %v3553
        %v3555 = vrot.slane %v3541, %v3554
        %v3556 = vcombine.low %v3500, %v3516
        %v3557 = vcombine.high %v3500, %v3516
        %v3559 = vunpack.c.l.s4 1934713408
        %v3560 = vunpack.c.0.s8 %v3559
        %v3561 = vlaneseq
        %v3562 = vshrl.u32 %v3561, 7
        %v3563 = vsub.s32 %v3560, %v3562
        %v3564 = vrot.slane %v3556, %v3563
        %v3566 = vunpack.c.l.s4 1934713408
        %v3567 = vunpack.c.0.s8 %v3566
        %v3568 = vlaneseq
        %v3569 = vshrl.u32 %v3568, 7
        %v3570 = vsub.s32 %v3567, %v3569
        %v3571 = vrot.slane %v3557, %v3570
        %v3572 = vcombine.low %v3507, %v3523
        %v3573 = vcombine.high %v3507, %v3523
        %v3575 = vunpack.c.l.s4 1934713408
        %v3576 = vunpack.c.0.s8 %v3575
        %v3577 = vlaneseq
        %v3578 = vshrl.u32 %v3577, 7
        %v3579 = vsub.s32 %v3576, %v3578
        %v3580 = vrot.slane %v3572, %v3579
        %v3582 = vunpack.c.l.s4 1934713408
        %v3583 = vunpack.c.0.s8 %v3582
        %v3584 = vlaneseq
        %v3585 = vshrl.u32 %v3584, 7
        %v3586 = vsub.s32 %v3583, %v3585
        %v3587 = vrot.slane %v3573, %v3586
        %v3588 = vcombine.low %v3532, %v3564
        %v3589 = vcombine.high %v3532, %v3564
        %v3590 = vcombine.low %v3539, %v3571
        %v3591 = vcombine.high %v3539, %v3571
        %v3592 = vcombine.low %v3548, %v3580
        %v3593 = vcombine.high %v3548, %v3580
        %v3594 = vcombine.low %v3555, %v3587
        %v3595 = vcombine.high %v3555, %v3587
        %v3596 = vcombine.low %v3148, %v3150
        %v3597 = vcombine.high %v3148, %v3150
        %v3599 = vunpack.c.l.s4 1983009808
        %v3600 = vunpack.c.0.s8 %v3599
        %v3601 = vlaneseq
        %v3602 = vshrl.u32 %v3601, 7
        %v3603 = vsub.s32 %v3600, %v3602
        %v3604 = vrot.slane %v3596, %v3603
        %v3606 = vunpack.c.l.s4 1983009808
        %v3607 = vunpack.c.0.s8 %v3606
        %v3608 = vlaneseq
        %v3609 = vshrl.u32 %v3608, 7
        %v3610 = vsub.s32 %v3607, %v3609
        %v3611 = vrot.slane %v3597, %v3610
        %v3612 = vcombine.low %v3149, %v3151
        %v3613 = vcombine.high %v3149, %v3151
        %v3615 = vunpack.c.l.s4 1983009808
        %v3616 = vunpack.c.0.s8 %v3615
        %v3617 = vlaneseq
        %v3618 = vshrl.u32 %v3617, 7
        %v3619 = vsub.s32 %v3616, %v3618
        %v3620 = vrot.slane %v3612, %v3619
        %v3622 = vunpack.c.l.s4 1983009808
        %v3623 = vunpack.c.0.s8 %v3622
        %v3624 = vlaneseq
        %v3625 = vshrl.u32 %v3624, 7
        %v3626 = vsub.s32 %v3623, %v3625
        %v3627 = vrot.slane %v3613, %v3626
        %v3628 = vcombine.low %v3152, %v3154
        %v3629 = vcombine.high %v3152, %v3154
        %v3631 = vunpack.c.l.s4 1983009808
        %v3632 = vunpack.c.0.s8 %v3631
        %v3633 = vlaneseq
        %v3634 = vshrl.u32 %v3633, 7
        %v3635 = vsub.s32 %v3632, %v3634
        %v3636 = vrot.slane %v3628, %v3635
        %v3638 = vunpack.c.l.s4 1983009808
        %v3639 = vunpack.c.0.s8 %v3638
        %v3640 = vlaneseq
        %v3641 = vshrl.u32 %v3640, 7
        %v3642 = vsub.s32 %v3639, %v3641
        %v3643 = vrot.slane %v3629, %v3642
        %v3644 = vcombine.low %v3153, %v3155
        %v3645 = vcombine.high %v3153, %v3155
        %v3647 = vunpack.c.l.s4 1983009808
        %v3648 = vunpack.c.0.s8 %v3647
        %v3649 = vlaneseq
        %v3650 = vshrl.u32 %v3649, 7
        %v3651 = vsub.s32 %v3648, %v3650
        %v3652 = vrot.slane %v3644, %v3651
        %v3654 = vunpack.c.l.s4 1983009808
        %v3655 = vunpack.c.0.s8 %v3654
        %v3656 = vlaneseq
        %v3657 = vshrl.u32 %v3656, 7
        %v3658 = vsub.s32 %v3655, %v3657
        %v3659 = vrot.slane %v3645, %v3658
        %v3660 = vcombine.low %v3604, %v3620
        %v3661 = vcombine.high %v3604, %v3620
        %v3663 = vunpack.c.l.s4 1934713408
        %v3664 = vunpack.c.0.s8 %v3663
        %v3665 = vlaneseq
        %v3666 = vshrl.u32 %v3665, 7
        %v3667 = vsub.s32 %v3664, %v3666
        %v3668 = vrot.slane %v3660, %v3667
        %v3670 = vunpack.c.l.s4 1934713408
        %v3671 = vunpack.c.0.s8 %v3670
        %v3672 = vlaneseq
        %v3673 = vshrl.u32 %v3672, 7
        %v3674 = vsub.s32 %v3671, %v3673
        %v3675 = vrot.slane %v3661, %v3674
        %v3676 = vcombine.low %v3611, %v3627
        %v3677 = vcombine.high %v3611, %v3627
        %v3679 = vunpack.c.l.s4 1934713408
        %v3680 = vunpack.c.0.s8 %v3679
        %v3681 = vlaneseq
        %v3682 = vshrl.u32 %v3681, 7
        %v3683 = vsub.s32 %v3680, %v3682
        %v3684 = vrot.slane %v3676, %v3683
        %v3686 = vunpack.c.l.s4 1934713408
        %v3687 = vunpack.c.0.s8 %v3686
        %v3688 = vlaneseq
        %v3689 = vshrl.u32 %v3688, 7
        %v3690 = vsub.s32 %v3687, %v3689
        %v3691 = vrot.slane %v3677, %v3690
        %v3692 = vcombine.low %v3636, %v3652
        %v3693 = vcombine.high %v3636, %v3652
        %v3695 = vunpack.c.l.s4 1934713408
        %v3696 = vunpack.c.0.s8 %v3695
        %v3697 = vlaneseq
        %v3698 = vshrl.u32 %v3697, 7
        %v3699 = vsub.s32 %v3696, %v3698
        %v3700 = vrot.slane %v3692, %v3699
        %v3702 = vunpack.c.l.s4 1934713408
        %v3703 = vunpack.c.0.s8 %v3702
        %v3704 = vlaneseq
        %v3705 = vshrl.u32 %v3704, 7
        %v3706 = vsub.s32 %v3703, %v3705
        %v3707 = vrot.slane %v3693, %v3706
        %v3708 = vcombine.low %v3643, %v3659
        %v3709 = vcombine.high %v3643, %v3659
        %v3711 = vunpack.c.l.s4 1934713408
        %v3712 = vunpack.c.0.s8 %v3711
        %v3713 = vlaneseq
        %v3714 = vshrl.u32 %v3713, 7
        %v3715 = vsub.s32 %v3712, %v3714
        %v3716 = vrot.slane %v3708, %v3715
        %v3718 = vunpack.c.l.s4 1934713408
        %v3719 = vunpack.c.0.s8 %v3718
        %v3720 = vlaneseq
        %v3721 = vshrl.u32 %v3720, 7
        %v3722 = vsub.s32 %v3719, %v3721
        %v3723 = vrot.slane %v3709, %v3722
        %v3724 = vcombine.low %v3668, %v3700
        %v3725 = vcombine.high %v3668, %v3700
        %v3726 = vcombine.low %v3675, %v3707
        %v3727 = vcombine.high %v3675, %v3707
        %v3728 = vcombine.low %v3684, %v3716
        %v3729 = vcombine.high %v3684, %v3716
        %v3730 = vcombine.low %v3691, %v3723
        %v3731 = vcombine.high %v3691, %v3723
        %v3732 = vcombine.low %v3156, %v3158
        %v3733 = vcombine.high %v3156, %v3158
        %v3735 = vunpack.c.l.s4 1983009808
        %v3736 = vunpack.c.0.s8 %v3735
        %v3737 = vlaneseq
        %v3738 = vshrl.u32 %v3737, 7
        %v3739 = vsub.s32 %v3736, %v3738
        %v3740 = vrot.slane %v3732, %v3739
        %v3742 = vunpack.c.l.s4 1983009808
        %v3743 = vunpack.c.0.s8 %v3742
        %v3744 = vlaneseq
        %v3745 = vshrl.u32 %v3744, 7
        %v3746 = vsub.s32 %v3743, %v3745
        %v3747 = vrot.slane %v3733, %v3746
        %v3748 = vcombine.low %v3157, %v3159
        %v3749 = vcombine.high %v3157, %v3159
        %v3751 = vunpack.c.l.s4 1983009808
        %v3752 = vunpack.c.0.s8 %v3751
        %v3753 = vlaneseq
        %v3754 = vshrl.u32 %v3753, 7
        %v3755 = vsub.s32 %v3752, %v3754
        %v3756 = vrot.slane %v3748, %v3755
        %v3758 = vunpack.c.l.s4 1983009808
        %v3759 = vunpack.c.0.s8 %v3758
        %v3760 = vlaneseq
        %v3761 = vshrl.u32 %v3760, 7
        %v3762 = vsub.s32 %v3759, %v3761
        %v3763 = vrot.slane %v3749, %v3762
        %v3764 = vcombine.low %v3160, %v3162
        %v3765 = vcombine.high %v3160, %v3162
        %v3767 = vunpack.c.l.s4 1983009808
        %v3768 = vunpack.c.0.s8 %v3767
        %v3769 = vlaneseq
        %v3770 = vshrl.u32 %v3769, 7
        %v3771 = vsub.s32 %v3768, %v3770
        %v3772 = vrot.slane %v3764, %v3771
        %v3774 = vunpack.c.l.s4 1983009808
        %v3775 = vunpack.c.0.s8 %v3774
        %v3776 = vlaneseq
        %v3777 = vshrl.u32 %v3776, 7
        %v3778 = vsub.s32 %v3775, %v3777
        %v3779 = vrot.slane %v3765, %v3778
        %v3780 = vcombine.low %v3161, %v3163
        %v3781 = vcombine.high %v3161, %v3163
        %v3783 = vunpack.c.l.s4 1983009808
        %v3784 = vunpack.c.0.s8 %v3783
        %v3785 = vlaneseq
        %v3786 = vshrl.u32 %v3785, 7
        %v3787 = vsub.s32 %v3784, %v3786
        %v3788 = vrot.slane %v3780, %v3787
        %v3790 = vunpack.c.l.s4 1983009808
        %v3791 = vunpack.c.0.s8 %v3790
        %v3792 = vlaneseq
        %v3793 = vshrl.u32 %v3792, 7
        %v3794 = vsub.s32 %v3791, %v3793
        %v3795 = vrot.slane %v3781, %v3794
        %v3796 = vcombine.low %v3740, %v3756
        %v3797 = vcombine.high %v3740, %v3756
        %v3799 = vunpack.c.l.s4 1934713408
        %v3800 = vunpack.c.0.s8 %v3799
        %v3801 = vlaneseq
        %v3802 = vshrl.u32 %v3801, 7
        %v3803 = vsub.s32 %v3800, %v3802
        %v3804 = vrot.slane %v3796, %v3803
        %v3806 = vunpack.c.l.s4 1934713408
        %v3807 = vunpack.c.0.s8 %v3806
        %v3808 = vlaneseq
        %v3809 = vshrl.u32 %v3808, 7
        %v3810 = vsub.s32 %v3807, %v3809
        %v3811 = vrot.slane %v3797, %v3810
        %v3812 = vcombine.low %v3747, %v3763
        %v3813 = vcombine.high %v3747, %v3763
        %v3815 = vunpack.c.l.s4 1934713408
        %v3816 = vunpack.c.0.s8 %v3815
        %v3817 = vlaneseq
        %v3818 = vshrl.u32 %v3817, 7
        %v3819 = vsub.s32 %v3816, %v3818
        %v3820 = vrot.slane %v3812, %v3819
        %v3822 = vunpack.c.l.s4 1934713408
        %v3823 = vunpack.c.0.s8 %v3822
        %v3824 = vlaneseq
        %v3825 = vshrl.u32 %v3824, 7
        %v3826 = vsub.s32 %v3823, %v3825
        %v3827 = vrot.slane %v3813, %v3826
        %v3828 = vcombine.low %v3772, %v3788
        %v3829 = vcombine.high %v3772, %v3788
        %v3831 = vunpack.c.l.s4 1934713408
        %v3832 = vunpack.c.0.s8 %v3831
        %v3833 = vlaneseq
        %v3834 = vshrl.u32 %v3833, 7
        %v3835 = vsub.s32 %v3832, %v3834
        %v3836 = vrot.slane %v3828, %v3835
        %v3838 = vunpack.c.l.s4 1934713408
        %v3839 = vunpack.c.0.s8 %v3838
        %v3840 = vlaneseq
        %v3841 = vshrl.u32 %v3840, 7
        %v3842 = vsub.s32 %v3839, %v3841
        %v3843 = vrot.slane %v3829, %v3842
        %v3844 = vcombine.low %v3779, %v3795
        %v3845 = vcombine.high %v3779, %v3795
        %v3847 = vunpack.c.l.s4 1934713408
        %v3848 = vunpack.c.0.s8 %v3847
        %v3849 = vlaneseq
        %v3850 = vshrl.u32 %v3849, 7
        %v3851 = vsub.s32 %v3848, %v3850
        %v3852 = vrot.slane %v3844, %v3851
        %v3854 = vunpack.c.l.s4 1934713408
        %v3855 = vunpack.c.0.s8 %v3854
        %v3856 = vlaneseq
        %v3857 = vshrl.u32 %v3856, 7
        %v3858 = vsub.s32 %v3855, %v3857
        %v3859 = vrot.slane %v3845, %v3858
        %v3860 = vcombine.low %v3804, %v3836
        %v3861 = vcombine.high %v3804, %v3836
        %v3862 = vcombine.low %v3811, %v3843
        %v3863 = vcombine.high %v3811, %v3843
        %v3864 = vcombine.low %v3820, %v3852
        %v3865 = vcombine.high %v3820, %v3852
        %v3866 = vcombine.low %v3827, %v3859
        %v3867 = vcombine.high %v3827, %v3859
        %v3868 = vcombine.low %v3164, %v3166
        %v3869 = vcombine.high %v3164, %v3166
        %v3871 = vunpack.c.l.s4 1983009808
        %v3872 = vunpack.c.0.s8 %v3871
        %v3873 = vlaneseq
        %v3874 = vshrl.u32 %v3873, 7
        %v3875 = vsub.s32 %v3872, %v3874
        %v3876 = vrot.slane %v3868, %v3875
        %v3878 = vunpack.c.l.s4 1983009808
        %v3879 = vunpack.c.0.s8 %v3878
        %v3880 = vlaneseq
        %v3881 = vshrl.u32 %v3880, 7
        %v3882 = vsub.s32 %v3879, %v3881
        %v3883 = vrot.slane %v3869, %v3882
        %v3884 = vcombine.low %v3165, %v3167
        %v3885 = vcombine.high %v3165, %v3167
        %v3887 = vunpack.c.l.s4 1983009808
        %v3888 = vunpack.c.0.s8 %v3887
        %v3889 = vlaneseq
        %v3890 = vshrl.u32 %v3889, 7
        %v3891 = vsub.s32 %v3888, %v3890
        %v3892 = vrot.slane %v3884, %v3891
        %v3894 = vunpack.c.l.s4 1983009808
        %v3895 = vunpack.c.0.s8 %v3894
        %v3896 = vlaneseq
        %v3897 = vshrl.u32 %v3896, 7
        %v3898 = vsub.s32 %v3895, %v3897
        %v3899 = vrot.slane %v3885, %v3898
        %v3900 = vcombine.low %v3168, %v3170
        %v3901 = vcombine.high %v3168, %v3170
        %v3903 = vunpack.c.l.s4 1983009808
        %v3904 = vunpack.c.0.s8 %v3903
        %v3905 = vlaneseq
        %v3906 = vshrl.u32 %v3905, 7
        %v3907 = vsub.s32 %v3904, %v3906
        %v3908 = vrot.slane %v3900, %v3907
        %v3910 = vunpack.c.l.s4 1983009808
        %v3911 = vunpack.c.0.s8 %v3910
        %v3912 = vlaneseq
        %v3913 = vshrl.u32 %v3912, 7
        %v3914 = vsub.s32 %v3911, %v3913
        %v3915 = vrot.slane %v3901, %v3914
        %v3916 = vcombine.low %v3169, %v3171
        %v3917 = vcombine.high %v3169, %v3171
        %v3919 = vunpack.c.l.s4 1983009808
        %v3920 = vunpack.c.0.s8 %v3919
        %v3921 = vlaneseq
        %v3922 = vshrl.u32 %v3921, 7
        %v3923 = vsub.s32 %v3920, %v3922
        %v3924 = vrot.slane %v3916, %v3923
        %v3926 = vunpack.c.l.s4 1983009808
        %v3927 = vunpack.c.0.s8 %v3926
        %v3928 = vlaneseq
        %v3929 = vshrl.u32 %v3928, 7
        %v3930 = vsub.s32 %v3927, %v3929
        %v3931 = vrot.slane %v3917, %v3930
        %v3932 = vcombine.low %v3876, %v3892
        %v3933 = vcombine.high %v3876, %v3892
        %v3935 = vunpack.c.l.s4 1934713408
        %v3936 = vunpack.c.0.s8 %v3935
        %v3937 = vlaneseq
        %v3938 = vshrl.u32 %v3937, 7
        %v3939 = vsub.s32 %v3936, %v3938
        %v3940 = vrot.slane %v3932, %v3939
        %v3942 = vunpack.c.l.s4 1934713408
        %v3943 = vunpack.c.0.s8 %v3942
        %v3944 = vlaneseq
        %v3945 = vshrl.u32 %v3944, 7
        %v3946 = vsub.s32 %v3943, %v3945
        %v3947 = vrot.slane %v3933, %v3946
        %v3948 = vcombine.low %v3883, %v3899
        %v3949 = vcombine.high %v3883, %v3899
        %v3951 = vunpack.c.l.s4 1934713408
        %v3952 = vunpack.c.0.s8 %v3951
        %v3953 = vlaneseq
        %v3954 = vshrl.u32 %v3953, 7
        %v3955 = vsub.s32 %v3952, %v3954
        %v3956 = vrot.slane %v3948, %v3955
        %v3958 = vunpack.c.l.s4 1934713408
        %v3959 = vunpack.c.0.s8 %v3958
        %v3960 = vlaneseq
        %v3961 = vshrl.u32 %v3960, 7
        %v3962 = vsub.s32 %v3959, %v3961
        %v3963 = vrot.slane %v3949, %v3962
        %v3964 = vcombine.low %v3908, %v3924
        %v3965 = vcombine.high %v3908, %v3924
        %v3967 = vunpack.c.l.s4 1934713408
        %v3968 = vunpack.c.0.s8 %v3967
        %v3969 = vlaneseq
        %v3970 = vshrl.u32 %v3969, 7
        %v3971 = vsub.s32 %v3968, %v3970
        %v3972 = vrot.slane %v3964, %v3971
        %v3974 = vunpack.c.l.s4 1934713408
        %v3975 = vunpack.c.0.s8 %v3974
        %v3976 = vlaneseq
        %v3977 = vshrl.u32 %v3976, 7
        %v3978 = vsub.s32 %v3975, %v3977
        %v3979 = vrot.slane %v3965, %v3978
        %v3980 = vcombine.low %v3915, %v3931
        %v3981 = vcombine.high %v3915, %v3931
        %v3983 = vunpack.c.l.s4 1934713408
        %v3984 = vunpack.c.0.s8 %v3983
        %v3985 = vlaneseq
        %v3986 = vshrl.u32 %v3985, 7
        %v3987 = vsub.s32 %v3984, %v3986
        %v3988 = vrot.slane %v3980, %v3987
        %v3990 = vunpack.c.l.s4 1934713408
        %v3991 = vunpack.c.0.s8 %v3990
        %v3992 = vlaneseq
        %v3993 = vshrl.u32 %v3992, 7
        %v3994 = vsub.s32 %v3991, %v3993
        %v3995 = vrot.slane %v3981, %v3994
        %v3996 = vcombine.low %v3940, %v3972
        %v3997 = vcombine.high %v3940, %v3972
        %v3998 = vcombine.low %v3947, %v3979
        %v3999 = vcombine.high %v3947, %v3979
        %v4000 = vcombine.low %v3956, %v3988
        %v4001 = vcombine.high %v3956, %v3988
        %v4002 = vcombine.low %v3963, %v3995
        %v4003 = vcombine.high %v3963, %v3995
        %v4004 = vcombine.low %v3172, %v3174
        %v4005 = vcombine.high %v3172, %v3174
        %v4007 = vunpack.c.l.s4 1983009808
        %v4008 = vunpack.c.0.s8 %v4007
        %v4009 = vlaneseq
        %v4010 = vshrl.u32 %v4009, 7
        %v4011 = vsub.s32 %v4008, %v4010
        %v4012 = vrot.slane %v4004, %v4011
        %v4014 = vunpack.c.l.s4 1983009808
        %v4015 = vunpack.c.0.s8 %v4014
        %v4016 = vlaneseq
        %v4017 = vshrl.u32 %v4016, 7
        %v4018 = vsub.s32 %v4015, %v4017
        %v4019 = vrot.slane %v4005, %v4018
        %v4020 = vcombine.low %v3173, %v3175
        %v4021 = vcombine.high %v3173, %v3175
        %v4023 = vunpack.c.l.s4 1983009808
        %v4024 = vunpack.c.0.s8 %v4023
        %v4025 = vlaneseq
        %v4026 = vshrl.u32 %v4025, 7
        %v4027 = vsub.s32 %v4024, %v4026
        %v4028 = vrot.slane %v4020, %v4027
        %v4030 = vunpack.c.l.s4 1983009808
        %v4031 = vunpack.c.0.s8 %v4030
        %v4032 = vlaneseq
        %v4033 = vshrl.u32 %v4032, 7
        %v4034 = vsub.s32 %v4031, %v4033
        %v4035 = vrot.slane %v4021, %v4034
        %v4036 = vcombine.low %v3176, %v3178
        %v4037 = vcombine.high %v3176, %v3178
        %v4039 = vunpack.c.l.s4 1983009808
        %v4040 = vunpack.c.0.s8 %v4039
        %v4041 = vlaneseq
        %v4042 = vshrl.u32 %v4041, 7
        %v4043 = vsub.s32 %v4040, %v4042
        %v4044 = vrot.slane %v4036, %v4043
        %v4046 = vunpack.c.l.s4 1983009808
        %v4047 = vunpack.c.0.s8 %v4046
        %v4048 = vlaneseq
        %v4049 = vshrl.u32 %v4048, 7
        %v4050 = vsub.s32 %v4047, %v4049
        %v4051 = vrot.slane %v4037, %v4050
        %v4052 = vcombine.low %v3177, %v3179
        %v4053 = vcombine.high %v3177, %v3179
        %v4055 = vunpack.c.l.s4 1983009808
        %v4056 = vunpack.c.0.s8 %v4055
        %v4057 = vlaneseq
        %v4058 = vshrl.u32 %v4057, 7
        %v4059 = vsub.s32 %v4056, %v4058
        %v4060 = vrot.slane %v4052, %v4059
        %v4062 = vunpack.c.l.s4 1983009808
        %v4063 = vunpack.c.0.s8 %v4062
        %v4064 = vlaneseq
        %v4065 = vshrl.u32 %v4064, 7
        %v4066 = vsub.s32 %v4063, %v4065
        %v4067 = vrot.slane %v4053, %v4066
        %v4068 = vcombine.low %v4012, %v4028
        %v4069 = vcombine.high %v4012, %v4028
        %v4071 = vunpack.c.l.s4 1934713408
        %v4072 = vunpack.c.0.s8 %v4071
        %v4073 = vlaneseq
        %v4074 = vshrl.u32 %v4073, 7
        %v4075 = vsub.s32 %v4072, %v4074
        %v4076 = vrot.slane %v4068, %v4075
        %v4078 = vunpack.c.l.s4 1934713408
        %v4079 = vunpack.c.0.s8 %v4078
        %v4080 = vlaneseq
        %v4081 = vshrl.u32 %v4080, 7
        %v4082 = vsub.s32 %v4079, %v4081
        %v4083 = vrot.slane %v4069, %v4082
        %v4084 = vcombine.low %v4019, %v4035
        %v4085 = vcombine.high %v4019, %v4035
        %v4087 = vunpack.c.l.s4 1934713408
        %v4088 = vunpack.c.0.s8 %v4087
        %v4089 = vlaneseq
        %v4090 = vshrl.u32 %v4089, 7
        %v4091 = vsub.s32 %v4088, %v4090
        %v4092 = vrot.slane %v4084, %v4091
        %v4094 = vunpack.c.l.s4 1934713408
        %v4095 = vunpack.c.0.s8 %v4094
        %v4096 = vlaneseq
        %v4097 = vshrl.u32 %v4096, 7
        %v4098 = vsub.s32 %v4095, %v4097
        %v4099 = vrot.slane %v4085, %v4098
        %v4100 = vcombine.low %v4044, %v4060
        %v4101 = vcombine.high %v4044, %v4060
        %v4103 = vunpack.c.l.s4 1934713408
        %v4104 = vunpack.c.0.s8 %v4103
        %v4105 = vlaneseq
        %v4106 = vshrl.u32 %v4105, 7
        %v4107 = vsub.s32 %v4104, %v4106
        %v4108 = vrot.slane %v4100, %v4107
        %v4110 = vunpack.c.l.s4 1934713408
        %v4111 = vunpack.c.0.s8 %v4110
        %v4112 = vlaneseq
        %v4113 = vshrl.u32 %v4112, 7
        %v4114 = vsub.s32 %v4111, %v4113
        %v4115 = vrot.slane %v4101, %v4114
        %v4116 = vcombine.low %v4051, %v4067
        %v4117 = vcombine.high %v4051, %v4067
        %v4119 = vunpack.c.l.s4 1934713408
        %v4120 = vunpack.c.0.s8 %v4119
        %v4121 = vlaneseq
        %v4122 = vshrl.u32 %v4121, 7
        %v4123 = vsub.s32 %v4120, %v4122
        %v4124 = vrot.slane %v4116, %v4123
        %v4126 = vunpack.c.l.s4 1934713408
        %v4127 = vunpack.c.0.s8 %v4126
        %v4128 = vlaneseq
        %v4129 = vshrl.u32 %v4128, 7
        %v4130 = vsub.s32 %v4127, %v4129
        %v4131 = vrot.slane %v4117, %v4130
        %v4132 = vcombine.low %v4076, %v4108
        %v4133 = vcombine.high %v4076, %v4108
        %v4134 = vcombine.low %v4083, %v4115
        %v4135 = vcombine.high %v4083, %v4115
        %v4136 = vcombine.low %v4092, %v4124
        %v4137 = vcombine.high %v4092, %v4124
        %v4138 = vcombine.low %v4099, %v4131
        %v4139 = vcombine.high %v4099, %v4131
        %v4140 = vcombine.low %v3180, %v3182
        %v4141 = vcombine.high %v3180, %v3182
        %v4143 = vunpack.c.l.s4 1983009808
        %v4144 = vunpack.c.0.s8 %v4143
        %v4145 = vlaneseq
        %v4146 = vshrl.u32 %v4145, 7
        %v4147 = vsub.s32 %v4144, %v4146
        %v4148 = vrot.slane %v4140, %v4147
        %v4150 = vunpack.c.l.s4 1983009808
        %v4151 = vunpack.c.0.s8 %v4150
        %v4152 = vlaneseq
        %v4153 = vshrl.u32 %v4152, 7
        %v4154 = vsub.s32 %v4151, %v4153
        %v4155 = vrot.slane %v4141, %v4154
        %v4156 = vcombine.low %v3181, %v3183
        %v4157 = vcombine.high %v3181, %v3183
        %v4159 = vunpack.c.l.s4 1983009808
        %v4160 = vunpack.c.0.s8 %v4159
        %v4161 = vlaneseq
        %v4162 = vshrl.u32 %v4161, 7
        %v4163 = vsub.s32 %v4160, %v4162
        %v4164 = vrot.slane %v4156, %v4163
        %v4166 = vunpack.c.l.s4 1983009808
        %v4167 = vunpack.c.0.s8 %v4166
        %v4168 = vlaneseq
        %v4169 = vshrl.u32 %v4168, 7
        %v4170 = vsub.s32 %v4167, %v4169
        %v4171 = vrot.slane %v4157, %v4170
        %v4172 = vcombine.low %v3184, %v3186
        %v4173 = vcombine.high %v3184, %v3186
        %v4175 = vunpack.c.l.s4 1983009808
        %v4176 = vunpack.c.0.s8 %v4175
        %v4177 = vlaneseq
        %v4178 = vshrl.u32 %v4177, 7
        %v4179 = vsub.s32 %v4176, %v4178
        %v4180 = vrot.slane %v4172, %v4179
        %v4182 = vunpack.c.l.s4 1983009808
        %v4183 = vunpack.c.0.s8 %v4182
        %v4184 = vlaneseq
        %v4185 = vshrl.u32 %v4184, 7
        %v4186 = vsub.s32 %v4183, %v4185
        %v4187 = vrot.slane %v4173, %v4186
        %v4188 = vcombine.low %v3185, %v3187
        %v4189 = vcombine.high %v3185, %v3187
        %v4191 = vunpack.c.l.s4 1983009808
        %v4192 = vunpack.c.0.s8 %v4191
        %v4193 = vlaneseq
        %v4194 = vshrl.u32 %v4193, 7
        %v4195 = vsub.s32 %v4192, %v4194
        %v4196 = vrot.slane %v4188, %v4195
        %v4198 = vunpack.c.l.s4 1983009808
        %v4199 = vunpack.c.0.s8 %v4198
        %v4200 = vlaneseq
        %v4201 = vshrl.u32 %v4200, 7
        %v4202 = vsub.s32 %v4199, %v4201
        %v4203 = vrot.slane %v4189, %v4202
        %v4204 = vcombine.low %v4148, %v4164
        %v4205 = vcombine.high %v4148, %v4164
        %v4207 = vunpack.c.l.s4 1934713408
        %v4208 = vunpack.c.0.s8 %v4207
        %v4209 = vlaneseq
        %v4210 = vshrl.u32 %v4209, 7
        %v4211 = vsub.s32 %v4208, %v4210
        %v4212 = vrot.slane %v4204, %v4211
        %v4214 = vunpack.c.l.s4 1934713408
        %v4215 = vunpack.c.0.s8 %v4214
        %v4216 = vlaneseq
        %v4217 = vshrl.u32 %v4216, 7
        %v4218 = vsub.s32 %v4215, %v4217
        %v4219 = vrot.slane %v4205, %v4218
        %v4220 = vcombine.low %v4155, %v4171
        %v4221 = vcombine.high %v4155, %v4171
        %v4223 = vunpack.c.l.s4 1934713408
        %v4224 = vunpack.c.0.s8 %v4223
        %v4225 = vlaneseq
        %v4226 = vshrl.u32 %v4225, 7
        %v4227 = vsub.s32 %v4224, %v4226
        %v4228 = vrot.slane %v4220, %v4227
        %v4230 = vunpack.c.l.s4 1934713408
        %v4231 = vunpack.c.0.s8 %v4230
        %v4232 = vlaneseq
        %v4233 = vshrl.u32 %v4232, 7
        %v4234 = vsub.s32 %v4231, %v4233
        %v4235 = vrot.slane %v4221, %v4234
        %v4236 = vcombine.low %v4180, %v4196
        %v4237 = vcombine.high %v4180, %v4196
        %v4239 = vunpack.c.l.s4 1934713408
        %v4240 = vunpack.c.0.s8 %v4239
        %v4241 = vlaneseq
        %v4242 = vshrl.u32 %v4241, 7
        %v4243 = vsub.s32 %v4240, %v4242
        %v4244 = vrot.slane %v4236, %v4243
        %v4246 = vunpack.c.l.s4 1934713408
        %v4247 = vunpack.c.0.s8 %v4246
        %v4248 = vlaneseq
        %v4249 = vshrl.u32 %v4248, 7
        %v4250 = vsub.s32 %v4247, %v4249
        %v4251 = vrot.slane %v4237, %v4250
        %v4252 = vcombine.low %v4187, %v4203
        %v4253 = vcombine.high %v4187, %v4203
        %v4255 = vunpack.c.l.s4 1934713408
        %v4256 = vunpack.c.0.s8 %v4255
        %v4257 = vlaneseq
        %v4258 = vshrl.u32 %v4257, 7
        %v4259 = vsub.s32 %v4256, %v4258
        %v4260 = vrot.slane %v4252, %v4259
        %v4262 = vunpack.c.l.s4 1934713408
        %v4263 = vunpack.c.0.s8 %v4262
        %v4264 = vlaneseq
        %v4265 = vshrl.u32 %v4264, 7
        %v4266 = vsub.s32 %v4263, %v4265
        %v4267 = vrot.slane %v4253, %v4266
        %v4268 = vcombine.low %v4212, %v4244
        %v4269 = vcombine.high %v4212, %v4244
        %v4270 = vcombine.low %v4219, %v4251
        %v4271 = vcombine.high %v4219, %v4251
        %v4272 = vcombine.low %v4228, %v4260
        %v4273 = vcombine.high %v4228, %v4260
        %v4274 = vcombine.low %v4235, %v4267
        %v4275 = vcombine.high %v4235, %v4267
        %4284 = vrot.lane.b32.xlu0 %v3317, 16
        %v4285 = vpop.permute.xlu0 %4284
        %4286 = vrot.lane.b32.xlu0 %v3453, 16
        %v4287 = vpop.permute.xlu0 %4286
        %4288 = vrot.lane.b32.xlu0 %v3589, 16
        %v4289 = vpop.permute.xlu0 %4288
        %4290 = vrot.lane.b32.xlu0 %v3725, 16
        %v4291 = vpop.permute.xlu0 %4290
        %4292 = vrot.lane.b32.xlu0 %v3861, 16
        %v4293 = vpop.permute.xlu0 %4292
        %4294 = vrot.lane.b32.xlu0 %v3997, 16
        %v4295 = vpop.permute.xlu0 %4294
        %4296 = vrot.lane.b32.xlu0 %v4133, 16
        %v4297 = vpop.permute.xlu0 %4296
        %4298 = vrot.lane.b32.xlu0 %v4269, 16
        %v4299 = vpop.permute.xlu0 %4298
        %4316 = vrot.lane.b32.xlu0 %v3318, 32
        %v4317 = vpop.permute.xlu0 %4316
        %4318 = vrot.lane.b32.xlu0 %v3454, 32
        %v4319 = vpop.permute.xlu0 %4318
        %4320 = vrot.lane.b32.xlu0 %v3590, 32
        %v4321 = vpop.permute.xlu0 %4320
        %4322 = vrot.lane.b32.xlu0 %v3726, 32
        %v4323 = vpop.permute.xlu0 %4322
        %4324 = vrot.lane.b32.xlu0 %v3862, 32
        %v4325 = vpop.permute.xlu0 %4324
        %4326 = vrot.lane.b32.xlu0 %v3998, 32
        %v4327 = vpop.permute.xlu0 %4326
        %4328 = vrot.lane.b32.xlu0 %v4134, 32
        %v4329 = vpop.permute.xlu0 %4328
        %4330 = vrot.lane.b32.xlu0 %v4270, 32
        %v4331 = vpop.permute.xlu0 %4330
        %4348 = vrot.lane.b32.xlu0 %v3319, 48
        %v4349 = vpop.permute.xlu0 %4348
        %4350 = vrot.lane.b32.xlu0 %v3455, 48
        %v4351 = vpop.permute.xlu0 %4350
        %4352 = vrot.lane.b32.xlu0 %v3591, 48
        %v4353 = vpop.permute.xlu0 %4352
        %4354 = vrot.lane.b32.xlu0 %v3727, 48
        %v4355 = vpop.permute.xlu0 %4354
        %4356 = vrot.lane.b32.xlu0 %v3863, 48
        %v4357 = vpop.permute.xlu0 %4356
        %4358 = vrot.lane.b32.xlu0 %v3999, 48
        %v4359 = vpop.permute.xlu0 %4358
        %4360 = vrot.lane.b32.xlu0 %v4135, 48
        %v4361 = vpop.permute.xlu0 %4360
        %4362 = vrot.lane.b32.xlu0 %v4271, 48
        %v4363 = vpop.permute.xlu0 %4362
        %4380 = vrot.lane.b32.xlu0 %v3320, 64
        %v4381 = vpop.permute.xlu0 %4380
        %4382 = vrot.lane.b32.xlu0 %v3456, 64
        %v4383 = vpop.permute.xlu0 %4382
        %4384 = vrot.lane.b32.xlu0 %v3592, 64
        %v4385 = vpop.permute.xlu0 %4384
        %4386 = vrot.lane.b32.xlu0 %v3728, 64
        %v4387 = vpop.permute.xlu0 %4386
        %4388 = vrot.lane.b32.xlu0 %v3864, 64
        %v4389 = vpop.permute.xlu0 %4388
        %4390 = vrot.lane.b32.xlu0 %v4000, 64
        %v4391 = vpop.permute.xlu0 %4390
        %4392 = vrot.lane.b32.xlu0 %v4136, 64
        %v4393 = vpop.permute.xlu0 %4392
        %4394 = vrot.lane.b32.xlu0 %v4272, 64
        %v4395 = vpop.permute.xlu0 %4394
        %4412 = vrot.lane.b32.xlu0 %v3321, 80
        %v4413 = vpop.permute.xlu0 %4412
        %4414 = vrot.lane.b32.xlu0 %v3457, 80
        %v4415 = vpop.permute.xlu0 %4414
        %4416 = vrot.lane.b32.xlu0 %v3593, 80
        %v4417 = vpop.permute.xlu0 %4416
        %4418 = vrot.lane.b32.xlu0 %v3729, 80
        %v4419 = vpop.permute.xlu0 %4418
        %4420 = vrot.lane.b32.xlu0 %v3865, 80
        %v4421 = vpop.permute.xlu0 %4420
        %4422 = vrot.lane.b32.xlu0 %v4001, 80
        %v4423 = vpop.permute.xlu0 %4422
        %4424 = vrot.lane.b32.xlu0 %v4137, 80
        %v4425 = vpop.permute.xlu0 %4424
        %4426 = vrot.lane.b32.xlu0 %v4273, 80
        %v4427 = vpop.permute.xlu0 %4426
        %4444 = vrot.lane.b32.xlu0 %v3322, 96
        %v4445 = vpop.permute.xlu0 %4444
        %4446 = vrot.lane.b32.xlu0 %v3458, 96
        %v4447 = vpop.permute.xlu0 %4446
        %4448 = vrot.lane.b32.xlu0 %v3594, 96
        %v4449 = vpop.permute.xlu0 %4448
        %4450 = vrot.lane.b32.xlu0 %v3730, 96
        %v4451 = vpop.permute.xlu0 %4450
        %4452 = vrot.lane.b32.xlu0 %v3866, 96
        %v4453 = vpop.permute.xlu0 %4452
        %4454 = vrot.lane.b32.xlu0 %v4002, 96
        %v4455 = vpop.permute.xlu0 %4454
        %4456 = vrot.lane.b32.xlu0 %v4138, 96
        %v4457 = vpop.permute.xlu0 %4456
        %4458 = vrot.lane.b32.xlu0 %v4274, 96
        %v4459 = vpop.permute.xlu0 %4458
        %4476 = vrot.lane.b32.xlu0 %v3323, 112
        %v4477 = vpop.permute.xlu0 %4476
        %4478 = vrot.lane.b32.xlu0 %v3459, 112
        %v4479 = vpop.permute.xlu0 %4478
        %4480 = vrot.lane.b32.xlu0 %v3595, 112
        %v4481 = vpop.permute.xlu0 %4480
        %4482 = vrot.lane.b32.xlu0 %v3731, 112
        %v4483 = vpop.permute.xlu0 %4482
        %4484 = vrot.lane.b32.xlu0 %v3867, 112
        %v4485 = vpop.permute.xlu0 %4484
        %4486 = vrot.lane.b32.xlu0 %v4003, 112
        %v4487 = vpop.permute.xlu0 %4486
        %4488 = vrot.lane.b32.xlu0 %v4139, 112
        %v4489 = vpop.permute.xlu0 %4488
        %4490 = vrot.lane.b32.xlu0 %v4275, 112
        %v4491 = vpop.permute.xlu0 %4490
        %v4500 = vsel %vm2755, %v3316, %v4285
        %v4501 = vsel %vm2755, %v3452, %v4287
        %v4502 = vsel %vm2755, %v3588, %v4289
        %v4503 = vsel %vm2755, %v3724, %v4291
        %v4504 = vsel %vm2755, %v3860, %v4293
        %v4505 = vsel %vm2755, %v3996, %v4295
        %v4506 = vsel %vm2755, %v4132, %v4297
        %v4507 = vsel %vm2755, %v4268, %v4299
        %v4508 = vsel %vm2764, %v4500, %v4317
        %v4509 = vsel %vm2764, %v4501, %v4319
        %v4510 = vsel %vm2764, %v4502, %v4321
        %v4511 = vsel %vm2764, %v4503, %v4323
        %v4512 = vsel %vm2764, %v4504, %v4325
        %v4513 = vsel %vm2764, %v4505, %v4327
        %v4514 = vsel %vm2764, %v4506, %v4329
        %v4515 = vsel %vm2764, %v4507, %v4331
        %v4516 = vsel %vm2773, %v4508, %v4349
        %v4517 = vsel %vm2773, %v4509, %v4351
        %v4518 = vsel %vm2773, %v4510, %v4353
        %v4519 = vsel %vm2773, %v4511, %v4355
        %v4520 = vsel %vm2773, %v4512, %v4357
        %v4521 = vsel %vm2773, %v4513, %v4359
        %v4522 = vsel %vm2773, %v4514, %v4361
        %v4523 = vsel %vm2773, %v4515, %v4363
        %v4524 = vsel %vm2782, %v4516, %v4381
        %v4525 = vsel %vm2782, %v4517, %v4383
        %v4526 = vsel %vm2782, %v4518, %v4385
        %v4527 = vsel %vm2782, %v4519, %v4387
        %v4528 = vsel %vm2782, %v4520, %v4389
        %v4529 = vsel %vm2782, %v4521, %v4391
        %v4530 = vsel %vm2782, %v4522, %v4393
        %v4531 = vsel %vm2782, %v4523, %v4395
        %v4532 = vsel %vm2791, %v4524, %v4413
        %v4533 = vsel %vm2791, %v4525, %v4415
        %v4534 = vsel %vm2791, %v4526, %v4417
        %v4535 = vsel %vm2791, %v4527, %v4419
        %v4536 = vsel %vm2791, %v4528, %v4421
        %v4537 = vsel %vm2791, %v4529, %v4423
        %v4538 = vsel %vm2791, %v4530, %v4425
        %v4539 = vsel %vm2791, %v4531, %v4427
        %v4540 = vsel %vm2800, %v4532, %v4445
        %v4541 = vsel %vm2800, %v4533, %v4447
        %v4542 = vsel %vm2800, %v4534, %v4449
        %v4543 = vsel %vm2800, %v4535, %v4451
        %v4544 = vsel %vm2800, %v4536, %v4453
        %v4545 = vsel %vm2800, %v4537, %v4455
        %v4546 = vsel %vm2800, %v4538, %v4457
        %v4547 = vsel %vm2800, %v4539, %v4459
        %v4548 = vsel %vm2809, %v4540, %v4477
        %v4549 = vsel %vm2809, %v4541, %v4479
        %v4550 = vsel %vm2809, %v4542, %v4481
        %v4551 = vsel %vm2809, %v4543, %v4483
        %v4552 = vsel %vm2809, %v4544, %v4485
        %v4553 = vsel %vm2809, %v4545, %v4487
        %v4554 = vsel %vm2809, %v4546, %v4489
        %v4555 = vsel %vm2809, %v4547, %v4491
        %4564 = vrot.lane.b32.xlu0 %v4548, 17
        %v4565 = vpop.permute.xlu0 %4564
        %4566 = vrot.lane.b32.xlu0 %v4549, 17
        %v4567 = vpop.permute.xlu0 %4566
        %4568 = vrot.lane.b32.xlu0 %v4550, 17
        %v4569 = vpop.permute.xlu0 %4568
        %4570 = vrot.lane.b32.xlu0 %v4551, 17
        %v4571 = vpop.permute.xlu0 %4570
        %4572 = vrot.lane.b32.xlu0 %v4552, 17
        %v4573 = vpop.permute.xlu0 %4572
        %4574 = vrot.lane.b32.xlu0 %v4553, 17
        %v4575 = vpop.permute.xlu0 %4574
        %4576 = vrot.lane.b32.xlu0 %v4554, 17
        %v4577 = vpop.permute.xlu0 %4576
        %4578 = vrot.lane.b32.xlu0 %v4555, 17
        %v4579 = vpop.permute.xlu0 %4578
        %4588 = vst.msk [vmem:[%s134 + $0x8] sm:$0xff] %vm2850, %v4565
        %4589 = vst.msk [vmem:[%s134 + $0x10] sm:$0xff] %vm2852, %v4565
        %4590 = vst.msk [vmem:[%s134 + $0x20] sm:$0xff] %vm2850, %v4567
        %4591 = vst.msk [vmem:[%s134 + $0x28] sm:$0xff] %vm2852, %v4567
        %4592 = vst.msk [vmem:[%s134 + $0x38] sm:$0xff] %vm2850, %v4569
        %4593 = vst.msk [vmem:[%s134 + $0x40] sm:$0xff] %vm2852, %v4569
        %4594 = vst.msk [vmem:[%s134 + $0x50] sm:$0xff] %vm2850, %v4571
        %4595 = vst.msk [vmem:[%s134 + $0x58] sm:$0xff] %vm2852, %v4571
        %4596 = vst.msk [vmem:[%s134 + $0x68] sm:$0xff] %vm2850, %v4573
        %4597 = vst.msk [vmem:[%s134 + $0x70] sm:$0xff] %vm2852, %v4573
        %4598 = vst.msk [vmem:[%s134 + $0x80] sm:$0xff] %vm2850, %v4575
        %4599 = vst.msk [vmem:[%s134 + $0x88] sm:$0xff] %vm2852, %v4575
        %4600 = vst.msk [vmem:[%s134 + $0x98] sm:$0xff] %vm2850, %v4577
        %4601 = vst.msk [vmem:[%s134 + $0xa0] sm:$0xff] %vm2852, %v4577
        %4602 = vst.msk [vmem:[%s134 + $0xb0] sm:$0xff] %vm2850, %v4579
        %4603 = vst.msk [vmem:[%s134 + $0xb8] sm:$0xff] %vm2852, %v4579
        %s4604 = sand.u32 %s52, 1
        %s4605 = scalar_lea.sflag [#allocation4], %s4604
        %s4606 = sand.u32 %s52, 1
        %s4607 = smul.addr %s4606, 192
        %s4608 = scalar_lea.vmem [#allocation5], %s4607
        // Predicated region
        $region29: #{taylor_exp.1} parent=23 // pred_check
          %p4609 = pneg %p62
        $region30: #{taylor_exp.1} parent=23 // pred_check_branch
          %4611 = sbr.rel (%p4609) target = $region32
        $region31: #{taylor_exp.1} parent=23 // pred_region
          %s4612 = smul.u32 8, %s18
          %s4614 = ssub.s32 3072, 3072
          %4615 = vsyncadd %s4605, %s4614
          %s4616 = smul.addr %s4612, 3
          %s4617 = smul.addr %s4616, 128
          %s4618 = scalar_lea.hbm %s1, %s4617
          %s4619 = sshll.u32 %s4608, 4
          %s4620 = int_to_ptr.vmem [resolvable:$true] %s4619
          %4625 = dma.vmem_to_hbm [thread:$0]  %s4620, 3072, %s4618, %s4605, 384, 384, 24
        $region32: #{taylor_exp.1} parent=23 // pred_fallthru
          _
      $region24: #{taylor_exp.1} parent=5 // pred_fallthru
        _
      %p4626 = scmp.le.s32.totalorder 2, %s13
      // Predicated region
      $region33: #{taylor_exp.1} parent=5 // pred_check
        %p4627 = pneg %p4626
      $region34: #{taylor_exp.1} parent=5 // pred_check_branch
        %4629 = sbr.rel (%p4627) target = $region36
      $region35: #{taylor_exp.1} parent=5 // pred_region
        %s4630 = ssub.s32 %s13, 2
        // Predicated region
        $region37: #{taylor_exp.1} parent=35 // pred_check
          %p4631 = pneg %p68
        $region38: #{taylor_exp.1} parent=35 // pred_check_branch
          %4633 = sbr.rel (%p4631) target = $region40
        $region39: #{taylor_exp.1} parent=35 // pred_region
          %s4634 = sand.u32 %s53, 1
          %s4635 = scalar_lea.sflag [#allocation4], %s4634
          %s4636 = sand.u32 %s53, 1
          %s4637 = smul.addr %s4636, 192
          %s4638 = scalar_lea.vmem [#allocation5], %s4637
          %4639 = dma.done %s4635, 3072
        $region40: #{taylor_exp.1} parent=35 // pred_fallthru
          _
      $region36: #{taylor_exp.1} parent=5 // pred_fallthru
        _
    $region6: #{taylor_exp.1} parent=1 // loop_footer
      %s17 = sadd.s32 1, %s13
    $region7: #{taylor_exp.1} parent=1 // loop_footer_branch
      %12 = sbr.rel target = $region3
    $region8: #{taylor_exp.1} parent=1 // loop_exit
      _
    %4640 = vsyncpa [#allocation3], 1
    %s4641 = scalar_lea.sflag [#allocation3], 1
    %4642 = vsyncpa %s4641, 1
    %4643 = vsyncpa [#allocation4], 1
    %s4644 = scalar_lea.sflag [#allocation4], 1
    %4645 = vsyncpa %s4644, 1

</llo_original>
